<compile_context>
chip_gen: v7x
topology: tpu7x:2x2x1
jax: 0.10.0
libtpu: 0.0.40
codegen_flags: <defaults>
</compile_context>

<pallas_src>
import functools

import jax
import jax.numpy as jnp
from jax.experimental import pallas as pl
from jax.experimental.pallas import tpu as pltpu


# ----------------------------------------------------------------------------
# Kernel
# ----------------------------------------------------------------------------
def _encoder_kernel(idx_ref,     # SMEM  [N*S] int32    (scalar prefetch)
                    feat_hbm,    # HBM   [V, F] f32     (memory_space=pl.ANY)
                    wt_ref,      # VMEM  [F, E] bf16    (resident across steps)
                    out_ref,     # VMEM  [TN, E] f32    (lane-dense on E)
                    gbuf,        # VMEM  [2, S, TN, F] f32 double-buffered gather
                    sem,         # DMA semaphores (2,) -- one per buffer slot
                    *, tn, s, inv_s, nsteps):
    i = pl.program_id(0)
    slot = jax.lax.rem(i, 2)

    def issue(step, slot_):
        # One row-DMA per (node-in-tile, sample).  Static (unrolled) loops so
        # the scheduler overlaps all gathers; all copies into a slot share that
        # slot's DMA semaphore.
        base = step * (tn * s)
        for j in range(tn):
            for k in range(s):
                row = idx_ref[base + j * s + k]
                pltpu.make_async_copy(
                    feat_hbm.at[pl.ds(row, 1)],        # [1, F] row in HBM
                    gbuf.at[slot_, k, pl.ds(j, 1)],    # [1, F] slot in VMEM
                    sem.at[slot_],
                ).start()

    # Prime: the first grid step issues its own gathers into slot 0.
    @pl.when(i == 0)
    def _():
        issue(0, 0)

    # Prefetch the next tile's neighbor rows into the other slot so their DMA
    # latency overlaps this step's wait + compute.
    @pl.when(i + 1 < nsteps)
    def _():
        issue(i + 1, 1 - slot)

    # Wait for the tn*s row copies that land in the current slot (issued either
    # by the prime above or by the previous grid step's prefetch).
    for _ in range(tn * s):
        pltpu.make_async_copy(
            feat_hbm.at[pl.ds(0, 1)],
            gbuf.at[slot, 0, pl.ds(0, 1)],
            sem.at[slot],
        ).wait()

    # Mean over samples: sum of S aligned (TN, F) slabs, times the static 1/S.
    neigh = jnp.sum(gbuf[slot], axis=0) * inv_s                    # [TN, F] f32

    # relu(neigh @ W^T): bf16 MXU operands, f32 accumulation, lane-dense E out.
    logits = jnp.dot(neigh.astype(wt_ref.dtype), wt_ref[...],
                     preferred_element_type=jnp.float32)           # [TN, E]
    out_ref[...] = jnp.maximum(logits, 0.0)


# ----------------------------------------------------------------------------
# Wrapper
# ----------------------------------------------------------------------------
def encoder_forward(neigh_idx, features, weight, *, node_tile=8):
    """relu(W @ mean(features[neigh_idx], axis=1).T)  ->  [E, N] (torch layout)."""
    n, s = neigh_idx.shape
    v, f = features.shape
    e, fw = weight.shape
    assert f == fw, "weight feat_dim mismatch"
    assert n % node_tile == 0, "batch must be divisible by node_tile"
    tn = node_tile
    nsteps = n // tn

    idx_flat = neigh_idx.astype(jnp.int32).reshape(n * s)   # 1-D -> cheap SMEM pad
    w_t = weight.T.astype(jnp.bfloat16)                     # [F, E] bf16, pre-transposed
    feats = features.astype(jnp.float32)
    # TODO(synk): pack feature rows to bf16 (u32-bitcast pairs) to halve gather bytes.

    kernel = functools.partial(_encoder_kernel, tn=tn, s=s, inv_s=1.0 / s,
                               nsteps=nsteps)

    out_ne = pl.pallas_call(
        kernel,
        out_shape=jax.ShapeDtypeStruct((n, e), jnp.float32),
        grid_spec=pltpu.PrefetchScalarGridSpec(
            num_scalar_prefetch=1,
            grid=(nsteps,),
            in_specs=[
                pl.BlockSpec(memory_space=pl.ANY),              # feature table stays in HBM
                pl.BlockSpec((f, e), lambda i, idx: (0, 0)),    # weight resident in VMEM
            ],
            out_specs=pl.BlockSpec((tn, e), lambda i, idx: (i, 0)),
            scratch_shapes=[
                pltpu.VMEM((2, s, tn, f), jnp.float32),         # double-buffered gather
                pltpu.SemaphoreType.DMA((2,)),                  # one sem per slot
            ],
        ),
        compiler_params=pltpu.CompilerParams(
            # Cross-step double buffering carries DMA state between consecutive
            # grid steps -> the axis must execute sequentially on one core.
            dimension_semantics=("arbitrary",),
            vmem_limit_bytes=32 * 1024 * 1024,
        ),
    )(idx_flat, feats, w_t)

    return out_ne.T                                             # [E, N] to match torch


# ----------------------------------------------------------------------------
# Deterministic setup (stands in for nn.Parameter init + adj_lists sampling)
# ----------------------------------------------------------------------------
def xavier_uniform(key, shape):
    fan_out, fan_in = shape
    bound = (6.0 / (fan_in + fan_out)) ** 0.5
    return jax.random.uniform(key, shape, jnp.float32, -bound, bound)


def sample_neighbors(key, batch, num_nodes, num_sample):
    """Per-node sampling WITHOUT replacement (matches random.sample in MeanAggregator)."""
    keys = jax.random.split(key, batch)

    def one(k):
        return jax.random.choice(k, num_nodes, (num_sample,), replace=False)

    return jax.vmap(one)(keys).astype(jnp.int32)                # [batch, num_sample]


# ----------------------------------------------------------------------------
if __name__ == "__main__":
    # Small but MXU/lane-friendly demo shapes (F, E multiples of 128).
    num_nodes = 512      # V: total graph nodes (feature table rows)
    feat_dim = 128       # F
    embed_dim = 128      # E
    batch = 64           # N: nodes passed to forward
    num_sample = 5       # S (module default)
    # gcn=False -> combined = neigh_feats only.
    # TODO(synk): gcn=True branch (concat self feats -> weight [E, 2F]) not exercised.

    root = jax.random.PRNGKey(0)
    k_feat, k_w, k_adj = jax.random.split(root, 3)

    features = jax.random.normal(k_feat, (num_nodes, feat_dim), jnp.float32)
    weight = xavier_uniform(k_w, (embed_dim, feat_dim))
    neigh_idx = sample_neighbors(k_adj, batch, num_nodes, num_sample)

    out = encoder_forward(neigh_idx, features, weight, node_tile=8)
    out = jax.block_until_ready(out)
    assert out.shape == (embed_dim, batch)

    # Pure-JAX reference with the same bf16 matmul precision as the kernel.
    neigh_ref = features[neigh_idx].sum(axis=1) * (1.0 / num_sample)   # [N, F]
    w_bf = weight.astype(jnp.bfloat16).astype(jnp.float32)
    n_bf = neigh_ref.astype(jnp.bfloat16).astype(jnp.float32)
    ref = jnp.maximum(w_bf @ n_bf.T, 0.0)                              # [E, N]
    assert jnp.allclose(out, ref, atol=1e-2, rtol=1e-2), "mismatch vs reference"

    print("KERNEL_OK")
</pallas_src>

<mosaic_0001>
module attributes {stable_mosaic.version = 11 : i64} {
  func.func @_encoder_kernel(%arg0: i32, %arg1: memref<320xi32, #tpu.memory_space<smem>>, %arg2: memref<512x128xf32, #tpu.memory_space<any>>, %arg3: memref<128x128xbf16, #tpu.memory_space<vmem>>, %arg4: memref<8x128xf32, #tpu.memory_space<vmem>>, %arg5: memref<2x5x8x128xf32, #tpu.memory_space<vmem>>, %arg6: memref<2x!tpu.dma_semaphore, #tpu.memory_space<semaphore_mem>>) attributes {dimension_semantics = [#tpu.dimension_semantics<arbitrary>], iteration_bounds = array<i64: 8>, scalar_prefetch = 1 : i64, scratch_operands = 2 : i64, tpu.core_type = #tpu.core_type<tc>, window_params = [{}, {pipeline_mode = #tpu.pipeline_mode<synchronous>, transform_indices = @transform_1, window_bounds = array<i64: 128, 128>}, {transform_indices = @transform_2, window_bounds = array<i64: 8, 128>}]} {
    %c2_i32 = arith.constant 2 : i32
    %0 = arith.remsi %arg0, %c2_i32 : i32
    %c0_i32 = arith.constant 0 : i32
    %1 = arith.cmpi eq, %arg0, %c0_i32 : i32
    %2 = arith.extui %1 : i1 to i32
    %c0_i32_0 = arith.constant 0 : i32
    %3 = arith.cmpi ne, %2, %c0_i32_0 : i32
    scf.if %3 {
      %c0_211 = arith.constant 0 : index
      %220 = memref.load %arg1[%c0_211] : memref<320xi32, #tpu.memory_space<smem>>
      %c0_i32_212 = arith.constant 0 : i32
      %c0_i32_213 = arith.constant 0 : i32
      %c0_i32_214 = arith.constant 0 : i32
      %c0_i32_215 = arith.constant 0 : i32
      %221 = tpu.memref_slice %arg2[%220, %c0_i32_215] : memref<512x128xf32, #tpu.memory_space<any>> -> memref<1x128xf32, #tpu.memory_space<any>>
      %c0_i32_216 = arith.constant 0 : i32
      %c0_i32_217 = arith.constant 0 : i32
      %222 = tpu.memref_slice %arg5[%c0_i32_212, %c0_i32_213, %c0_i32_216, %c0_i32_217] : memref<2x5x8x128xf32, #tpu.memory_space<vmem>> -> memref<1x1x1x128xf32, #tpu.memory_space<vmem>>
      %223 = tpu.memref_squeeze %222 : memref<1x1x1x128xf32, #tpu.memory_space<vmem>> -> memref<1x128xf32, #tpu.memory_space<vmem>>
      %224 = tpu.memref_slice %arg6[%c0_i32_214] : memref<2x!tpu.dma_semaphore, #tpu.memory_space<semaphore_mem>> -> memref<1x!tpu.dma_semaphore, #tpu.memory_space<semaphore_mem>>
      %225 = tpu.memref_squeeze %224 : memref<1x!tpu.dma_semaphore, #tpu.memory_space<semaphore_mem>> -> memref<!tpu.dma_semaphore, #tpu.memory_space<semaphore_mem>>
      tpu.enqueue_dma source(%221 : memref<1x128xf32, #tpu.memory_space<any>>) target(%223 : memref<1x128xf32, #tpu.memory_space<vmem>>) target_semaphore(%225 : memref<!tpu.dma_semaphore, #tpu.memory_space<semaphore_mem>>)
      %c1 = arith.constant 1 : index
      %226 = memref.load %arg1[%c1] : memref<320xi32, #tpu.memory_space<smem>>
      %c0_i32_218 = arith.constant 0 : i32
      %c1_i32_219 = arith.constant 1 : i32
      %c0_i32_220 = arith.constant 0 : i32
      %c0_i32_221 = arith.constant 0 : i32
      %227 = tpu.memref_slice %arg2[%226, %c0_i32_221] : memref<512x128xf32, #tpu.memory_space<any>> -> memref<1x128xf32, #tpu.memory_space<any>>
      %c0_i32_222 = arith.constant 0 : i32
      %c0_i32_223 = arith.constant 0 : i32
      %228 = tpu.memref_slice %arg5[%c0_i32_218, %c1_i32_219, %c0_i32_222, %c0_i32_223] : memref<2x5x8x128xf32, #tpu.memory_space<vmem>> -> memref<1x1x1x128xf32, #tpu.memory_space<vmem>>
      %229 = tpu.memref_squeeze %228 : memref<1x1x1x128xf32, #tpu.memory_space<vmem>> -> memref<1x128xf32, #tpu.memory_space<vmem>>
      %230 = tpu.memref_slice %arg6[%c0_i32_220] : memref<2x!tpu.dma_semaphore, #tpu.memory_space<semaphore_mem>> -> memref<1x!tpu.dma_semaphore, #tpu.memory_space<semaphore_mem>>
      %231 = tpu.memref_squeeze %230 : memref<1x!tpu.dma_semaphore, #tpu.memory_space<semaphore_mem>> -> memref<!tpu.dma_semaphore, #tpu.memory_space<semaphore_mem>>
      tpu.enqueue_dma source(%227 : memref<1x128xf32, #tpu.memory_space<any>>) target(%229 : memref<1x128xf32, #tpu.memory_space<vmem>>) target_semaphore(%231 : memref<!tpu.dma_semaphore, #tpu.memory_space<semaphore_mem>>)
      %c2 = arith.constant 2 : index
      %232 = memref.load %arg1[%c2] : memref<320xi32, #tpu.memory_space<smem>>
      %c0_i32_224 = arith.constant 0 : i32
      %c2_i32_225 = arith.constant 2 : i32
      %c0_i32_226 = arith.constant 0 : i32
      %c0_i32_227 = arith.constant 0 : i32
      %233 = tpu.memref_slice %arg2[%232, %c0_i32_227] : memref<512x128xf32, #tpu.memory_space<any>> -> memref<1x128xf32, #tpu.memory_space<any>>
      %c0_i32_228 = arith.constant 0 : i32
      %c0_i32_229 = arith.constant 0 : i32
      %234 = tpu.memref_slice %arg5[%c0_i32_224, %c2_i32_225, %c0_i32_228, %c0_i32_229] : memref<2x5x8x128xf32, #tpu.memory_space<vmem>> -> memref<1x1x1x128xf32, #tpu.memory_space<vmem>>
      %235 = tpu.memref_squeeze %234 : memref<1x1x1x128xf32, #tpu.memory_space<vmem>> -> memref<1x128xf32, #tpu.memory_space<vmem>>
      %236 = tpu.memref_slice %arg6[%c0_i32_226] : memref<2x!tpu.dma_semaphore, #tpu.memory_space<semaphore_mem>> -> memref<1x!tpu.dma_semaphore, #tpu.memory_space<semaphore_mem>>
      %237 = tpu.memref_squeeze %236 : memref<1x!tpu.dma_semaphore, #tpu.memory_space<semaphore_mem>> -> memref<!tpu.dma_semaphore, #tpu.memory_space<semaphore_mem>>
      tpu.enqueue_dma source(%233 : memref<1x128xf32, #tpu.memory_space<any>>) target(%235 : memref<1x128xf32, #tpu.memory_space<vmem>>) target_semaphore(%237 : memref<!tpu.dma_semaphore, #tpu.memory_space<semaphore_mem>>)
      %c3 = arith.constant 3 : index
      %238 = memref.load %arg1[%c3] : memref<320xi32, #tpu.memory_space<smem>>
      %c0_i32_230 = arith.constant 0 : i32
      %c3_i32 = arith.constant 3 : i32
      %c0_i32_231 = arith.constant 0 : i32
      %c0_i32_232 = arith.constant 0 : i32
      %239 = tpu.memref_slice %arg2[%238, %c0_i32_232] : memref<512x128xf32, #tpu.memory_space<any>> -> memref<1x128xf32, #tpu.memory_space<any>>
      %c0_i32_233 = arith.constant 0 : i32
      %c0_i32_234 = arith.constant 0 : i32
      %240 = tpu.memref_slice %arg5[%c0_i32_230, %c3_i32, %c0_i32_233, %c0_i32_234] : memref<2x5x8x128xf32, #tpu.memory_space<vmem>> -> memref<1x1x1x128xf32, #tpu.memory_space<vmem>>
      %241 = tpu.memref_squeeze %240 : memref<1x1x1x128xf32, #tpu.memory_space<vmem>> -> memref<1x128xf32, #tpu.memory_space<vmem>>
      %242 = tpu.memref_slice %arg6[%c0_i32_231] : memref<2x!tpu.dma_semaphore, #tpu.memory_space<semaphore_mem>> -> memref<1x!tpu.dma_semaphore, #tpu.memory_space<semaphore_mem>>
      %243 = tpu.memref_squeeze %242 : memref<1x!tpu.dma_semaphore, #tpu.memory_space<semaphore_mem>> -> memref<!tpu.dma_semaphore, #tpu.memory_space<semaphore_mem>>
      tpu.enqueue_dma source(%239 : memref<1x128xf32, #tpu.memory_space<any>>) target(%241 : memref<1x128xf32, #tpu.memory_space<vmem>>) target_semaphore(%243 : memref<!tpu.dma_semaphore, #tpu.memory_space<semaphore_mem>>)
      %c4 = arith.constant 4 : index
      %244 = memref.load %arg1[%c4] : memref<320xi32, #tpu.memory_space<smem>>
      %c0_i32_235 = arith.constant 0 : i32
      %c4_i32 = arith.constant 4 : i32
      %c0_i32_236 = arith.constant 0 : i32
      %c0_i32_237 = arith.constant 0 : i32
      %245 = tpu.memref_slice %arg2[%244, %c0_i32_237] : memref<512x128xf32, #tpu.memory_space<any>> -> memref<1x128xf32, #tpu.memory_space<any>>
      %c0_i32_238 = arith.constant 0 : i32
      %c0_i32_239 = arith.constant 0 : i32
      %246 = tpu.memref_slice %arg5[%c0_i32_235, %c4_i32, %c0_i32_238, %c0_i32_239] : memref<2x5x8x128xf32, #tpu.memory_space<vmem>> -> memref<1x1x1x128xf32, #tpu.memory_space<vmem>>
      %247 = tpu.memref_squeeze %246 : memref<1x1x1x128xf32, #tpu.memory_space<vmem>> -> memref<1x128xf32, #tpu.memory_space<vmem>>
      %248 = tpu.memref_slice %arg6[%c0_i32_236] : memref<2x!tpu.dma_semaphore, #tpu.memory_space<semaphore_mem>> -> memref<1x!tpu.dma_semaphore, #tpu.memory_space<semaphore_mem>>
      %249 = tpu.memref_squeeze %248 : memref<1x!tpu.dma_semaphore, #tpu.memory_space<semaphore_mem>> -> memref<!tpu.dma_semaphore, #tpu.memory_space<semaphore_mem>>
      tpu.enqueue_dma source(%245 : memref<1x128xf32, #tpu.memory_space<any>>) target(%247 : memref<1x128xf32, #tpu.memory_space<vmem>>) target_semaphore(%249 : memref<!tpu.dma_semaphore, #tpu.memory_space<semaphore_mem>>)
      %c5 = arith.constant 5 : index
      %250 = memref.load %arg1[%c5] : memref<320xi32, #tpu.memory_space<smem>>
      %c0_i32_240 = arith.constant 0 : i32
      %c0_i32_241 = arith.constant 0 : i32
      %c0_i32_242 = arith.constant 0 : i32
      %c0_i32_243 = arith.constant 0 : i32
      %251 = tpu.memref_slice %arg2[%250, %c0_i32_243] : memref<512x128xf32, #tpu.memory_space<any>> -> memref<1x128xf32, #tpu.memory_space<any>>
      %c1_i32_244 = arith.constant 1 : i32
      %c0_i32_245 = arith.constant 0 : i32
      %252 = tpu.memref_slice %arg5[%c0_i32_240, %c0_i32_241, %c1_i32_244, %c0_i32_245] : memref<2x5x8x128xf32, #tpu.memory_space<vmem>> -> memref<1x1x1x128xf32, #tpu.memory_space<vmem>>
      %253 = tpu.memref_squeeze %252 : memref<1x1x1x128xf32, #tpu.memory_space<vmem>> -> memref<1x128xf32, #tpu.memory_space<vmem>>
      %254 = tpu.memref_slice %arg6[%c0_i32_242] : memref<2x!tpu.dma_semaphore, #tpu.memory_space<semaphore_mem>> -> memref<1x!tpu.dma_semaphore, #tpu.memory_space<semaphore_mem>>
      %255 = tpu.memref_squeeze %254 : memref<1x!tpu.dma_semaphore, #tpu.memory_space<semaphore_mem>> -> memref<!tpu.dma_semaphore, #tpu.memory_space<semaphore_mem>>
      tpu.enqueue_dma source(%251 : memref<1x128xf32, #tpu.memory_space<any>>) target(%253 : memref<1x128xf32, #tpu.memory_space<vmem>>) target_semaphore(%255 : memref<!tpu.dma_semaphore, #tpu.memory_space<semaphore_mem>>)
      %c6 = arith.constant 6 : index
      %256 = memref.load %arg1[%c6] : memref<320xi32, #tpu.memory_space<smem>>
      %c0_i32_246 = arith.constant 0 : i32
      %c1_i32_247 = arith.constant 1 : i32
      %c0_i32_248 = arith.constant 0 : i32
      %c0_i32_249 = arith.constant 0 : i32
      %257 = tpu.memref_slice %arg2[%256, %c0_i32_249] : memref<512x128xf32, #tpu.memory_space<any>> -> memref<1x128xf32, #tpu.memory_space<any>>
      %c1_i32_250 = arith.constant 1 : i32
      %c0_i32_251 = arith.constant 0 : i32
      %258 = tpu.memref_slice %arg5[%c0_i32_246, %c1_i32_247, %c1_i32_250, %c0_i32_251] : memref<2x5x8x128xf32, #tpu.memory_space<vmem>> -> memref<1x1x1x128xf32, #tpu.memory_space<vmem>>
      %259 = tpu.memref_squeeze %258 : memref<1x1x1x128xf32, #tpu.memory_space<vmem>> -> memref<1x128xf32, #tpu.memory_space<vmem>>
      %260 = tpu.memref_slice %arg6[%c0_i32_248] : memref<2x!tpu.dma_semaphore, #tpu.memory_space<semaphore_mem>> -> memref<1x!tpu.dma_semaphore, #tpu.memory_space<semaphore_mem>>
      %261 = tpu.memref_squeeze %260 : memref<1x!tpu.dma_semaphore, #tpu.memory_space<semaphore_mem>> -> memref<!tpu.dma_semaphore, #tpu.memory_space<semaphore_mem>>
      tpu.enqueue_dma source(%257 : memref<1x128xf32, #tpu.memory_space<any>>) target(%259 : memref<1x128xf32, #tpu.memory_space<vmem>>) target_semaphore(%261 : memref<!tpu.dma_semaphore, #tpu.memory_space<semaphore_mem>>)
      %c7 = arith.constant 7 : index
      %262 = memref.load %arg1[%c7] : memref<320xi32, #tpu.memory_space<smem>>
      %c0_i32_252 = arith.constant 0 : i32
      %c2_i32_253 = arith.constant 2 : i32
      %c0_i32_254 = arith.constant 0 : i32
      %c0_i32_255 = arith.constant 0 : i32
      %263 = tpu.memref_slice %arg2[%262, %c0_i32_255] : memref<512x128xf32, #tpu.memory_space<any>> -> memref<1x128xf32, #tpu.memory_space<any>>
      %c1_i32_256 = arith.constant 1 : i32
      %c0_i32_257 = arith.constant 0 : i32
      %264 = tpu.memref_slice %arg5[%c0_i32_252, %c2_i32_253, %c1_i32_256, %c0_i32_257] : memref<2x5x8x128xf32, #tpu.memory_space<vmem>> -> memref<1x1x1x128xf32, #tpu.memory_space<vmem>>
      %265 = tpu.memref_squeeze %264 : memref<1x1x1x128xf32, #tpu.memory_space<vmem>> -> memref<1x128xf32, #tpu.memory_space<vmem>>
      %266 = tpu.memref_slice %arg6[%c0_i32_254] : memref<2x!tpu.dma_semaphore, #tpu.memory_space<semaphore_mem>> -> memref<1x!tpu.dma_semaphore, #tpu.memory_space<semaphore_mem>>
      %267 = tpu.memref_squeeze %266 : memref<1x!tpu.dma_semaphore, #tpu.memory_space<semaphore_mem>> -> memref<!tpu.dma_semaphore, #tpu.memory_space<semaphore_mem>>
      tpu.enqueue_dma source(%263 : memref<1x128xf32, #tpu.memory_space<any>>) target(%265 : memref<1x128xf32, #tpu.memory_space<vmem>>) target_semaphore(%267 : memref<!tpu.dma_semaphore, #tpu.memory_space<semaphore_mem>>)
      %c8 = arith.constant 8 : index
      %268 = memref.load %arg1[%c8] : memref<320xi32, #tpu.memory_space<smem>>
      %c0_i32_258 = arith.constant 0 : i32
      %c3_i32_259 = arith.constant 3 : i32
      %c0_i32_260 = arith.constant 0 : i32
      %c0_i32_261 = arith.constant 0 : i32
      %269 = tpu.memref_slice %arg2[%268, %c0_i32_261] : memref<512x128xf32, #tpu.memory_space<any>> -> memref<1x128xf32, #tpu.memory_space<any>>
      %c1_i32_262 = arith.constant 1 : i32
      %c0_i32_263 = arith.constant 0 : i32
      %270 = tpu.memref_slice %arg5[%c0_i32_258, %c3_i32_259, %c1_i32_262, %c0_i32_263] : memref<2x5x8x128xf32, #tpu.memory_space<vmem>> -> memref<1x1x1x128xf32, #tpu.memory_space<vmem>>
      %271 = tpu.memref_squeeze %270 : memref<1x1x1x128xf32, #tpu.memory_space<vmem>> -> memref<1x128xf32, #tpu.memory_space<vmem>>
      %272 = tpu.memref_slice %arg6[%c0_i32_260] : memref<2x!tpu.dma_semaphore, #tpu.memory_space<semaphore_mem>> -> memref<1x!tpu.dma_semaphore, #tpu.memory_space<semaphore_mem>>
      %273 = tpu.memref_squeeze %272 : memref<1x!tpu.dma_semaphore, #tpu.memory_space<semaphore_mem>> -> memref<!tpu.dma_semaphore, #tpu.memory_space<semaphore_mem>>
      tpu.enqueue_dma source(%269 : memref<1x128xf32, #tpu.memory_space<any>>) target(%271 : memref<1x128xf32, #tpu.memory_space<vmem>>) target_semaphore(%273 : memref<!tpu.dma_semaphore, #tpu.memory_space<semaphore_mem>>)
      %c9 = arith.constant 9 : index
      %274 = memref.load %arg1[%c9] : memref<320xi32, #tpu.memory_space<smem>>
      %c0_i32_264 = arith.constant 0 : i32
      %c4_i32_265 = arith.constant 4 : i32
      %c0_i32_266 = arith.constant 0 : i32
      %c0_i32_267 = arith.constant 0 : i32
      %275 = tpu.memref_slice %arg2[%274, %c0_i32_267] : memref<512x128xf32, #tpu.memory_space<any>> -> memref<1x128xf32, #tpu.memory_space<any>>
      %c1_i32_268 = arith.constant 1 : i32
      %c0_i32_269 = arith.constant 0 : i32
      %276 = tpu.memref_slice %arg5[%c0_i32_264, %c4_i32_265, %c1_i32_268, %c0_i32_269] : memref<2x5x8x128xf32, #tpu.memory_space<vmem>> -> memref<1x1x1x128xf32, #tpu.memory_space<vmem>>
      %277 = tpu.memref_squeeze %276 : memref<1x1x1x128xf32, #tpu.memory_space<vmem>> -> memref<1x128xf32, #tpu.memory_space<vmem>>
      %278 = tpu.memref_slice %arg6[%c0_i32_266] : memref<2x!tpu.dma_semaphore, #tpu.memory_space<semaphore_mem>> -> memref<1x!tpu.dma_semaphore, #tpu.memory_space<semaphore_mem>>
      %279 = tpu.memref_squeeze %278 : memref<1x!tpu.dma_semaphore, #tpu.memory_space<semaphore_mem>> -> memref<!tpu.dma_semaphore, #tpu.memory_space<semaphore_mem>>
      tpu.enqueue_dma source(%275 : memref<1x128xf32, #tpu.memory_space<any>>) target(%277 : memref<1x128xf32, #tpu.memory_space<vmem>>) target_semaphore(%279 : memref<!tpu.dma_semaphore, #tpu.memory_space<semaphore_mem>>)
      %c10 = arith.constant 10 : index
      %280 = memref.load %arg1[%c10] : memref<320xi32, #tpu.memory_space<smem>>
      %c0_i32_270 = arith.constant 0 : i32
      %c0_i32_271 = arith.constant 0 : i32
      %c0_i32_272 = arith.constant 0 : i32
      %c0_i32_273 = arith.constant 0 : i32
      %281 = tpu.memref_slice %arg2[%280, %c0_i32_273] : memref<512x128xf32, #tpu.memory_space<any>> -> memref<1x128xf32, #tpu.memory_space<any>>
      %c2_i32_274 = arith.constant 2 : i32
      %c0_i32_275 = arith.constant 0 : i32
      %282 = tpu.memref_slice %arg5[%c0_i32_270, %c0_i32_271, %c2_i32_274, %c0_i32_275] : memref<2x5x8x128xf32, #tpu.memory_space<vmem>> -> memref<1x1x1x128xf32, #tpu.memory_space<vmem>>
      %283 = tpu.memref_squeeze %282 : memref<1x1x1x128xf32, #tpu.memory_space<vmem>> -> memref<1x128xf32, #tpu.memory_space<vmem>>
      %284 = tpu.memref_slice %arg6[%c0_i32_272] : memref<2x!tpu.dma_semaphore, #tpu.memory_space<semaphore_mem>> -> memref<1x!tpu.dma_semaphore, #tpu.memory_space<semaphore_mem>>
      %285 = tpu.memref_squeeze %284 : memref<1x!tpu.dma_semaphore, #tpu.memory_space<semaphore_mem>> -> memref<!tpu.dma_semaphore, #tpu.memory_space<semaphore_mem>>
      tpu.enqueue_dma source(%281 : memref<1x128xf32, #tpu.memory_space<any>>) target(%283 : memref<1x128xf32, #tpu.memory_space<vmem>>) target_semaphore(%285 : memref<!tpu.dma_semaphore, #tpu.memory_space<semaphore_mem>>)
      %c11 = arith.constant 11 : index
      %286 = memref.load %arg1[%c11] : memref<320xi32, #tpu.memory_space<smem>>
      %c0_i32_276 = arith.constant 0 : i32
      %c1_i32_277 = arith.constant 1 : i32
      %c0_i32_278 = arith.constant 0 : i32
      %c0_i32_279 = arith.constant 0 : i32
      %287 = tpu.memref_slice %arg2[%286, %c0_i32_279] : memref<512x128xf32, #tpu.memory_space<any>> -> memref<1x128xf32, #tpu.memory_space<any>>
      %c2_i32_280 = arith.constant 2 : i32
      %c0_i32_281 = arith.constant 0 : i32
      %288 = tpu.memref_slice %arg5[%c0_i32_276, %c1_i32_277, %c2_i32_280, %c0_i32_281] : memref<2x5x8x128xf32, #tpu.memory_space<vmem>> -> memref<1x1x1x128xf32, #tpu.memory_space<vmem>>
      %289 = tpu.memref_squeeze %288 : memref<1x1x1x128xf32, #tpu.memory_space<vmem>> -> memref<1x128xf32, #tpu.memory_space<vmem>>
      %290 = tpu.memref_slice %arg6[%c0_i32_278] : memref<2x!tpu.dma_semaphore, #tpu.memory_space<semaphore_mem>> -> memref<1x!tpu.dma_semaphore, #tpu.memory_space<semaphore_mem>>
      %291 = tpu.memref_squeeze %290 : memref<1x!tpu.dma_semaphore, #tpu.memory_space<semaphore_mem>> -> memref<!tpu.dma_semaphore, #tpu.memory_space<semaphore_mem>>
      tpu.enqueue_dma source(%287 : memref<1x128xf32, #tpu.memory_space<any>>) target(%289 : memref<1x128xf32, #tpu.memory_space<vmem>>) target_semaphore(%291 : memref<!tpu.dma_semaphore, #tpu.memory_space<semaphore_mem>>)
      %c12 = arith.constant 12 : index
      %292 = memref.load %arg1[%c12] : memref<320xi32, #tpu.memory_space<smem>>
      %c0_i32_282 = arith.constant 0 : i32
      %c2_i32_283 = arith.constant 2 : i32
      %c0_i32_284 = arith.constant 0 : i32
      %c0_i32_285 = arith.constant 0 : i32
      %293 = tpu.memref_slice %arg2[%292, %c0_i32_285] : memref<512x128xf32, #tpu.memory_space<any>> -> memref<1x128xf32, #tpu.memory_space<any>>
      %c2_i32_286 = arith.constant 2 : i32
      %c0_i32_287 = arith.constant 0 : i32
      %294 = tpu.memref_slice %arg5[%c0_i32_282, %c2_i32_283, %c2_i32_286, %c0_i32_287] : memref<2x5x8x128xf32, #tpu.memory_space<vmem>> -> memref<1x1x1x128xf32, #tpu.memory_space<vmem>>
      %295 = tpu.memref_squeeze %294 : memref<1x1x1x128xf32, #tpu.memory_space<vmem>> -> memref<1x128xf32, #tpu.memory_space<vmem>>
      %296 = tpu.memref_slice %arg6[%c0_i32_284] : memref<2x!tpu.dma_semaphore, #tpu.memory_space<semaphore_mem>> -> memref<1x!tpu.dma_semaphore, #tpu.memory_space<semaphore_mem>>
      %297 = tpu.memref_squeeze %296 : memref<1x!tpu.dma_semaphore, #tpu.memory_space<semaphore_mem>> -> memref<!tpu.dma_semaphore, #tpu.memory_space<semaphore_mem>>
      tpu.enqueue_dma source(%293 : memref<1x128xf32, #tpu.memory_space<any>>) target(%295 : memref<1x128xf32, #tpu.memory_space<vmem>>) target_semaphore(%297 : memref<!tpu.dma_semaphore, #tpu.memory_space<semaphore_mem>>)
      %c13 = arith.constant 13 : index
      %298 = memref.load %arg1[%c13] : memref<320xi32, #tpu.memory_space<smem>>
      %c0_i32_288 = arith.constant 0 : i32
      %c3_i32_289 = arith.constant 3 : i32
      %c0_i32_290 = arith.constant 0 : i32
      %c0_i32_291 = arith.constant 0 : i32
      %299 = tpu.memref_slice %arg2[%298, %c0_i32_291] : memref<512x128xf32, #tpu.memory_space<any>> -> memref<1x128xf32, #tpu.memory_space<any>>
      %c2_i32_292 = arith.constant 2 : i32
      %c0_i32_293 = arith.constant 0 : i32
      %300 = tpu.memref_slice %arg5[%c0_i32_288, %c3_i32_289, %c2_i32_292, %c0_i32_293] : memref<2x5x8x128xf32, #tpu.memory_space<vmem>> -> memref<1x1x1x128xf32, #tpu.memory_space<vmem>>
      %301 = tpu.memref_squeeze %300 : memref<1x1x1x128xf32, #tpu.memory_space<vmem>> -> memref<1x128xf32, #tpu.memory_space<vmem>>
      %302 = tpu.memref_slice %arg6[%c0_i32_290] : memref<2x!tpu.dma_semaphore, #tpu.memory_space<semaphore_mem>> -> memref<1x!tpu.dma_semaphore, #tpu.memory_space<semaphore_mem>>
      %303 = tpu.memref_squeeze %302 : memref<1x!tpu.dma_semaphore, #tpu.memory_space<semaphore_mem>> -> memref<!tpu.dma_semaphore, #tpu.memory_space<semaphore_mem>>
      tpu.enqueue_dma source(%299 : memref<1x128xf32, #tpu.memory_space<any>>) target(%301 : memref<1x128xf32, #tpu.memory_space<vmem>>) target_semaphore(%303 : memref<!tpu.dma_semaphore, #tpu.memory_space<semaphore_mem>>)
      %c14 = arith.constant 14 : index
      %304 = memref.load %arg1[%c14] : memref<320xi32, #tpu.memory_space<smem>>
      %c0_i32_294 = arith.constant 0 : i32
      %c4_i32_295 = arith.constant 4 : i32
      %c0_i32_296 = arith.constant 0 : i32
      %c0_i32_297 = arith.constant 0 : i32
      %305 = tpu.memref_slice %arg2[%304, %c0_i32_297] : memref<512x128xf32, #tpu.memory_space<any>> -> memref<1x128xf32, #tpu.memory_space<any>>
      %c2_i32_298 = arith.constant 2 : i32
      %c0_i32_299 = arith.constant 0 : i32
      %306 = tpu.memref_slice %arg5[%c0_i32_294, %c4_i32_295, %c2_i32_298, %c0_i32_299] : memref<2x5x8x128xf32, #tpu.memory_space<vmem>> -> memref<1x1x1x128xf32, #tpu.memory_space<vmem>>
      %307 = tpu.memref_squeeze %306 : memref<1x1x1x128xf32, #tpu.memory_space<vmem>> -> memref<1x128xf32, #tpu.memory_space<vmem>>
      %308 = tpu.memref_slice %arg6[%c0_i32_296] : memref<2x!tpu.dma_semaphore, #tpu.memory_space<semaphore_mem>> -> memref<1x!tpu.dma_semaphore, #tpu.memory_space<semaphore_mem>>
      %309 = tpu.memref_squeeze %308 : memref<1x!tpu.dma_semaphore, #tpu.memory_space<semaphore_mem>> -> memref<!tpu.dma_semaphore, #tpu.memory_space<semaphore_mem>>
      tpu.enqueue_dma source(%305 : memref<1x128xf32, #tpu.memory_space<any>>) target(%307 : memref<1x128xf32, #tpu.memory_space<vmem>>) target_semaphore(%309 : memref<!tpu.dma_semaphore, #tpu.memory_space<semaphore_mem>>)
      %c15 = arith.constant 15 : index
      %310 = memref.load %arg1[%c15] : memref<320xi32, #tpu.memory_space<smem>>
      %c0_i32_300 = arith.constant 0 : i32
      %c0_i32_301 = arith.constant 0 : i32
      %c0_i32_302 = arith.constant 0 : i32
      %c0_i32_303 = arith.constant 0 : i32
      %311 = tpu.memref_slice %arg2[%310, %c0_i32_303] : memref<512x128xf32, #tpu.memory_space<any>> -> memref<1x128xf32, #tpu.memory_space<any>>
      %c3_i32_304 = arith.constant 3 : i32
      %c0_i32_305 = arith.constant 0 : i32
      %312 = tpu.memref_slice %arg5[%c0_i32_300, %c0_i32_301, %c3_i32_304, %c0_i32_305] : memref<2x5x8x128xf32, #tpu.memory_space<vmem>> -> memref<1x1x1x128xf32, #tpu.memory_space<vmem>>
      %313 = tpu.memref_squeeze %312 : memref<1x1x1x128xf32, #tpu.memory_space<vmem>> -> memref<1x128xf32, #tpu.memory_space<vmem>>
      %314 = tpu.memref_slice %arg6[%c0_i32_302] : memref<2x!tpu.dma_semaphore, #tpu.memory_space<semaphore_mem>> -> memref<1x!tpu.dma_semaphore, #tpu.memory_space<semaphore_mem>>
      %315 = tpu.memref_squeeze %314 : memref<1x!tpu.dma_semaphore, #tpu.memory_space<semaphore_mem>> -> memref<!tpu.dma_semaphore, #tpu.memory_space<semaphore_mem>>
      tpu.enqueue_dma source(%311 : memref<1x128xf32, #tpu.memory_space<any>>) target(%313 : memref<1x128xf32, #tpu.memory_space<vmem>>) target_semaphore(%315 : memref<!tpu.dma_semaphore, #tpu.memory_space<semaphore_mem>>)
      %c16 = arith.constant 16 : index
      %316 = memref.load %arg1[%c16] : memref<320xi32, #tpu.memory_space<smem>>
      %c0_i32_306 = arith.constant 0 : i32
      %c1_i32_307 = arith.constant 1 : i32
      %c0_i32_308 = arith.constant 0 : i32
      %c0_i32_309 = arith.constant 0 : i32
      %317 = tpu.memref_slice %arg2[%316, %c0_i32_309] : memref<512x128xf32, #tpu.memory_space<any>> -> memref<1x128xf32, #tpu.memory_space<any>>
      %c3_i32_310 = arith.constant 3 : i32
      %c0_i32_311 = arith.constant 0 : i32
      %318 = tpu.memref_slice %arg5[%c0_i32_306, %c1_i32_307, %c3_i32_310, %c0_i32_311] : memref<2x5x8x128xf32, #tpu.memory_space<vmem>> -> memref<1x1x1x128xf32, #tpu.memory_space<vmem>>
      %319 = tpu.memref_squeeze %318 : memref<1x1x1x128xf32, #tpu.memory_space<vmem>> -> memref<1x128xf32, #tpu.memory_space<vmem>>
      %320 = tpu.memref_slice %arg6[%c0_i32_308] : memref<2x!tpu.dma_semaphore, #tpu.memory_space<semaphore_mem>> -> memref<1x!tpu.dma_semaphore, #tpu.memory_space<semaphore_mem>>
      %321 = tpu.memref_squeeze %320 : memref<1x!tpu.dma_semaphore, #tpu.memory_space<semaphore_mem>> -> memref<!tpu.dma_semaphore, #tpu.memory_space<semaphore_mem>>
      tpu.enqueue_dma source(%317 : memref<1x128xf32, #tpu.memory_space<any>>) target(%319 : memref<1x128xf32, #tpu.memory_space<vmem>>) target_semaphore(%321 : memref<!tpu.dma_semaphore, #tpu.memory_space<semaphore_mem>>)
      %c17 = arith.constant 17 : index
      %322 = memref.load %arg1[%c17] : memref<320xi32, #tpu.memory_space<smem>>
      %c0_i32_312 = arith.constant 0 : i32
      %c2_i32_313 = arith.constant 2 : i32
      %c0_i32_314 = arith.constant 0 : i32
      %c0_i32_315 = arith.constant 0 : i32
      %323 = tpu.memref_slice %arg2[%322, %c0_i32_315] : memref<512x128xf32, #tpu.memory_space<any>> -> memref<1x128xf32, #tpu.memory_space<any>>
      %c3_i32_316 = arith.constant 3 : i32
      %c0_i32_317 = arith.constant 0 : i32
      %324 = tpu.memref_slice %arg5[%c0_i32_312, %c2_i32_313, %c3_i32_316, %c0_i32_317] : memref<2x5x8x128xf32, #tpu.memory_space<vmem>> -> memref<1x1x1x128xf32, #tpu.memory_space<vmem>>
      %325 = tpu.memref_squeeze %324 : memref<1x1x1x128xf32, #tpu.memory_space<vmem>> -> memref<1x128xf32, #tpu.memory_space<vmem>>
      %326 = tpu.memref_slice %arg6[%c0_i32_314] : memref<2x!tpu.dma_semaphore, #tpu.memory_space<semaphore_mem>> -> memref<1x!tpu.dma_semaphore, #tpu.memory_space<semaphore_mem>>
      %327 = tpu.memref_squeeze %326 : memref<1x!tpu.dma_semaphore, #tpu.memory_space<semaphore_mem>> -> memref<!tpu.dma_semaphore, #tpu.memory_space<semaphore_mem>>
      tpu.enqueue_dma source(%323 : memref<1x128xf32, #tpu.memory_space<any>>) target(%325 : memref<1x128xf32, #tpu.memory_space<vmem>>) target_semaphore(%327 : memref<!tpu.dma_semaphore, #tpu.memory_space<semaphore_mem>>)
      %c18 = arith.constant 18 : index
      %328 = memref.load %arg1[%c18] : memref<320xi32, #tpu.memory_space<smem>>
      %c0_i32_318 = arith.constant 0 : i32
      %c3_i32_319 = arith.constant 3 : i32
      %c0_i32_320 = arith.constant 0 : i32
      %c0_i32_321 = arith.constant 0 : i32
      %329 = tpu.memref_slice %arg2[%328, %c0_i32_321] : memref<512x128xf32, #tpu.memory_space<any>> -> memref<1x128xf32, #tpu.memory_space<any>>
      %c3_i32_322 = arith.constant 3 : i32
      %c0_i32_323 = arith.constant 0 : i32
      %330 = tpu.memref_slice %arg5[%c0_i32_318, %c3_i32_319, %c3_i32_322, %c0_i32_323] : memref<2x5x8x128xf32, #tpu.memory_space<vmem>> -> memref<1x1x1x128xf32, #tpu.memory_space<vmem>>
      %331 = tpu.memref_squeeze %330 : memref<1x1x1x128xf32, #tpu.memory_space<vmem>> -> memref<1x128xf32, #tpu.memory_space<vmem>>
      %332 = tpu.memref_slice %arg6[%c0_i32_320] : memref<2x!tpu.dma_semaphore, #tpu.memory_space<semaphore_mem>> -> memref<1x!tpu.dma_semaphore, #tpu.memory_space<semaphore_mem>>
      %333 = tpu.memref_squeeze %332 : memref<1x!tpu.dma_semaphore, #tpu.memory_space<semaphore_mem>> -> memref<!tpu.dma_semaphore, #tpu.memory_space<semaphore_mem>>
      tpu.enqueue_dma source(%329 : memref<1x128xf32, #tpu.memory_space<any>>) target(%331 : memref<1x128xf32, #tpu.memory_space<vmem>>) target_semaphore(%333 : memref<!tpu.dma_semaphore, #tpu.memory_space<semaphore_mem>>)
      %c19 = arith.constant 19 : index
      %334 = memref.load %arg1[%c19] : memref<320xi32, #tpu.memory_space<smem>>
      %c0_i32_324 = arith.constant 0 : i32
      %c4_i32_325 = arith.constant 4 : i32
      %c0_i32_326 = arith.constant 0 : i32
      %c0_i32_327 = arith.constant 0 : i32
      %335 = tpu.memref_slice %arg2[%334, %c0_i32_327] : memref<512x128xf32, #tpu.memory_space<any>> -> memref<1x128xf32, #tpu.memory_space<any>>
      %c3_i32_328 = arith.constant 3 : i32
      %c0_i32_329 = arith.constant 0 : i32
      %336 = tpu.memref_slice %arg5[%c0_i32_324, %c4_i32_325, %c3_i32_328, %c0_i32_329] : memref<2x5x8x128xf32, #tpu.memory_space<vmem>> -> memref<1x1x1x128xf32, #tpu.memory_space<vmem>>
      %337 = tpu.memref_squeeze %336 : memref<1x1x1x128xf32, #tpu.memory_space<vmem>> -> memref<1x128xf32, #tpu.memory_space<vmem>>
      %338 = tpu.memref_slice %arg6[%c0_i32_326] : memref<2x!tpu.dma_semaphore, #tpu.memory_space<semaphore_mem>> -> memref<1x!tpu.dma_semaphore, #tpu.memory_space<semaphore_mem>>
      %339 = tpu.memref_squeeze %338 : memref<1x!tpu.dma_semaphore, #tpu.memory_space<semaphore_mem>> -> memref<!tpu.dma_semaphore, #tpu.memory_space<semaphore_mem>>
      tpu.enqueue_dma source(%335 : memref<1x128xf32, #tpu.memory_space<any>>) target(%337 : memref<1x128xf32, #tpu.memory_space<vmem>>) target_semaphore(%339 : memref<!tpu.dma_semaphore, #tpu.memory_space<semaphore_mem>>)
      %c20 = arith.constant 20 : index
      %340 = memref.load %arg1[%c20] : memref<320xi32, #tpu.memory_space<smem>>
      %c0_i32_330 = arith.constant 0 : i32
      %c0_i32_331 = arith.constant 0 : i32
      %c0_i32_332 = arith.constant 0 : i32
      %c0_i32_333 = arith.constant 0 : i32
      %341 = tpu.memref_slice %arg2[%340, %c0_i32_333] : memref<512x128xf32, #tpu.memory_space<any>> -> memref<1x128xf32, #tpu.memory_space<any>>
      %c4_i32_334 = arith.constant 4 : i32
      %c0_i32_335 = arith.constant 0 : i32
      %342 = tpu.memref_slice %arg5[%c0_i32_330, %c0_i32_331, %c4_i32_334, %c0_i32_335] : memref<2x5x8x128xf32, #tpu.memory_space<vmem>> -> memref<1x1x1x128xf32, #tpu.memory_space<vmem>>
      %343 = tpu.memref_squeeze %342 : memref<1x1x1x128xf32, #tpu.memory_space<vmem>> -> memref<1x128xf32, #tpu.memory_space<vmem>>
      %344 = tpu.memref_slice %arg6[%c0_i32_332] : memref<2x!tpu.dma_semaphore, #tpu.memory_space<semaphore_mem>> -> memref<1x!tpu.dma_semaphore, #tpu.memory_space<semaphore_mem>>
      %345 = tpu.memref_squeeze %344 : memref<1x!tpu.dma_semaphore, #tpu.memory_space<semaphore_mem>> -> memref<!tpu.dma_semaphore, #tpu.memory_space<semaphore_mem>>
      tpu.enqueue_dma source(%341 : memref<1x128xf32, #tpu.memory_space<any>>) target(%343 : memref<1x128xf32, #tpu.memory_space<vmem>>) target_semaphore(%345 : memref<!tpu.dma_semaphore, #tpu.memory_space<semaphore_mem>>)
      %c21 = arith.constant 21 : index
      %346 = memref.load %arg1[%c21] : memref<320xi32, #tpu.memory_space<smem>>
      %c0_i32_336 = arith.constant 0 : i32
      %c1_i32_337 = arith.constant 1 : i32
      %c0_i32_338 = arith.constant 0 : i32
      %c0_i32_339 = arith.constant 0 : i32
      %347 = tpu.memref_slice %arg2[%346, %c0_i32_339] : memref<512x128xf32, #tpu.memory_space<any>> -> memref<1x128xf32, #tpu.memory_space<any>>
      %c4_i32_340 = arith.constant 4 : i32
      %c0_i32_341 = arith.constant 0 : i32
      %348 = tpu.memref_slice %arg5[%c0_i32_336, %c1_i32_337, %c4_i32_340, %c0_i32_341] : memref<2x5x8x128xf32, #tpu.memory_space<vmem>> -> memref<1x1x1x128xf32, #tpu.memory_space<vmem>>
      %349 = tpu.memref_squeeze %348 : memref<1x1x1x128xf32, #tpu.memory_space<vmem>> -> memref<1x128xf32, #tpu.memory_space<vmem>>
      %350 = tpu.memref_slice %arg6[%c0_i32_338] : memref<2x!tpu.dma_semaphore, #tpu.memory_space<semaphore_mem>> -> memref<1x!tpu.dma_semaphore, #tpu.memory_space<semaphore_mem>>
      %351 = tpu.memref_squeeze %350 : memref<1x!tpu.dma_semaphore, #tpu.memory_space<semaphore_mem>> -> memref<!tpu.dma_semaphore, #tpu.memory_space<semaphore_mem>>
      tpu.enqueue_dma source(%347 : memref<1x128xf32, #tpu.memory_space<any>>) target(%349 : memref<1x128xf32, #tpu.memory_space<vmem>>) target_semaphore(%351 : memref<!tpu.dma_semaphore, #tpu.memory_space<semaphore_mem>>)
      %c22 = arith.constant 22 : index
      %352 = memref.load %arg1[%c22] : memref<320xi32, #tpu.memory_space<smem>>
      %c0_i32_342 = arith.constant 0 : i32
      %c2_i32_343 = arith.constant 2 : i32
      %c0_i32_344 = arith.constant 0 : i32
      %c0_i32_345 = arith.constant 0 : i32
      %353 = tpu.memref_slice %arg2[%352, %c0_i32_345] : memref<512x128xf32, #tpu.memory_space<any>> -> memref<1x128xf32, #tpu.memory_space<any>>
      %c4_i32_346 = arith.constant 4 : i32
      %c0_i32_347 = arith.constant 0 : i32
      %354 = tpu.memref_slice %arg5[%c0_i32_342, %c2_i32_343, %c4_i32_346, %c0_i32_347] : memref<2x5x8x128xf32, #tpu.memory_space<vmem>> -> memref<1x1x1x128xf32, #tpu.memory_space<vmem>>
      %355 = tpu.memref_squeeze %354 : memref<1x1x1x128xf32, #tpu.memory_space<vmem>> -> memref<1x128xf32, #tpu.memory_space<vmem>>
      %356 = tpu.memref_slice %arg6[%c0_i32_344] : memref<2x!tpu.dma_semaphore, #tpu.memory_space<semaphore_mem>> -> memref<1x!tpu.dma_semaphore, #tpu.memory_space<semaphore_mem>>
      %357 = tpu.memref_squeeze %356 : memref<1x!tpu.dma_semaphore, #tpu.memory_space<semaphore_mem>> -> memref<!tpu.dma_semaphore, #tpu.memory_space<semaphore_mem>>
      tpu.enqueue_dma source(%353 : memref<1x128xf32, #tpu.memory_space<any>>) target(%355 : memref<1x128xf32, #tpu.memory_space<vmem>>) target_semaphore(%357 : memref<!tpu.dma_semaphore, #tpu.memory_space<semaphore_mem>>)
      %c23 = arith.constant 23 : index
      %358 = memref.load %arg1[%c23] : memref<320xi32, #tpu.memory_space<smem>>
      %c0_i32_348 = arith.constant 0 : i32
      %c3_i32_349 = arith.constant 3 : i32
      %c0_i32_350 = arith.constant 0 : i32
      %c0_i32_351 = arith.constant 0 : i32
      %359 = tpu.memref_slice %arg2[%358, %c0_i32_351] : memref<512x128xf32, #tpu.memory_space<any>> -> memref<1x128xf32, #tpu.memory_space<any>>
      %c4_i32_352 = arith.constant 4 : i32
      %c0_i32_353 = arith.constant 0 : i32
      %360 = tpu.memref_slice %arg5[%c0_i32_348, %c3_i32_349, %c4_i32_352, %c0_i32_353] : memref<2x5x8x128xf32, #tpu.memory_space<vmem>> -> memref<1x1x1x128xf32, #tpu.memory_space<vmem>>
      %361 = tpu.memref_squeeze %360 : memref<1x1x1x128xf32, #tpu.memory_space<vmem>> -> memref<1x128xf32, #tpu.memory_space<vmem>>
      %362 = tpu.memref_slice %arg6[%c0_i32_350] : memref<2x!tpu.dma_semaphore, #tpu.memory_space<semaphore_mem>> -> memref<1x!tpu.dma_semaphore, #tpu.memory_space<semaphore_mem>>
      %363 = tpu.memref_squeeze %362 : memref<1x!tpu.dma_semaphore, #tpu.memory_space<semaphore_mem>> -> memref<!tpu.dma_semaphore, #tpu.memory_space<semaphore_mem>>
      tpu.enqueue_dma source(%359 : memref<1x128xf32, #tpu.memory_space<any>>) target(%361 : memref<1x128xf32, #tpu.memory_space<vmem>>) target_semaphore(%363 : memref<!tpu.dma_semaphore, #tpu.memory_space<semaphore_mem>>)
      %c24 = arith.constant 24 : index
      %364 = memref.load %arg1[%c24] : memref<320xi32, #tpu.memory_space<smem>>
      %c0_i32_354 = arith.constant 0 : i32
      %c4_i32_355 = arith.constant 4 : i32
      %c0_i32_356 = arith.constant 0 : i32
      %c0_i32_357 = arith.constant 0 : i32
      %365 = tpu.memref_slice %arg2[%364, %c0_i32_357] : memref<512x128xf32, #tpu.memory_space<any>> -> memref<1x128xf32, #tpu.memory_space<any>>
      %c4_i32_358 = arith.constant 4 : i32
      %c0_i32_359 = arith.constant 0 : i32
      %366 = tpu.memref_slice %arg5[%c0_i32_354, %c4_i32_355, %c4_i32_358, %c0_i32_359] : memref<2x5x8x128xf32, #tpu.memory_space<vmem>> -> memref<1x1x1x128xf32, #tpu.memory_space<vmem>>
      %367 = tpu.memref_squeeze %366 : memref<1x1x1x128xf32, #tpu.memory_space<vmem>> -> memref<1x128xf32, #tpu.memory_space<vmem>>
      %368 = tpu.memref_slice %arg6[%c0_i32_356] : memref<2x!tpu.dma_semaphore, #tpu.memory_space<semaphore_mem>> -> memref<1x!tpu.dma_semaphore, #tpu.memory_space<semaphore_mem>>
      %369 = tpu.memref_squeeze %368 : memref<1x!tpu.dma_semaphore, #tpu.memory_space<semaphore_mem>> -> memref<!tpu.dma_semaphore, #tpu.memory_space<semaphore_mem>>
      tpu.enqueue_dma source(%365 : memref<1x128xf32, #tpu.memory_space<any>>) target(%367 : memref<1x128xf32, #tpu.memory_space<vmem>>) target_semaphore(%369 : memref<!tpu.dma_semaphore, #tpu.memory_space<semaphore_mem>>)
      %c25 = arith.constant 25 : index
      %370 = memref.load %arg1[%c25] : memref<320xi32, #tpu.memory_space<smem>>
      %c0_i32_360 = arith.constant 0 : i32
      %c0_i32_361 = arith.constant 0 : i32
      %c0_i32_362 = arith.constant 0 : i32
      %c0_i32_363 = arith.constant 0 : i32
      %371 = tpu.memref_slice %arg2[%370, %c0_i32_363] : memref<512x128xf32, #tpu.memory_space<any>> -> memref<1x128xf32, #tpu.memory_space<any>>
      %c5_i32 = arith.constant 5 : i32
      %c0_i32_364 = arith.constant 0 : i32
      %372 = tpu.memref_slice %arg5[%c0_i32_360, %c0_i32_361, %c5_i32, %c0_i32_364] : memref<2x5x8x128xf32, #tpu.memory_space<vmem>> -> memref<1x1x1x128xf32, #tpu.memory_space<vmem>>
      %373 = tpu.memref_squeeze %372 : memref<1x1x1x128xf32, #tpu.memory_space<vmem>> -> memref<1x128xf32, #tpu.memory_space<vmem>>
      %374 = tpu.memref_slice %arg6[%c0_i32_362] : memref<2x!tpu.dma_semaphore, #tpu.memory_space<semaphore_mem>> -> memref<1x!tpu.dma_semaphore, #tpu.memory_space<semaphore_mem>>
      %375 = tpu.memref_squeeze %374 : memref<1x!tpu.dma_semaphore, #tpu.memory_space<semaphore_mem>> -> memref<!tpu.dma_semaphore, #tpu.memory_space<semaphore_mem>>
      tpu.enqueue_dma source(%371 : memref<1x128xf32, #tpu.memory_space<any>>) target(%373 : memref<1x128xf32, #tpu.memory_space<vmem>>) target_semaphore(%375 : memref<!tpu.dma_semaphore, #tpu.memory_space<semaphore_mem>>)
      %c26 = arith.constant 26 : index
      %376 = memref.load %arg1[%c26] : memref<320xi32, #tpu.memory_space<smem>>
      %c0_i32_365 = arith.constant 0 : i32
      %c1_i32_366 = arith.constant 1 : i32
      %c0_i32_367 = arith.constant 0 : i32
      %c0_i32_368 = arith.constant 0 : i32
      %377 = tpu.memref_slice %arg2[%376, %c0_i32_368] : memref<512x128xf32, #tpu.memory_space<any>> -> memref<1x128xf32, #tpu.memory_space<any>>
      %c5_i32_369 = arith.constant 5 : i32
      %c0_i32_370 = arith.constant 0 : i32
      %378 = tpu.memref_slice %arg5[%c0_i32_365, %c1_i32_366, %c5_i32_369, %c0_i32_370] : memref<2x5x8x128xf32, #tpu.memory_space<vmem>> -> memref<1x1x1x128xf32, #tpu.memory_space<vmem>>
      %379 = tpu.memref_squeeze %378 : memref<1x1x1x128xf32, #tpu.memory_space<vmem>> -> memref<1x128xf32, #tpu.memory_space<vmem>>
      %380 = tpu.memref_slice %arg6[%c0_i32_367] : memref<2x!tpu.dma_semaphore, #tpu.memory_space<semaphore_mem>> -> memref<1x!tpu.dma_semaphore, #tpu.memory_space<semaphore_mem>>
      %381 = tpu.memref_squeeze %380 : memref<1x!tpu.dma_semaphore, #tpu.memory_space<semaphore_mem>> -> memref<!tpu.dma_semaphore, #tpu.memory_space<semaphore_mem>>
      tpu.enqueue_dma source(%377 : memref<1x128xf32, #tpu.memory_space<any>>) target(%379 : memref<1x128xf32, #tpu.memory_space<vmem>>) target_semaphore(%381 : memref<!tpu.dma_semaphore, #tpu.memory_space<semaphore_mem>>)
      %c27 = arith.constant 27 : index
      %382 = memref.load %arg1[%c27] : memref<320xi32, #tpu.memory_space<smem>>
      %c0_i32_371 = arith.constant 0 : i32
      %c2_i32_372 = arith.constant 2 : i32
      %c0_i32_373 = arith.constant 0 : i32
      %c0_i32_374 = arith.constant 0 : i32
      %383 = tpu.memref_slice %arg2[%382, %c0_i32_374] : memref<512x128xf32, #tpu.memory_space<any>> -> memref<1x128xf32, #tpu.memory_space<any>>
      %c5_i32_375 = arith.constant 5 : i32
      %c0_i32_376 = arith.constant 0 : i32
      %384 = tpu.memref_slice %arg5[%c0_i32_371, %c2_i32_372, %c5_i32_375, %c0_i32_376] : memref<2x5x8x128xf32, #tpu.memory_space<vmem>> -> memref<1x1x1x128xf32, #tpu.memory_space<vmem>>
      %385 = tpu.memref_squeeze %384 : memref<1x1x1x128xf32, #tpu.memory_space<vmem>> -> memref<1x128xf32, #tpu.memory_space<vmem>>
      %386 = tpu.memref_slice %arg6[%c0_i32_373] : memref<2x!tpu.dma_semaphore, #tpu.memory_space<semaphore_mem>> -> memref<1x!tpu.dma_semaphore, #tpu.memory_space<semaphore_mem>>
      %387 = tpu.memref_squeeze %386 : memref<1x!tpu.dma_semaphore, #tpu.memory_space<semaphore_mem>> -> memref<!tpu.dma_semaphore, #tpu.memory_space<semaphore_mem>>
      tpu.enqueue_dma source(%383 : memref<1x128xf32, #tpu.memory_space<any>>) target(%385 : memref<1x128xf32, #tpu.memory_space<vmem>>) target_semaphore(%387 : memref<!tpu.dma_semaphore, #tpu.memory_space<semaphore_mem>>)
      %c28 = arith.constant 28 : index
      %388 = memref.load %arg1[%c28] : memref<320xi32, #tpu.memory_space<smem>>
      %c0_i32_377 = arith.constant 0 : i32
      %c3_i32_378 = arith.constant 3 : i32
      %c0_i32_379 = arith.constant 0 : i32
      %c0_i32_380 = arith.constant 0 : i32
      %389 = tpu.memref_slice %arg2[%388, %c0_i32_380] : memref<512x128xf32, #tpu.memory_space<any>> -> memref<1x128xf32, #tpu.memory_space<any>>
      %c5_i32_381 = arith.constant 5 : i32
      %c0_i32_382 = arith.constant 0 : i32
      %390 = tpu.memref_slice %arg5[%c0_i32_377, %c3_i32_378, %c5_i32_381, %c0_i32_382] : memref<2x5x8x128xf32, #tpu.memory_space<vmem>> -> memref<1x1x1x128xf32, #tpu.memory_space<vmem>>
      %391 = tpu.memref_squeeze %390 : memref<1x1x1x128xf32, #tpu.memory_space<vmem>> -> memref<1x128xf32, #tpu.memory_space<vmem>>
      %392 = tpu.memref_slice %arg6[%c0_i32_379] : memref<2x!tpu.dma_semaphore, #tpu.memory_space<semaphore_mem>> -> memref<1x!tpu.dma_semaphore, #tpu.memory_space<semaphore_mem>>
      %393 = tpu.memref_squeeze %392 : memref<1x!tpu.dma_semaphore, #tpu.memory_space<semaphore_mem>> -> memref<!tpu.dma_semaphore, #tpu.memory_space<semaphore_mem>>
      tpu.enqueue_dma source(%389 : memref<1x128xf32, #tpu.memory_space<any>>) target(%391 : memref<1x128xf32, #tpu.memory_space<vmem>>) target_semaphore(%393 : memref<!tpu.dma_semaphore, #tpu.memory_space<semaphore_mem>>)
      %c29 = arith.constant 29 : index
      %394 = memref.load %arg1[%c29] : memref<320xi32, #tpu.memory_space<smem>>
      %c0_i32_383 = arith.constant 0 : i32
      %c4_i32_384 = arith.constant 4 : i32
      %c0_i32_385 = arith.constant 0 : i32
      %c0_i32_386 = arith.constant 0 : i32
      %395 = tpu.memref_slice %arg2[%394, %c0_i32_386] : memref<512x128xf32, #tpu.memory_space<any>> -> memref<1x128xf32, #tpu.memory_space<any>>
      %c5_i32_387 = arith.constant 5 : i32
      %c0_i32_388 = arith.constant 0 : i32
      %396 = tpu.memref_slice %arg5[%c0_i32_383, %c4_i32_384, %c5_i32_387, %c0_i32_388] : memref<2x5x8x128xf32, #tpu.memory_space<vmem>> -> memref<1x1x1x128xf32, #tpu.memory_space<vmem>>
      %397 = tpu.memref_squeeze %396 : memref<1x1x1x128xf32, #tpu.memory_space<vmem>> -> memref<1x128xf32, #tpu.memory_space<vmem>>
      %398 = tpu.memref_slice %arg6[%c0_i32_385] : memref<2x!tpu.dma_semaphore, #tpu.memory_space<semaphore_mem>> -> memref<1x!tpu.dma_semaphore, #tpu.memory_space<semaphore_mem>>
      %399 = tpu.memref_squeeze %398 : memref<1x!tpu.dma_semaphore, #tpu.memory_space<semaphore_mem>> -> memref<!tpu.dma_semaphore, #tpu.memory_space<semaphore_mem>>
      tpu.enqueue_dma source(%395 : memref<1x128xf32, #tpu.memory_space<any>>) target(%397 : memref<1x128xf32, #tpu.memory_space<vmem>>) target_semaphore(%399 : memref<!tpu.dma_semaphore, #tpu.memory_space<semaphore_mem>>)
      %c30 = arith.constant 30 : index
      %400 = memref.load %arg1[%c30] : memref<320xi32, #tpu.memory_space<smem>>
      %c0_i32_389 = arith.constant 0 : i32
      %c0_i32_390 = arith.constant 0 : i32
      %c0_i32_391 = arith.constant 0 : i32
      %c0_i32_392 = arith.constant 0 : i32
      %401 = tpu.memref_slice %arg2[%400, %c0_i32_392] : memref<512x128xf32, #tpu.memory_space<any>> -> memref<1x128xf32, #tpu.memory_space<any>>
      %c6_i32 = arith.constant 6 : i32
      %c0_i32_393 = arith.constant 0 : i32
      %402 = tpu.memref_slice %arg5[%c0_i32_389, %c0_i32_390, %c6_i32, %c0_i32_393] : memref<2x5x8x128xf32, #tpu.memory_space<vmem>> -> memref<1x1x1x128xf32, #tpu.memory_space<vmem>>
      %403 = tpu.memref_squeeze %402 : memref<1x1x1x128xf32, #tpu.memory_space<vmem>> -> memref<1x128xf32, #tpu.memory_space<vmem>>
      %404 = tpu.memref_slice %arg6[%c0_i32_391] : memref<2x!tpu.dma_semaphore, #tpu.memory_space<semaphore_mem>> -> memref<1x!tpu.dma_semaphore, #tpu.memory_space<semaphore_mem>>
      %405 = tpu.memref_squeeze %404 : memref<1x!tpu.dma_semaphore, #tpu.memory_space<semaphore_mem>> -> memref<!tpu.dma_semaphore, #tpu.memory_space<semaphore_mem>>
      tpu.enqueue_dma source(%401 : memref<1x128xf32, #tpu.memory_space<any>>) target(%403 : memref<1x128xf32, #tpu.memory_space<vmem>>) target_semaphore(%405 : memref<!tpu.dma_semaphore, #tpu.memory_space<semaphore_mem>>)
      %c31 = arith.constant 31 : index
      %406 = memref.load %arg1[%c31] : memref<320xi32, #tpu.memory_space<smem>>
      %c0_i32_394 = arith.constant 0 : i32
      %c1_i32_395 = arith.constant 1 : i32
      %c0_i32_396 = arith.constant 0 : i32
      %c0_i32_397 = arith.constant 0 : i32
      %407 = tpu.memref_slice %arg2[%406, %c0_i32_397] : memref<512x128xf32, #tpu.memory_space<any>> -> memref<1x128xf32, #tpu.memory_space<any>>
      %c6_i32_398 = arith.constant 6 : i32
      %c0_i32_399 = arith.constant 0 : i32
      %408 = tpu.memref_slice %arg5[%c0_i32_394, %c1_i32_395, %c6_i32_398, %c0_i32_399] : memref<2x5x8x128xf32, #tpu.memory_space<vmem>> -> memref<1x1x1x128xf32, #tpu.memory_space<vmem>>
      %409 = tpu.memref_squeeze %408 : memref<1x1x1x128xf32, #tpu.memory_space<vmem>> -> memref<1x128xf32, #tpu.memory_space<vmem>>
      %410 = tpu.memref_slice %arg6[%c0_i32_396] : memref<2x!tpu.dma_semaphore, #tpu.memory_space<semaphore_mem>> -> memref<1x!tpu.dma_semaphore, #tpu.memory_space<semaphore_mem>>
      %411 = tpu.memref_squeeze %410 : memref<1x!tpu.dma_semaphore, #tpu.memory_space<semaphore_mem>> -> memref<!tpu.dma_semaphore, #tpu.memory_space<semaphore_mem>>
      tpu.enqueue_dma source(%407 : memref<1x128xf32, #tpu.memory_space<any>>) target(%409 : memref<1x128xf32, #tpu.memory_space<vmem>>) target_semaphore(%411 : memref<!tpu.dma_semaphore, #tpu.memory_space<semaphore_mem>>)
      %c32 = arith.constant 32 : index
      %412 = memref.load %arg1[%c32] : memref<320xi32, #tpu.memory_space<smem>>
      %c0_i32_400 = arith.constant 0 : i32
      %c2_i32_401 = arith.constant 2 : i32
      %c0_i32_402 = arith.constant 0 : i32
      %c0_i32_403 = arith.constant 0 : i32
      %413 = tpu.memref_slice %arg2[%412, %c0_i32_403] : memref<512x128xf32, #tpu.memory_space<any>> -> memref<1x128xf32, #tpu.memory_space<any>>
      %c6_i32_404 = arith.constant 6 : i32
      %c0_i32_405 = arith.constant 0 : i32
      %414 = tpu.memref_slice %arg5[%c0_i32_400, %c2_i32_401, %c6_i32_404, %c0_i32_405] : memref<2x5x8x128xf32, #tpu.memory_space<vmem>> -> memref<1x1x1x128xf32, #tpu.memory_space<vmem>>
      %415 = tpu.memref_squeeze %414 : memref<1x1x1x128xf32, #tpu.memory_space<vmem>> -> memref<1x128xf32, #tpu.memory_space<vmem>>
      %416 = tpu.memref_slice %arg6[%c0_i32_402] : memref<2x!tpu.dma_semaphore, #tpu.memory_space<semaphore_mem>> -> memref<1x!tpu.dma_semaphore, #tpu.memory_space<semaphore_mem>>
      %417 = tpu.memref_squeeze %416 : memref<1x!tpu.dma_semaphore, #tpu.memory_space<semaphore_mem>> -> memref<!tpu.dma_semaphore, #tpu.memory_space<semaphore_mem>>
      tpu.enqueue_dma source(%413 : memref<1x128xf32, #tpu.memory_space<any>>) target(%415 : memref<1x128xf32, #tpu.memory_space<vmem>>) target_semaphore(%417 : memref<!tpu.dma_semaphore, #tpu.memory_space<semaphore_mem>>)
      %c33 = arith.constant 33 : index
      %418 = memref.load %arg1[%c33] : memref<320xi32, #tpu.memory_space<smem>>
      %c0_i32_406 = arith.constant 0 : i32
      %c3_i32_407 = arith.constant 3 : i32
      %c0_i32_408 = arith.constant 0 : i32
      %c0_i32_409 = arith.constant 0 : i32
      %419 = tpu.memref_slice %arg2[%418, %c0_i32_409] : memref<512x128xf32, #tpu.memory_space<any>> -> memref<1x128xf32, #tpu.memory_space<any>>
      %c6_i32_410 = arith.constant 6 : i32
      %c0_i32_411 = arith.constant 0 : i32
      %420 = tpu.memref_slice %arg5[%c0_i32_406, %c3_i32_407, %c6_i32_410, %c0_i32_411] : memref<2x5x8x128xf32, #tpu.memory_space<vmem>> -> memref<1x1x1x128xf32, #tpu.memory_space<vmem>>
      %421 = tpu.memref_squeeze %420 : memref<1x1x1x128xf32, #tpu.memory_space<vmem>> -> memref<1x128xf32, #tpu.memory_space<vmem>>
      %422 = tpu.memref_slice %arg6[%c0_i32_408] : memref<2x!tpu.dma_semaphore, #tpu.memory_space<semaphore_mem>> -> memref<1x!tpu.dma_semaphore, #tpu.memory_space<semaphore_mem>>
      %423 = tpu.memref_squeeze %422 : memref<1x!tpu.dma_semaphore, #tpu.memory_space<semaphore_mem>> -> memref<!tpu.dma_semaphore, #tpu.memory_space<semaphore_mem>>
      tpu.enqueue_dma source(%419 : memref<1x128xf32, #tpu.memory_space<any>>) target(%421 : memref<1x128xf32, #tpu.memory_space<vmem>>) target_semaphore(%423 : memref<!tpu.dma_semaphore, #tpu.memory_space<semaphore_mem>>)
      %c34 = arith.constant 34 : index
      %424 = memref.load %arg1[%c34] : memref<320xi32, #tpu.memory_space<smem>>
      %c0_i32_412 = arith.constant 0 : i32
      %c4_i32_413 = arith.constant 4 : i32
      %c0_i32_414 = arith.constant 0 : i32
      %c0_i32_415 = arith.constant 0 : i32
      %425 = tpu.memref_slice %arg2[%424, %c0_i32_415] : memref<512x128xf32, #tpu.memory_space<any>> -> memref<1x128xf32, #tpu.memory_space<any>>
      %c6_i32_416 = arith.constant 6 : i32
      %c0_i32_417 = arith.constant 0 : i32
      %426 = tpu.memref_slice %arg5[%c0_i32_412, %c4_i32_413, %c6_i32_416, %c0_i32_417] : memref<2x5x8x128xf32, #tpu.memory_space<vmem>> -> memref<1x1x1x128xf32, #tpu.memory_space<vmem>>
      %427 = tpu.memref_squeeze %426 : memref<1x1x1x128xf32, #tpu.memory_space<vmem>> -> memref<1x128xf32, #tpu.memory_space<vmem>>
      %428 = tpu.memref_slice %arg6[%c0_i32_414] : memref<2x!tpu.dma_semaphore, #tpu.memory_space<semaphore_mem>> -> memref<1x!tpu.dma_semaphore, #tpu.memory_space<semaphore_mem>>
      %429 = tpu.memref_squeeze %428 : memref<1x!tpu.dma_semaphore, #tpu.memory_space<semaphore_mem>> -> memref<!tpu.dma_semaphore, #tpu.memory_space<semaphore_mem>>
      tpu.enqueue_dma source(%425 : memref<1x128xf32, #tpu.memory_space<any>>) target(%427 : memref<1x128xf32, #tpu.memory_space<vmem>>) target_semaphore(%429 : memref<!tpu.dma_semaphore, #tpu.memory_space<semaphore_mem>>)
      %c35 = arith.constant 35 : index
      %430 = memref.load %arg1[%c35] : memref<320xi32, #tpu.memory_space<smem>>
      %c0_i32_418 = arith.constant 0 : i32
      %c0_i32_419 = arith.constant 0 : i32
      %c0_i32_420 = arith.constant 0 : i32
      %c0_i32_421 = arith.constant 0 : i32
      %431 = tpu.memref_slice %arg2[%430, %c0_i32_421] : memref<512x128xf32, #tpu.memory_space<any>> -> memref<1x128xf32, #tpu.memory_space<any>>
      %c7_i32 = arith.constant 7 : i32
      %c0_i32_422 = arith.constant 0 : i32
      %432 = tpu.memref_slice %arg5[%c0_i32_418, %c0_i32_419, %c7_i32, %c0_i32_422] : memref<2x5x8x128xf32, #tpu.memory_space<vmem>> -> memref<1x1x1x128xf32, #tpu.memory_space<vmem>>
      %433 = tpu.memref_squeeze %432 : memref<1x1x1x128xf32, #tpu.memory_space<vmem>> -> memref<1x128xf32, #tpu.memory_space<vmem>>
      %434 = tpu.memref_slice %arg6[%c0_i32_420] : memref<2x!tpu.dma_semaphore, #tpu.memory_space<semaphore_mem>> -> memref<1x!tpu.dma_semaphore, #tpu.memory_space<semaphore_mem>>
      %435 = tpu.memref_squeeze %434 : memref<1x!tpu.dma_semaphore, #tpu.memory_space<semaphore_mem>> -> memref<!tpu.dma_semaphore, #tpu.memory_space<semaphore_mem>>
      tpu.enqueue_dma source(%431 : memref<1x128xf32, #tpu.memory_space<any>>) target(%433 : memref<1x128xf32, #tpu.memory_space<vmem>>) target_semaphore(%435 : memref<!tpu.dma_semaphore, #tpu.memory_space<semaphore_mem>>)
      %c36 = arith.constant 36 : index
      %436 = memref.load %arg1[%c36] : memref<320xi32, #tpu.memory_space<smem>>
      %c0_i32_423 = arith.constant 0 : i32
      %c1_i32_424 = arith.constant 1 : i32
      %c0_i32_425 = arith.constant 0 : i32
      %c0_i32_426 = arith.constant 0 : i32
      %437 = tpu.memref_slice %arg2[%436, %c0_i32_426] : memref<512x128xf32, #tpu.memory_space<any>> -> memref<1x128xf32, #tpu.memory_space<any>>
      %c7_i32_427 = arith.constant 7 : i32
      %c0_i32_428 = arith.constant 0 : i32
      %438 = tpu.memref_slice %arg5[%c0_i32_423, %c1_i32_424, %c7_i32_427, %c0_i32_428] : memref<2x5x8x128xf32, #tpu.memory_space<vmem>> -> memref<1x1x1x128xf32, #tpu.memory_space<vmem>>
      %439 = tpu.memref_squeeze %438 : memref<1x1x1x128xf32, #tpu.memory_space<vmem>> -> memref<1x128xf32, #tpu.memory_space<vmem>>
      %440 = tpu.memref_slice %arg6[%c0_i32_425] : memref<2x!tpu.dma_semaphore, #tpu.memory_space<semaphore_mem>> -> memref<1x!tpu.dma_semaphore, #tpu.memory_space<semaphore_mem>>
      %441 = tpu.memref_squeeze %440 : memref<1x!tpu.dma_semaphore, #tpu.memory_space<semaphore_mem>> -> memref<!tpu.dma_semaphore, #tpu.memory_space<semaphore_mem>>
      tpu.enqueue_dma source(%437 : memref<1x128xf32, #tpu.memory_space<any>>) target(%439 : memref<1x128xf32, #tpu.memory_space<vmem>>) target_semaphore(%441 : memref<!tpu.dma_semaphore, #tpu.memory_space<semaphore_mem>>)
      %c37 = arith.constant 37 : index
      %442 = memref.load %arg1[%c37] : memref<320xi32, #tpu.memory_space<smem>>
      %c0_i32_429 = arith.constant 0 : i32
      %c2_i32_430 = arith.constant 2 : i32
      %c0_i32_431 = arith.constant 0 : i32
      %c0_i32_432 = arith.constant 0 : i32
      %443 = tpu.memref_slice %arg2[%442, %c0_i32_432] : memref<512x128xf32, #tpu.memory_space<any>> -> memref<1x128xf32, #tpu.memory_space<any>>
      %c7_i32_433 = arith.constant 7 : i32
      %c0_i32_434 = arith.constant 0 : i32
      %444 = tpu.memref_slice %arg5[%c0_i32_429, %c2_i32_430, %c7_i32_433, %c0_i32_434] : memref<2x5x8x128xf32, #tpu.memory_space<vmem>> -> memref<1x1x1x128xf32, #tpu.memory_space<vmem>>
      %445 = tpu.memref_squeeze %444 : memref<1x1x1x128xf32, #tpu.memory_space<vmem>> -> memref<1x128xf32, #tpu.memory_space<vmem>>
      %446 = tpu.memref_slice %arg6[%c0_i32_431] : memref<2x!tpu.dma_semaphore, #tpu.memory_space<semaphore_mem>> -> memref<1x!tpu.dma_semaphore, #tpu.memory_space<semaphore_mem>>
      %447 = tpu.memref_squeeze %446 : memref<1x!tpu.dma_semaphore, #tpu.memory_space<semaphore_mem>> -> memref<!tpu.dma_semaphore, #tpu.memory_space<semaphore_mem>>
      tpu.enqueue_dma source(%443 : memref<1x128xf32, #tpu.memory_space<any>>) target(%445 : memref<1x128xf32, #tpu.memory_space<vmem>>) target_semaphore(%447 : memref<!tpu.dma_semaphore, #tpu.memory_space<semaphore_mem>>)
      %c38 = arith.constant 38 : index
      %448 = memref.load %arg1[%c38] : memref<320xi32, #tpu.memory_space<smem>>
      %c0_i32_435 = arith.constant 0 : i32
      %c3_i32_436 = arith.constant 3 : i32
      %c0_i32_437 = arith.constant 0 : i32
      %c0_i32_438 = arith.constant 0 : i32
      %449 = tpu.memref_slice %arg2[%448, %c0_i32_438] : memref<512x128xf32, #tpu.memory_space<any>> -> memref<1x128xf32, #tpu.memory_space<any>>
      %c7_i32_439 = arith.constant 7 : i32
      %c0_i32_440 = arith.constant 0 : i32
      %450 = tpu.memref_slice %arg5[%c0_i32_435, %c3_i32_436, %c7_i32_439, %c0_i32_440] : memref<2x5x8x128xf32, #tpu.memory_space<vmem>> -> memref<1x1x1x128xf32, #tpu.memory_space<vmem>>
      %451 = tpu.memref_squeeze %450 : memref<1x1x1x128xf32, #tpu.memory_space<vmem>> -> memref<1x128xf32, #tpu.memory_space<vmem>>
      %452 = tpu.memref_slice %arg6[%c0_i32_437] : memref<2x!tpu.dma_semaphore, #tpu.memory_space<semaphore_mem>> -> memref<1x!tpu.dma_semaphore, #tpu.memory_space<semaphore_mem>>
      %453 = tpu.memref_squeeze %452 : memref<1x!tpu.dma_semaphore, #tpu.memory_space<semaphore_mem>> -> memref<!tpu.dma_semaphore, #tpu.memory_space<semaphore_mem>>
      tpu.enqueue_dma source(%449 : memref<1x128xf32, #tpu.memory_space<any>>) target(%451 : memref<1x128xf32, #tpu.memory_space<vmem>>) target_semaphore(%453 : memref<!tpu.dma_semaphore, #tpu.memory_space<semaphore_mem>>)
      %c39 = arith.constant 39 : index
      %454 = memref.load %arg1[%c39] : memref<320xi32, #tpu.memory_space<smem>>
      %c0_i32_441 = arith.constant 0 : i32
      %c4_i32_442 = arith.constant 4 : i32
      %c0_i32_443 = arith.constant 0 : i32
      %c0_i32_444 = arith.constant 0 : i32
      %455 = tpu.memref_slice %arg2[%454, %c0_i32_444] : memref<512x128xf32, #tpu.memory_space<any>> -> memref<1x128xf32, #tpu.memory_space<any>>
      %c7_i32_445 = arith.constant 7 : i32
      %c0_i32_446 = arith.constant 0 : i32
      %456 = tpu.memref_slice %arg5[%c0_i32_441, %c4_i32_442, %c7_i32_445, %c0_i32_446] : memref<2x5x8x128xf32, #tpu.memory_space<vmem>> -> memref<1x1x1x128xf32, #tpu.memory_space<vmem>>
      %457 = tpu.memref_squeeze %456 : memref<1x1x1x128xf32, #tpu.memory_space<vmem>> -> memref<1x128xf32, #tpu.memory_space<vmem>>
      %458 = tpu.memref_slice %arg6[%c0_i32_443] : memref<2x!tpu.dma_semaphore, #tpu.memory_space<semaphore_mem>> -> memref<1x!tpu.dma_semaphore, #tpu.memory_space<semaphore_mem>>
      %459 = tpu.memref_squeeze %458 : memref<1x!tpu.dma_semaphore, #tpu.memory_space<semaphore_mem>> -> memref<!tpu.dma_semaphore, #tpu.memory_space<semaphore_mem>>
      tpu.enqueue_dma source(%455 : memref<1x128xf32, #tpu.memory_space<any>>) target(%457 : memref<1x128xf32, #tpu.memory_space<vmem>>) target_semaphore(%459 : memref<!tpu.dma_semaphore, #tpu.memory_space<semaphore_mem>>)
    } else {
    }
    %c1_i32 = arith.constant 1 : i32
    %4 = arith.addi %arg0, %c1_i32 : i32
    %c8_i32 = arith.constant 8 : i32
    %5 = arith.cmpi slt, %4, %c8_i32 : i32
    %6 = arith.extui %5 : i1 to i32
    %c0_i32_1 = arith.constant 0 : i32
    %7 = arith.cmpi ne, %6, %c0_i32_1 : i32
    scf.if %7 {
      %c1_i32_211 = arith.constant 1 : i32
      %220 = arith.addi %arg0, %c1_i32_211 : i32
      %c1_i32_212 = arith.constant 1 : i32
      %221 = arith.subi %c1_i32_212, %0 : i32
      %c40_i32 = arith.constant 40 : i32
      %222 = arith.muli %220, %c40_i32 : i32
      %c0_i32_213 = arith.constant 0 : i32
      %223 = arith.addi %222, %c0_i32_213 : i32
      %c0_i32_214 = arith.constant 0 : i32
      %224 = arith.addi %223, %c0_i32_214 : i32
      %225 = arith.index_cast %224 : i32 to index
      %226 = memref.load %arg1[%225] : memref<320xi32, #tpu.memory_space<smem>>
      %c0_i32_215 = arith.constant 0 : i32
      %c0_i32_216 = arith.constant 0 : i32
      %227 = tpu.memref_slice %arg2[%226, %c0_i32_216] : memref<512x128xf32, #tpu.memory_space<any>> -> memref<1x128xf32, #tpu.memory_space<any>>
      %c0_i32_217 = arith.constant 0 : i32
      %c0_i32_218 = arith.constant 0 : i32
      %228 = tpu.memref_slice %arg5[%221, %c0_i32_215, %c0_i32_217, %c0_i32_218] : memref<2x5x8x128xf32, #tpu.memory_space<vmem>> -> memref<1x1x1x128xf32, #tpu.memory_space<vmem>>
      %229 = tpu.memref_squeeze %228 : memref<1x1x1x128xf32, #tpu.memory_space<vmem>> -> memref<1x128xf32, #tpu.memory_space<vmem>>
      %230 = tpu.memref_slice %arg6[%221] : memref<2x!tpu.dma_semaphore, #tpu.memory_space<semaphore_mem>> -> memref<1x!tpu.dma_semaphore, #tpu.memory_space<semaphore_mem>>
      %231 = tpu.memref_squeeze %230 : memref<1x!tpu.dma_semaphore, #tpu.memory_space<semaphore_mem>> -> memref<!tpu.dma_semaphore, #tpu.memory_space<semaphore_mem>>
      tpu.enqueue_dma source(%227 : memref<1x128xf32, #tpu.memory_space<any>>) target(%229 : memref<1x128xf32, #tpu.memory_space<vmem>>) target_semaphore(%231 : memref<!tpu.dma_semaphore, #tpu.memory_space<semaphore_mem>>)
      %c0_i32_219 = arith.constant 0 : i32
      %232 = arith.addi %222, %c0_i32_219 : i32
      %c1_i32_220 = arith.constant 1 : i32
      %233 = arith.addi %232, %c1_i32_220 : i32
      %234 = arith.index_cast %233 : i32 to index
      %235 = memref.load %arg1[%234] : memref<320xi32, #tpu.memory_space<smem>>
      %c1_i32_221 = arith.constant 1 : i32
      %c0_i32_222 = arith.constant 0 : i32
      %236 = tpu.memref_slice %arg2[%235, %c0_i32_222] : memref<512x128xf32, #tpu.memory_space<any>> -> memref<1x128xf32, #tpu.memory_space<any>>
      %c0_i32_223 = arith.constant 0 : i32
      %c0_i32_224 = arith.constant 0 : i32
      %237 = tpu.memref_slice %arg5[%221, %c1_i32_221, %c0_i32_223, %c0_i32_224] : memref<2x5x8x128xf32, #tpu.memory_space<vmem>> -> memref<1x1x1x128xf32, #tpu.memory_space<vmem>>
      %238 = tpu.memref_squeeze %237 : memref<1x1x1x128xf32, #tpu.memory_space<vmem>> -> memref<1x128xf32, #tpu.memory_space<vmem>>
      %239 = tpu.memref_slice %arg6[%221] : memref<2x!tpu.dma_semaphore, #tpu.memory_space<semaphore_mem>> -> memref<1x!tpu.dma_semaphore, #tpu.memory_space<semaphore_mem>>
      %240 = tpu.memref_squeeze %239 : memref<1x!tpu.dma_semaphore, #tpu.memory_space<semaphore_mem>> -> memref<!tpu.dma_semaphore, #tpu.memory_space<semaphore_mem>>
      tpu.enqueue_dma source(%236 : memref<1x128xf32, #tpu.memory_space<any>>) target(%238 : memref<1x128xf32, #tpu.memory_space<vmem>>) target_semaphore(%240 : memref<!tpu.dma_semaphore, #tpu.memory_space<semaphore_mem>>)
      %c0_i32_225 = arith.constant 0 : i32
      %241 = arith.addi %222, %c0_i32_225 : i32
      %c2_i32_226 = arith.constant 2 : i32
      %242 = arith.addi %241, %c2_i32_226 : i32
      %243 = arith.index_cast %242 : i32 to index
      %244 = memref.load %arg1[%243] : memref<320xi32, #tpu.memory_space<smem>>
      %c2_i32_227 = arith.constant 2 : i32
      %c0_i32_228 = arith.constant 0 : i32
      %245 = tpu.memref_slice %arg2[%244, %c0_i32_228] : memref<512x128xf32, #tpu.memory_space<any>> -> memref<1x128xf32, #tpu.memory_space<any>>
      %c0_i32_229 = arith.constant 0 : i32
      %c0_i32_230 = arith.constant 0 : i32
      %246 = tpu.memref_slice %arg5[%221, %c2_i32_227, %c0_i32_229, %c0_i32_230] : memref<2x5x8x128xf32, #tpu.memory_space<vmem>> -> memref<1x1x1x128xf32, #tpu.memory_space<vmem>>
      %247 = tpu.memref_squeeze %246 : memref<1x1x1x128xf32, #tpu.memory_space<vmem>> -> memref<1x128xf32, #tpu.memory_space<vmem>>
      %248 = tpu.memref_slice %arg6[%221] : memref<2x!tpu.dma_semaphore, #tpu.memory_space<semaphore_mem>> -> memref<1x!tpu.dma_semaphore, #tpu.memory_space<semaphore_mem>>
      %249 = tpu.memref_squeeze %248 : memref<1x!tpu.dma_semaphore, #tpu.memory_space<semaphore_mem>> -> memref<!tpu.dma_semaphore, #tpu.memory_space<semaphore_mem>>
      tpu.enqueue_dma source(%245 : memref<1x128xf32, #tpu.memory_space<any>>) target(%247 : memref<1x128xf32, #tpu.memory_space<vmem>>) target_semaphore(%249 : memref<!tpu.dma_semaphore, #tpu.memory_space<semaphore_mem>>)
      %c0_i32_231 = arith.constant 0 : i32
      %250 = arith.addi %222, %c0_i32_231 : i32
      %c3_i32 = arith.constant 3 : i32
      %251 = arith.addi %250, %c3_i32 : i32
      %252 = arith.index_cast %251 : i32 to index
      %253 = memref.load %arg1[%252] : memref<320xi32, #tpu.memory_space<smem>>
      %c3_i32_232 = arith.constant 3 : i32
      %c0_i32_233 = arith.constant 0 : i32
      %254 = tpu.memref_slice %arg2[%253, %c0_i32_233] : memref<512x128xf32, #tpu.memory_space<any>> -> memref<1x128xf32, #tpu.memory_space<any>>
      %c0_i32_234 = arith.constant 0 : i32
      %c0_i32_235 = arith.constant 0 : i32
      %255 = tpu.memref_slice %arg5[%221, %c3_i32_232, %c0_i32_234, %c0_i32_235] : memref<2x5x8x128xf32, #tpu.memory_space<vmem>> -> memref<1x1x1x128xf32, #tpu.memory_space<vmem>>
      %256 = tpu.memref_squeeze %255 : memref<1x1x1x128xf32, #tpu.memory_space<vmem>> -> memref<1x128xf32, #tpu.memory_space<vmem>>
      %257 = tpu.memref_slice %arg6[%221] : memref<2x!tpu.dma_semaphore, #tpu.memory_space<semaphore_mem>> -> memref<1x!tpu.dma_semaphore, #tpu.memory_space<semaphore_mem>>
      %258 = tpu.memref_squeeze %257 : memref<1x!tpu.dma_semaphore, #tpu.memory_space<semaphore_mem>> -> memref<!tpu.dma_semaphore, #tpu.memory_space<semaphore_mem>>
      tpu.enqueue_dma source(%254 : memref<1x128xf32, #tpu.memory_space<any>>) target(%256 : memref<1x128xf32, #tpu.memory_space<vmem>>) target_semaphore(%258 : memref<!tpu.dma_semaphore, #tpu.memory_space<semaphore_mem>>)
      %c0_i32_236 = arith.constant 0 : i32
      %259 = arith.addi %222, %c0_i32_236 : i32
      %c4_i32 = arith.constant 4 : i32
      %260 = arith.addi %259, %c4_i32 : i32
      %261 = arith.index_cast %260 : i32 to index
      %262 = memref.load %arg1[%261] : memref<320xi32, #tpu.memory_space<smem>>
      %c4_i32_237 = arith.constant 4 : i32
      %c0_i32_238 = arith.constant 0 : i32
      %263 = tpu.memref_slice %arg2[%262, %c0_i32_238] : memref<512x128xf32, #tpu.memory_space<any>> -> memref<1x128xf32, #tpu.memory_space<any>>
      %c0_i32_239 = arith.constant 0 : i32
      %c0_i32_240 = arith.constant 0 : i32
      %264 = tpu.memref_slice %arg5[%221, %c4_i32_237, %c0_i32_239, %c0_i32_240] : memref<2x5x8x128xf32, #tpu.memory_space<vmem>> -> memref<1x1x1x128xf32, #tpu.memory_space<vmem>>
      %265 = tpu.memref_squeeze %264 : memref<1x1x1x128xf32, #tpu.memory_space<vmem>> -> memref<1x128xf32, #tpu.memory_space<vmem>>
      %266 = tpu.memref_slice %arg6[%221] : memref<2x!tpu.dma_semaphore, #tpu.memory_space<semaphore_mem>> -> memref<1x!tpu.dma_semaphore, #tpu.memory_space<semaphore_mem>>
      %267 = tpu.memref_squeeze %266 : memref<1x!tpu.dma_semaphore, #tpu.memory_space<semaphore_mem>> -> memref<!tpu.dma_semaphore, #tpu.memory_space<semaphore_mem>>
      tpu.enqueue_dma source(%263 : memref<1x128xf32, #tpu.memory_space<any>>) target(%265 : memref<1x128xf32, #tpu.memory_space<vmem>>) target_semaphore(%267 : memref<!tpu.dma_semaphore, #tpu.memory_space<semaphore_mem>>)
      %c5_i32 = arith.constant 5 : i32
      %268 = arith.addi %222, %c5_i32 : i32
      %c0_i32_241 = arith.constant 0 : i32
      %269 = arith.addi %268, %c0_i32_241 : i32
      %270 = arith.index_cast %269 : i32 to index
      %271 = memref.load %arg1[%270] : memref<320xi32, #tpu.memory_space<smem>>
      %c0_i32_242 = arith.constant 0 : i32
      %c0_i32_243 = arith.constant 0 : i32
      %272 = tpu.memref_slice %arg2[%271, %c0_i32_243] : memref<512x128xf32, #tpu.memory_space<any>> -> memref<1x128xf32, #tpu.memory_space<any>>
      %c1_i32_244 = arith.constant 1 : i32
      %c0_i32_245 = arith.constant 0 : i32
      %273 = tpu.memref_slice %arg5[%221, %c0_i32_242, %c1_i32_244, %c0_i32_245] : memref<2x5x8x128xf32, #tpu.memory_space<vmem>> -> memref<1x1x1x128xf32, #tpu.memory_space<vmem>>
      %274 = tpu.memref_squeeze %273 : memref<1x1x1x128xf32, #tpu.memory_space<vmem>> -> memref<1x128xf32, #tpu.memory_space<vmem>>
      %275 = tpu.memref_slice %arg6[%221] : memref<2x!tpu.dma_semaphore, #tpu.memory_space<semaphore_mem>> -> memref<1x!tpu.dma_semaphore, #tpu.memory_space<semaphore_mem>>
      %276 = tpu.memref_squeeze %275 : memref<1x!tpu.dma_semaphore, #tpu.memory_space<semaphore_mem>> -> memref<!tpu.dma_semaphore, #tpu.memory_space<semaphore_mem>>
      tpu.enqueue_dma source(%272 : memref<1x128xf32, #tpu.memory_space<any>>) target(%274 : memref<1x128xf32, #tpu.memory_space<vmem>>) target_semaphore(%276 : memref<!tpu.dma_semaphore, #tpu.memory_space<semaphore_mem>>)
      %c5_i32_246 = arith.constant 5 : i32
      %277 = arith.addi %222, %c5_i32_246 : i32
      %c1_i32_247 = arith.constant 1 : i32
      %278 = arith.addi %277, %c1_i32_247 : i32
      %279 = arith.index_cast %278 : i32 to index
      %280 = memref.load %arg1[%279] : memref<320xi32, #tpu.memory_space<smem>>
      %c1_i32_248 = arith.constant 1 : i32
      %c0_i32_249 = arith.constant 0 : i32
      %281 = tpu.memref_slice %arg2[%280, %c0_i32_249] : memref<512x128xf32, #tpu.memory_space<any>> -> memref<1x128xf32, #tpu.memory_space<any>>
      %c1_i32_250 = arith.constant 1 : i32
      %c0_i32_251 = arith.constant 0 : i32
      %282 = tpu.memref_slice %arg5[%221, %c1_i32_248, %c1_i32_250, %c0_i32_251] : memref<2x5x8x128xf32, #tpu.memory_space<vmem>> -> memref<1x1x1x128xf32, #tpu.memory_space<vmem>>
      %283 = tpu.memref_squeeze %282 : memref<1x1x1x128xf32, #tpu.memory_space<vmem>> -> memref<1x128xf32, #tpu.memory_space<vmem>>
      %284 = tpu.memref_slice %arg6[%221] : memref<2x!tpu.dma_semaphore, #tpu.memory_space<semaphore_mem>> -> memref<1x!tpu.dma_semaphore, #tpu.memory_space<semaphore_mem>>
      %285 = tpu.memref_squeeze %284 : memref<1x!tpu.dma_semaphore, #tpu.memory_space<semaphore_mem>> -> memref<!tpu.dma_semaphore, #tpu.memory_space<semaphore_mem>>
      tpu.enqueue_dma source(%281 : memref<1x128xf32, #tpu.memory_space<any>>) target(%283 : memref<1x128xf32, #tpu.memory_space<vmem>>) target_semaphore(%285 : memref<!tpu.dma_semaphore, #tpu.memory_space<semaphore_mem>>)
      %c5_i32_252 = arith.constant 5 : i32
      %286 = arith.addi %222, %c5_i32_252 : i32
      %c2_i32_253 = arith.constant 2 : i32
      %287 = arith.addi %286, %c2_i32_253 : i32
      %288 = arith.index_cast %287 : i32 to index
      %289 = memref.load %arg1[%288] : memref<320xi32, #tpu.memory_space<smem>>
      %c2_i32_254 = arith.constant 2 : i32
      %c0_i32_255 = arith.constant 0 : i32
      %290 = tpu.memref_slice %arg2[%289, %c0_i32_255] : memref<512x128xf32, #tpu.memory_space<any>> -> memref<1x128xf32, #tpu.memory_space<any>>
      %c1_i32_256 = arith.constant 1 : i32
      %c0_i32_257 = arith.constant 0 : i32
      %291 = tpu.memref_slice %arg5[%221, %c2_i32_254, %c1_i32_256, %c0_i32_257] : memref<2x5x8x128xf32, #tpu.memory_space<vmem>> -> memref<1x1x1x128xf32, #tpu.memory_space<vmem>>
      %292 = tpu.memref_squeeze %291 : memref<1x1x1x128xf32, #tpu.memory_space<vmem>> -> memref<1x128xf32, #tpu.memory_space<vmem>>
      %293 = tpu.memref_slice %arg6[%221] : memref<2x!tpu.dma_semaphore, #tpu.memory_space<semaphore_mem>> -> memref<1x!tpu.dma_semaphore, #tpu.memory_space<semaphore_mem>>
      %294 = tpu.memref_squeeze %293 : memref<1x!tpu.dma_semaphore, #tpu.memory_space<semaphore_mem>> -> memref<!tpu.dma_semaphore, #tpu.memory_space<semaphore_mem>>
      tpu.enqueue_dma source(%290 : memref<1x128xf32, #tpu.memory_space<any>>) target(%292 : memref<1x128xf32, #tpu.memory_space<vmem>>) target_semaphore(%294 : memref<!tpu.dma_semaphore, #tpu.memory_space<semaphore_mem>>)
      %c5_i32_258 = arith.constant 5 : i32
      %295 = arith.addi %222, %c5_i32_258 : i32
      %c3_i32_259 = arith.constant 3 : i32
      %296 = arith.addi %295, %c3_i32_259 : i32
      %297 = arith.index_cast %296 : i32 to index
      %298 = memref.load %arg1[%297] : memref<320xi32, #tpu.memory_space<smem>>
      %c3_i32_260 = arith.constant 3 : i32
      %c0_i32_261 = arith.constant 0 : i32
      %299 = tpu.memref_slice %arg2[%298, %c0_i32_261] : memref<512x128xf32, #tpu.memory_space<any>> -> memref<1x128xf32, #tpu.memory_space<any>>
      %c1_i32_262 = arith.constant 1 : i32
      %c0_i32_263 = arith.constant 0 : i32
      %300 = tpu.memref_slice %arg5[%221, %c3_i32_260, %c1_i32_262, %c0_i32_263] : memref<2x5x8x128xf32, #tpu.memory_space<vmem>> -> memref<1x1x1x128xf32, #tpu.memory_space<vmem>>
      %301 = tpu.memref_squeeze %300 : memref<1x1x1x128xf32, #tpu.memory_space<vmem>> -> memref<1x128xf32, #tpu.memory_space<vmem>>
      %302 = tpu.memref_slice %arg6[%221] : memref<2x!tpu.dma_semaphore, #tpu.memory_space<semaphore_mem>> -> memref<1x!tpu.dma_semaphore, #tpu.memory_space<semaphore_mem>>
      %303 = tpu.memref_squeeze %302 : memref<1x!tpu.dma_semaphore, #tpu.memory_space<semaphore_mem>> -> memref<!tpu.dma_semaphore, #tpu.memory_space<semaphore_mem>>
      tpu.enqueue_dma source(%299 : memref<1x128xf32, #tpu.memory_space<any>>) target(%301 : memref<1x128xf32, #tpu.memory_space<vmem>>) target_semaphore(%303 : memref<!tpu.dma_semaphore, #tpu.memory_space<semaphore_mem>>)
      %c5_i32_264 = arith.constant 5 : i32
      %304 = arith.addi %222, %c5_i32_264 : i32
      %c4_i32_265 = arith.constant 4 : i32
      %305 = arith.addi %304, %c4_i32_265 : i32
      %306 = arith.index_cast %305 : i32 to index
      %307 = memref.load %arg1[%306] : memref<320xi32, #tpu.memory_space<smem>>
      %c4_i32_266 = arith.constant 4 : i32
      %c0_i32_267 = arith.constant 0 : i32
      %308 = tpu.memref_slice %arg2[%307, %c0_i32_267] : memref<512x128xf32, #tpu.memory_space<any>> -> memref<1x128xf32, #tpu.memory_space<any>>
      %c1_i32_268 = arith.constant 1 : i32
      %c0_i32_269 = arith.constant 0 : i32
      %309 = tpu.memref_slice %arg5[%221, %c4_i32_266, %c1_i32_268, %c0_i32_269] : memref<2x5x8x128xf32, #tpu.memory_space<vmem>> -> memref<1x1x1x128xf32, #tpu.memory_space<vmem>>
      %310 = tpu.memref_squeeze %309 : memref<1x1x1x128xf32, #tpu.memory_space<vmem>> -> memref<1x128xf32, #tpu.memory_space<vmem>>
      %311 = tpu.memref_slice %arg6[%221] : memref<2x!tpu.dma_semaphore, #tpu.memory_space<semaphore_mem>> -> memref<1x!tpu.dma_semaphore, #tpu.memory_space<semaphore_mem>>
      %312 = tpu.memref_squeeze %311 : memref<1x!tpu.dma_semaphore, #tpu.memory_space<semaphore_mem>> -> memref<!tpu.dma_semaphore, #tpu.memory_space<semaphore_mem>>
      tpu.enqueue_dma source(%308 : memref<1x128xf32, #tpu.memory_space<any>>) target(%310 : memref<1x128xf32, #tpu.memory_space<vmem>>) target_semaphore(%312 : memref<!tpu.dma_semaphore, #tpu.memory_space<semaphore_mem>>)
      %c10_i32 = arith.constant 10 : i32
      %313 = arith.addi %222, %c10_i32 : i32
      %c0_i32_270 = arith.constant 0 : i32
      %314 = arith.addi %313, %c0_i32_270 : i32
      %315 = arith.index_cast %314 : i32 to index
      %316 = memref.load %arg1[%315] : memref<320xi32, #tpu.memory_space<smem>>
      %c0_i32_271 = arith.constant 0 : i32
      %c0_i32_272 = arith.constant 0 : i32
      %317 = tpu.memref_slice %arg2[%316, %c0_i32_272] : memref<512x128xf32, #tpu.memory_space<any>> -> memref<1x128xf32, #tpu.memory_space<any>>
      %c2_i32_273 = arith.constant 2 : i32
      %c0_i32_274 = arith.constant 0 : i32
      %318 = tpu.memref_slice %arg5[%221, %c0_i32_271, %c2_i32_273, %c0_i32_274] : memref<2x5x8x128xf32, #tpu.memory_space<vmem>> -> memref<1x1x1x128xf32, #tpu.memory_space<vmem>>
      %319 = tpu.memref_squeeze %318 : memref<1x1x1x128xf32, #tpu.memory_space<vmem>> -> memref<1x128xf32, #tpu.memory_space<vmem>>
      %320 = tpu.memref_slice %arg6[%221] : memref<2x!tpu.dma_semaphore, #tpu.memory_space<semaphore_mem>> -> memref<1x!tpu.dma_semaphore, #tpu.memory_space<semaphore_mem>>
      %321 = tpu.memref_squeeze %320 : memref<1x!tpu.dma_semaphore, #tpu.memory_space<semaphore_mem>> -> memref<!tpu.dma_semaphore, #tpu.memory_space<semaphore_mem>>
      tpu.enqueue_dma source(%317 : memref<1x128xf32, #tpu.memory_space<any>>) target(%319 : memref<1x128xf32, #tpu.memory_space<vmem>>) target_semaphore(%321 : memref<!tpu.dma_semaphore, #tpu.memory_space<semaphore_mem>>)
      %c10_i32_275 = arith.constant 10 : i32
      %322 = arith.addi %222, %c10_i32_275 : i32
      %c1_i32_276 = arith.constant 1 : i32
      %323 = arith.addi %322, %c1_i32_276 : i32
      %324 = arith.index_cast %323 : i32 to index
      %325 = memref.load %arg1[%324] : memref<320xi32, #tpu.memory_space<smem>>
      %c1_i32_277 = arith.constant 1 : i32
      %c0_i32_278 = arith.constant 0 : i32
      %326 = tpu.memref_slice %arg2[%325, %c0_i32_278] : memref<512x128xf32, #tpu.memory_space<any>> -> memref<1x128xf32, #tpu.memory_space<any>>
      %c2_i32_279 = arith.constant 2 : i32
      %c0_i32_280 = arith.constant 0 : i32
      %327 = tpu.memref_slice %arg5[%221, %c1_i32_277, %c2_i32_279, %c0_i32_280] : memref<2x5x8x128xf32, #tpu.memory_space<vmem>> -> memref<1x1x1x128xf32, #tpu.memory_space<vmem>>
      %328 = tpu.memref_squeeze %327 : memref<1x1x1x128xf32, #tpu.memory_space<vmem>> -> memref<1x128xf32, #tpu.memory_space<vmem>>
      %329 = tpu.memref_slice %arg6[%221] : memref<2x!tpu.dma_semaphore, #tpu.memory_space<semaphore_mem>> -> memref<1x!tpu.dma_semaphore, #tpu.memory_space<semaphore_mem>>
      %330 = tpu.memref_squeeze %329 : memref<1x!tpu.dma_semaphore, #tpu.memory_space<semaphore_mem>> -> memref<!tpu.dma_semaphore, #tpu.memory_space<semaphore_mem>>
      tpu.enqueue_dma source(%326 : memref<1x128xf32, #tpu.memory_space<any>>) target(%328 : memref<1x128xf32, #tpu.memory_space<vmem>>) target_semaphore(%330 : memref<!tpu.dma_semaphore, #tpu.memory_space<semaphore_mem>>)
      %c10_i32_281 = arith.constant 10 : i32
      %331 = arith.addi %222, %c10_i32_281 : i32
      %c2_i32_282 = arith.constant 2 : i32
      %332 = arith.addi %331, %c2_i32_282 : i32
      %333 = arith.index_cast %332 : i32 to index
      %334 = memref.load %arg1[%333] : memref<320xi32, #tpu.memory_space<smem>>
      %c2_i32_283 = arith.constant 2 : i32
      %c0_i32_284 = arith.constant 0 : i32
      %335 = tpu.memref_slice %arg2[%334, %c0_i32_284] : memref<512x128xf32, #tpu.memory_space<any>> -> memref<1x128xf32, #tpu.memory_space<any>>
      %c2_i32_285 = arith.constant 2 : i32
      %c0_i32_286 = arith.constant 0 : i32
      %336 = tpu.memref_slice %arg5[%221, %c2_i32_283, %c2_i32_285, %c0_i32_286] : memref<2x5x8x128xf32, #tpu.memory_space<vmem>> -> memref<1x1x1x128xf32, #tpu.memory_space<vmem>>
      %337 = tpu.memref_squeeze %336 : memref<1x1x1x128xf32, #tpu.memory_space<vmem>> -> memref<1x128xf32, #tpu.memory_space<vmem>>
      %338 = tpu.memref_slice %arg6[%221] : memref<2x!tpu.dma_semaphore, #tpu.memory_space<semaphore_mem>> -> memref<1x!tpu.dma_semaphore, #tpu.memory_space<semaphore_mem>>
      %339 = tpu.memref_squeeze %338 : memref<1x!tpu.dma_semaphore, #tpu.memory_space<semaphore_mem>> -> memref<!tpu.dma_semaphore, #tpu.memory_space<semaphore_mem>>
      tpu.enqueue_dma source(%335 : memref<1x128xf32, #tpu.memory_space<any>>) target(%337 : memref<1x128xf32, #tpu.memory_space<vmem>>) target_semaphore(%339 : memref<!tpu.dma_semaphore, #tpu.memory_space<semaphore_mem>>)
      %c10_i32_287 = arith.constant 10 : i32
      %340 = arith.addi %222, %c10_i32_287 : i32
      %c3_i32_288 = arith.constant 3 : i32
      %341 = arith.addi %340, %c3_i32_288 : i32
      %342 = arith.index_cast %341 : i32 to index
      %343 = memref.load %arg1[%342] : memref<320xi32, #tpu.memory_space<smem>>
      %c3_i32_289 = arith.constant 3 : i32
      %c0_i32_290 = arith.constant 0 : i32
      %344 = tpu.memref_slice %arg2[%343, %c0_i32_290] : memref<512x128xf32, #tpu.memory_space<any>> -> memref<1x128xf32, #tpu.memory_space<any>>
      %c2_i32_291 = arith.constant 2 : i32
      %c0_i32_292 = arith.constant 0 : i32
      %345 = tpu.memref_slice %arg5[%221, %c3_i32_289, %c2_i32_291, %c0_i32_292] : memref<2x5x8x128xf32, #tpu.memory_space<vmem>> -> memref<1x1x1x128xf32, #tpu.memory_space<vmem>>
      %346 = tpu.memref_squeeze %345 : memref<1x1x1x128xf32, #tpu.memory_space<vmem>> -> memref<1x128xf32, #tpu.memory_space<vmem>>
      %347 = tpu.memref_slice %arg6[%221] : memref<2x!tpu.dma_semaphore, #tpu.memory_space<semaphore_mem>> -> memref<1x!tpu.dma_semaphore, #tpu.memory_space<semaphore_mem>>
      %348 = tpu.memref_squeeze %347 : memref<1x!tpu.dma_semaphore, #tpu.memory_space<semaphore_mem>> -> memref<!tpu.dma_semaphore, #tpu.memory_space<semaphore_mem>>
      tpu.enqueue_dma source(%344 : memref<1x128xf32, #tpu.memory_space<any>>) target(%346 : memref<1x128xf32, #tpu.memory_space<vmem>>) target_semaphore(%348 : memref<!tpu.dma_semaphore, #tpu.memory_space<semaphore_mem>>)
      %c10_i32_293 = arith.constant 10 : i32
      %349 = arith.addi %222, %c10_i32_293 : i32
      %c4_i32_294 = arith.constant 4 : i32
      %350 = arith.addi %349, %c4_i32_294 : i32
      %351 = arith.index_cast %350 : i32 to index
      %352 = memref.load %arg1[%351] : memref<320xi32, #tpu.memory_space<smem>>
      %c4_i32_295 = arith.constant 4 : i32
      %c0_i32_296 = arith.constant 0 : i32
      %353 = tpu.memref_slice %arg2[%352, %c0_i32_296] : memref<512x128xf32, #tpu.memory_space<any>> -> memref<1x128xf32, #tpu.memory_space<any>>
      %c2_i32_297 = arith.constant 2 : i32
      %c0_i32_298 = arith.constant 0 : i32
      %354 = tpu.memref_slice %arg5[%221, %c4_i32_295, %c2_i32_297, %c0_i32_298] : memref<2x5x8x128xf32, #tpu.memory_space<vmem>> -> memref<1x1x1x128xf32, #tpu.memory_space<vmem>>
      %355 = tpu.memref_squeeze %354 : memref<1x1x1x128xf32, #tpu.memory_space<vmem>> -> memref<1x128xf32, #tpu.memory_space<vmem>>
      %356 = tpu.memref_slice %arg6[%221] : memref<2x!tpu.dma_semaphore, #tpu.memory_space<semaphore_mem>> -> memref<1x!tpu.dma_semaphore, #tpu.memory_space<semaphore_mem>>
      %357 = tpu.memref_squeeze %356 : memref<1x!tpu.dma_semaphore, #tpu.memory_space<semaphore_mem>> -> memref<!tpu.dma_semaphore, #tpu.memory_space<semaphore_mem>>
      tpu.enqueue_dma source(%353 : memref<1x128xf32, #tpu.memory_space<any>>) target(%355 : memref<1x128xf32, #tpu.memory_space<vmem>>) target_semaphore(%357 : memref<!tpu.dma_semaphore, #tpu.memory_space<semaphore_mem>>)
      %c15_i32 = arith.constant 15 : i32
      %358 = arith.addi %222, %c15_i32 : i32
      %c0_i32_299 = arith.constant 0 : i32
      %359 = arith.addi %358, %c0_i32_299 : i32
      %360 = arith.index_cast %359 : i32 to index
      %361 = memref.load %arg1[%360] : memref<320xi32, #tpu.memory_space<smem>>
      %c0_i32_300 = arith.constant 0 : i32
      %c0_i32_301 = arith.constant 0 : i32
      %362 = tpu.memref_slice %arg2[%361, %c0_i32_301] : memref<512x128xf32, #tpu.memory_space<any>> -> memref<1x128xf32, #tpu.memory_space<any>>
      %c3_i32_302 = arith.constant 3 : i32
      %c0_i32_303 = arith.constant 0 : i32
      %363 = tpu.memref_slice %arg5[%221, %c0_i32_300, %c3_i32_302, %c0_i32_303] : memref<2x5x8x128xf32, #tpu.memory_space<vmem>> -> memref<1x1x1x128xf32, #tpu.memory_space<vmem>>
      %364 = tpu.memref_squeeze %363 : memref<1x1x1x128xf32, #tpu.memory_space<vmem>> -> memref<1x128xf32, #tpu.memory_space<vmem>>
      %365 = tpu.memref_slice %arg6[%221] : memref<2x!tpu.dma_semaphore, #tpu.memory_space<semaphore_mem>> -> memref<1x!tpu.dma_semaphore, #tpu.memory_space<semaphore_mem>>
      %366 = tpu.memref_squeeze %365 : memref<1x!tpu.dma_semaphore, #tpu.memory_space<semaphore_mem>> -> memref<!tpu.dma_semaphore, #tpu.memory_space<semaphore_mem>>
      tpu.enqueue_dma source(%362 : memref<1x128xf32, #tpu.memory_space<any>>) target(%364 : memref<1x128xf32, #tpu.memory_space<vmem>>) target_semaphore(%366 : memref<!tpu.dma_semaphore, #tpu.memory_space<semaphore_mem>>)
      %c15_i32_304 = arith.constant 15 : i32
      %367 = arith.addi %222, %c15_i32_304 : i32
      %c1_i32_305 = arith.constant 1 : i32
      %368 = arith.addi %367, %c1_i32_305 : i32
      %369 = arith.index_cast %368 : i32 to index
      %370 = memref.load %arg1[%369] : memref<320xi32, #tpu.memory_space<smem>>
      %c1_i32_306 = arith.constant 1 : i32
      %c0_i32_307 = arith.constant 0 : i32
      %371 = tpu.memref_slice %arg2[%370, %c0_i32_307] : memref<512x128xf32, #tpu.memory_space<any>> -> memref<1x128xf32, #tpu.memory_space<any>>
      %c3_i32_308 = arith.constant 3 : i32
      %c0_i32_309 = arith.constant 0 : i32
      %372 = tpu.memref_slice %arg5[%221, %c1_i32_306, %c3_i32_308, %c0_i32_309] : memref<2x5x8x128xf32, #tpu.memory_space<vmem>> -> memref<1x1x1x128xf32, #tpu.memory_space<vmem>>
      %373 = tpu.memref_squeeze %372 : memref<1x1x1x128xf32, #tpu.memory_space<vmem>> -> memref<1x128xf32, #tpu.memory_space<vmem>>
      %374 = tpu.memref_slice %arg6[%221] : memref<2x!tpu.dma_semaphore, #tpu.memory_space<semaphore_mem>> -> memref<1x!tpu.dma_semaphore, #tpu.memory_space<semaphore_mem>>
      %375 = tpu.memref_squeeze %374 : memref<1x!tpu.dma_semaphore, #tpu.memory_space<semaphore_mem>> -> memref<!tpu.dma_semaphore, #tpu.memory_space<semaphore_mem>>
      tpu.enqueue_dma source(%371 : memref<1x128xf32, #tpu.memory_space<any>>) target(%373 : memref<1x128xf32, #tpu.memory_space<vmem>>) target_semaphore(%375 : memref<!tpu.dma_semaphore, #tpu.memory_space<semaphore_mem>>)
      %c15_i32_310 = arith.constant 15 : i32
      %376 = arith.addi %222, %c15_i32_310 : i32
      %c2_i32_311 = arith.constant 2 : i32
      %377 = arith.addi %376, %c2_i32_311 : i32
      %378 = arith.index_cast %377 : i32 to index
      %379 = memref.load %arg1[%378] : memref<320xi32, #tpu.memory_space<smem>>
      %c2_i32_312 = arith.constant 2 : i32
      %c0_i32_313 = arith.constant 0 : i32
      %380 = tpu.memref_slice %arg2[%379, %c0_i32_313] : memref<512x128xf32, #tpu.memory_space<any>> -> memref<1x128xf32, #tpu.memory_space<any>>
      %c3_i32_314 = arith.constant 3 : i32
      %c0_i32_315 = arith.constant 0 : i32
      %381 = tpu.memref_slice %arg5[%221, %c2_i32_312, %c3_i32_314, %c0_i32_315] : memref<2x5x8x128xf32, #tpu.memory_space<vmem>> -> memref<1x1x1x128xf32, #tpu.memory_space<vmem>>
      %382 = tpu.memref_squeeze %381 : memref<1x1x1x128xf32, #tpu.memory_space<vmem>> -> memref<1x128xf32, #tpu.memory_space<vmem>>
      %383 = tpu.memref_slice %arg6[%221] : memref<2x!tpu.dma_semaphore, #tpu.memory_space<semaphore_mem>> -> memref<1x!tpu.dma_semaphore, #tpu.memory_space<semaphore_mem>>
      %384 = tpu.memref_squeeze %383 : memref<1x!tpu.dma_semaphore, #tpu.memory_space<semaphore_mem>> -> memref<!tpu.dma_semaphore, #tpu.memory_space<semaphore_mem>>
      tpu.enqueue_dma source(%380 : memref<1x128xf32, #tpu.memory_space<any>>) target(%382 : memref<1x128xf32, #tpu.memory_space<vmem>>) target_semaphore(%384 : memref<!tpu.dma_semaphore, #tpu.memory_space<semaphore_mem>>)
      %c15_i32_316 = arith.constant 15 : i32
      %385 = arith.addi %222, %c15_i32_316 : i32
      %c3_i32_317 = arith.constant 3 : i32
      %386 = arith.addi %385, %c3_i32_317 : i32
      %387 = arith.index_cast %386 : i32 to index
      %388 = memref.load %arg1[%387] : memref<320xi32, #tpu.memory_space<smem>>
      %c3_i32_318 = arith.constant 3 : i32
      %c0_i32_319 = arith.constant 0 : i32
      %389 = tpu.memref_slice %arg2[%388, %c0_i32_319] : memref<512x128xf32, #tpu.memory_space<any>> -> memref<1x128xf32, #tpu.memory_space<any>>
      %c3_i32_320 = arith.constant 3 : i32
      %c0_i32_321 = arith.constant 0 : i32
      %390 = tpu.memref_slice %arg5[%221, %c3_i32_318, %c3_i32_320, %c0_i32_321] : memref<2x5x8x128xf32, #tpu.memory_space<vmem>> -> memref<1x1x1x128xf32, #tpu.memory_space<vmem>>
      %391 = tpu.memref_squeeze %390 : memref<1x1x1x128xf32, #tpu.memory_space<vmem>> -> memref<1x128xf32, #tpu.memory_space<vmem>>
      %392 = tpu.memref_slice %arg6[%221] : memref<2x!tpu.dma_semaphore, #tpu.memory_space<semaphore_mem>> -> memref<1x!tpu.dma_semaphore, #tpu.memory_space<semaphore_mem>>
      %393 = tpu.memref_squeeze %392 : memref<1x!tpu.dma_semaphore, #tpu.memory_space<semaphore_mem>> -> memref<!tpu.dma_semaphore, #tpu.memory_space<semaphore_mem>>
      tpu.enqueue_dma source(%389 : memref<1x128xf32, #tpu.memory_space<any>>) target(%391 : memref<1x128xf32, #tpu.memory_space<vmem>>) target_semaphore(%393 : memref<!tpu.dma_semaphore, #tpu.memory_space<semaphore_mem>>)
      %c15_i32_322 = arith.constant 15 : i32
      %394 = arith.addi %222, %c15_i32_322 : i32
      %c4_i32_323 = arith.constant 4 : i32
      %395 = arith.addi %394, %c4_i32_323 : i32
      %396 = arith.index_cast %395 : i32 to index
      %397 = memref.load %arg1[%396] : memref<320xi32, #tpu.memory_space<smem>>
      %c4_i32_324 = arith.constant 4 : i32
      %c0_i32_325 = arith.constant 0 : i32
      %398 = tpu.memref_slice %arg2[%397, %c0_i32_325] : memref<512x128xf32, #tpu.memory_space<any>> -> memref<1x128xf32, #tpu.memory_space<any>>
      %c3_i32_326 = arith.constant 3 : i32
      %c0_i32_327 = arith.constant 0 : i32
      %399 = tpu.memref_slice %arg5[%221, %c4_i32_324, %c3_i32_326, %c0_i32_327] : memref<2x5x8x128xf32, #tpu.memory_space<vmem>> -> memref<1x1x1x128xf32, #tpu.memory_space<vmem>>
      %400 = tpu.memref_squeeze %399 : memref<1x1x1x128xf32, #tpu.memory_space<vmem>> -> memref<1x128xf32, #tpu.memory_space<vmem>>
      %401 = tpu.memref_slice %arg6[%221] : memref<2x!tpu.dma_semaphore, #tpu.memory_space<semaphore_mem>> -> memref<1x!tpu.dma_semaphore, #tpu.memory_space<semaphore_mem>>
      %402 = tpu.memref_squeeze %401 : memref<1x!tpu.dma_semaphore, #tpu.memory_space<semaphore_mem>> -> memref<!tpu.dma_semaphore, #tpu.memory_space<semaphore_mem>>
      tpu.enqueue_dma source(%398 : memref<1x128xf32, #tpu.memory_space<any>>) target(%400 : memref<1x128xf32, #tpu.memory_space<vmem>>) target_semaphore(%402 : memref<!tpu.dma_semaphore, #tpu.memory_space<semaphore_mem>>)
      %c20_i32 = arith.constant 20 : i32
      %403 = arith.addi %222, %c20_i32 : i32
      %c0_i32_328 = arith.constant 0 : i32
      %404 = arith.addi %403, %c0_i32_328 : i32
      %405 = arith.index_cast %404 : i32 to index
      %406 = memref.load %arg1[%405] : memref<320xi32, #tpu.memory_space<smem>>
      %c0_i32_329 = arith.constant 0 : i32
      %c0_i32_330 = arith.constant 0 : i32
      %407 = tpu.memref_slice %arg2[%406, %c0_i32_330] : memref<512x128xf32, #tpu.memory_space<any>> -> memref<1x128xf32, #tpu.memory_space<any>>
      %c4_i32_331 = arith.constant 4 : i32
      %c0_i32_332 = arith.constant 0 : i32
      %408 = tpu.memref_slice %arg5[%221, %c0_i32_329, %c4_i32_331, %c0_i32_332] : memref<2x5x8x128xf32, #tpu.memory_space<vmem>> -> memref<1x1x1x128xf32, #tpu.memory_space<vmem>>
      %409 = tpu.memref_squeeze %408 : memref<1x1x1x128xf32, #tpu.memory_space<vmem>> -> memref<1x128xf32, #tpu.memory_space<vmem>>
      %410 = tpu.memref_slice %arg6[%221] : memref<2x!tpu.dma_semaphore, #tpu.memory_space<semaphore_mem>> -> memref<1x!tpu.dma_semaphore, #tpu.memory_space<semaphore_mem>>
      %411 = tpu.memref_squeeze %410 : memref<1x!tpu.dma_semaphore, #tpu.memory_space<semaphore_mem>> -> memref<!tpu.dma_semaphore, #tpu.memory_space<semaphore_mem>>
      tpu.enqueue_dma source(%407 : memref<1x128xf32, #tpu.memory_space<any>>) target(%409 : memref<1x128xf32, #tpu.memory_space<vmem>>) target_semaphore(%411 : memref<!tpu.dma_semaphore, #tpu.memory_space<semaphore_mem>>)
      %c20_i32_333 = arith.constant 20 : i32
      %412 = arith.addi %222, %c20_i32_333 : i32
      %c1_i32_334 = arith.constant 1 : i32
      %413 = arith.addi %412, %c1_i32_334 : i32
      %414 = arith.index_cast %413 : i32 to index
      %415 = memref.load %arg1[%414] : memref<320xi32, #tpu.memory_space<smem>>
      %c1_i32_335 = arith.constant 1 : i32
      %c0_i32_336 = arith.constant 0 : i32
      %416 = tpu.memref_slice %arg2[%415, %c0_i32_336] : memref<512x128xf32, #tpu.memory_space<any>> -> memref<1x128xf32, #tpu.memory_space<any>>
      %c4_i32_337 = arith.constant 4 : i32
      %c0_i32_338 = arith.constant 0 : i32
      %417 = tpu.memref_slice %arg5[%221, %c1_i32_335, %c4_i32_337, %c0_i32_338] : memref<2x5x8x128xf32, #tpu.memory_space<vmem>> -> memref<1x1x1x128xf32, #tpu.memory_space<vmem>>
      %418 = tpu.memref_squeeze %417 : memref<1x1x1x128xf32, #tpu.memory_space<vmem>> -> memref<1x128xf32, #tpu.memory_space<vmem>>
      %419 = tpu.memref_slice %arg6[%221] : memref<2x!tpu.dma_semaphore, #tpu.memory_space<semaphore_mem>> -> memref<1x!tpu.dma_semaphore, #tpu.memory_space<semaphore_mem>>
      %420 = tpu.memref_squeeze %419 : memref<1x!tpu.dma_semaphore, #tpu.memory_space<semaphore_mem>> -> memref<!tpu.dma_semaphore, #tpu.memory_space<semaphore_mem>>
      tpu.enqueue_dma source(%416 : memref<1x128xf32, #tpu.memory_space<any>>) target(%418 : memref<1x128xf32, #tpu.memory_space<vmem>>) target_semaphore(%420 : memref<!tpu.dma_semaphore, #tpu.memory_space<semaphore_mem>>)
      %c20_i32_339 = arith.constant 20 : i32
      %421 = arith.addi %222, %c20_i32_339 : i32
      %c2_i32_340 = arith.constant 2 : i32
      %422 = arith.addi %421, %c2_i32_340 : i32
      %423 = arith.index_cast %422 : i32 to index
      %424 = memref.load %arg1[%423] : memref<320xi32, #tpu.memory_space<smem>>
      %c2_i32_341 = arith.constant 2 : i32
      %c0_i32_342 = arith.constant 0 : i32
      %425 = tpu.memref_slice %arg2[%424, %c0_i32_342] : memref<512x128xf32, #tpu.memory_space<any>> -> memref<1x128xf32, #tpu.memory_space<any>>
      %c4_i32_343 = arith.constant 4 : i32
      %c0_i32_344 = arith.constant 0 : i32
      %426 = tpu.memref_slice %arg5[%221, %c2_i32_341, %c4_i32_343, %c0_i32_344] : memref<2x5x8x128xf32, #tpu.memory_space<vmem>> -> memref<1x1x1x128xf32, #tpu.memory_space<vmem>>
      %427 = tpu.memref_squeeze %426 : memref<1x1x1x128xf32, #tpu.memory_space<vmem>> -> memref<1x128xf32, #tpu.memory_space<vmem>>
      %428 = tpu.memref_slice %arg6[%221] : memref<2x!tpu.dma_semaphore, #tpu.memory_space<semaphore_mem>> -> memref<1x!tpu.dma_semaphore, #tpu.memory_space<semaphore_mem>>
      %429 = tpu.memref_squeeze %428 : memref<1x!tpu.dma_semaphore, #tpu.memory_space<semaphore_mem>> -> memref<!tpu.dma_semaphore, #tpu.memory_space<semaphore_mem>>
      tpu.enqueue_dma source(%425 : memref<1x128xf32, #tpu.memory_space<any>>) target(%427 : memref<1x128xf32, #tpu.memory_space<vmem>>) target_semaphore(%429 : memref<!tpu.dma_semaphore, #tpu.memory_space<semaphore_mem>>)
      %c20_i32_345 = arith.constant 20 : i32
      %430 = arith.addi %222, %c20_i32_345 : i32
      %c3_i32_346 = arith.constant 3 : i32
      %431 = arith.addi %430, %c3_i32_346 : i32
      %432 = arith.index_cast %431 : i32 to index
      %433 = memref.load %arg1[%432] : memref<320xi32, #tpu.memory_space<smem>>
      %c3_i32_347 = arith.constant 3 : i32
      %c0_i32_348 = arith.constant 0 : i32
      %434 = tpu.memref_slice %arg2[%433, %c0_i32_348] : memref<512x128xf32, #tpu.memory_space<any>> -> memref<1x128xf32, #tpu.memory_space<any>>
      %c4_i32_349 = arith.constant 4 : i32
      %c0_i32_350 = arith.constant 0 : i32
      %435 = tpu.memref_slice %arg5[%221, %c3_i32_347, %c4_i32_349, %c0_i32_350] : memref<2x5x8x128xf32, #tpu.memory_space<vmem>> -> memref<1x1x1x128xf32, #tpu.memory_space<vmem>>
      %436 = tpu.memref_squeeze %435 : memref<1x1x1x128xf32, #tpu.memory_space<vmem>> -> memref<1x128xf32, #tpu.memory_space<vmem>>
      %437 = tpu.memref_slice %arg6[%221] : memref<2x!tpu.dma_semaphore, #tpu.memory_space<semaphore_mem>> -> memref<1x!tpu.dma_semaphore, #tpu.memory_space<semaphore_mem>>
      %438 = tpu.memref_squeeze %437 : memref<1x!tpu.dma_semaphore, #tpu.memory_space<semaphore_mem>> -> memref<!tpu.dma_semaphore, #tpu.memory_space<semaphore_mem>>
      tpu.enqueue_dma source(%434 : memref<1x128xf32, #tpu.memory_space<any>>) target(%436 : memref<1x128xf32, #tpu.memory_space<vmem>>) target_semaphore(%438 : memref<!tpu.dma_semaphore, #tpu.memory_space<semaphore_mem>>)
      %c20_i32_351 = arith.constant 20 : i32
      %439 = arith.addi %222, %c20_i32_351 : i32
      %c4_i32_352 = arith.constant 4 : i32
      %440 = arith.addi %439, %c4_i32_352 : i32
      %441 = arith.index_cast %440 : i32 to index
      %442 = memref.load %arg1[%441] : memref<320xi32, #tpu.memory_space<smem>>
      %c4_i32_353 = arith.constant 4 : i32
      %c0_i32_354 = arith.constant 0 : i32
      %443 = tpu.memref_slice %arg2[%442, %c0_i32_354] : memref<512x128xf32, #tpu.memory_space<any>> -> memref<1x128xf32, #tpu.memory_space<any>>
      %c4_i32_355 = arith.constant 4 : i32
      %c0_i32_356 = arith.constant 0 : i32
      %444 = tpu.memref_slice %arg5[%221, %c4_i32_353, %c4_i32_355, %c0_i32_356] : memref<2x5x8x128xf32, #tpu.memory_space<vmem>> -> memref<1x1x1x128xf32, #tpu.memory_space<vmem>>
      %445 = tpu.memref_squeeze %444 : memref<1x1x1x128xf32, #tpu.memory_space<vmem>> -> memref<1x128xf32, #tpu.memory_space<vmem>>
      %446 = tpu.memref_slice %arg6[%221] : memref<2x!tpu.dma_semaphore, #tpu.memory_space<semaphore_mem>> -> memref<1x!tpu.dma_semaphore, #tpu.memory_space<semaphore_mem>>
      %447 = tpu.memref_squeeze %446 : memref<1x!tpu.dma_semaphore, #tpu.memory_space<semaphore_mem>> -> memref<!tpu.dma_semaphore, #tpu.memory_space<semaphore_mem>>
      tpu.enqueue_dma source(%443 : memref<1x128xf32, #tpu.memory_space<any>>) target(%445 : memref<1x128xf32, #tpu.memory_space<vmem>>) target_semaphore(%447 : memref<!tpu.dma_semaphore, #tpu.memory_space<semaphore_mem>>)
      %c25_i32 = arith.constant 25 : i32
      %448 = arith.addi %222, %c25_i32 : i32
      %c0_i32_357 = arith.constant 0 : i32
      %449 = arith.addi %448, %c0_i32_357 : i32
      %450 = arith.index_cast %449 : i32 to index
      %451 = memref.load %arg1[%450] : memref<320xi32, #tpu.memory_space<smem>>
      %c0_i32_358 = arith.constant 0 : i32
      %c0_i32_359 = arith.constant 0 : i32
      %452 = tpu.memref_slice %arg2[%451, %c0_i32_359] : memref<512x128xf32, #tpu.memory_space<any>> -> memref<1x128xf32, #tpu.memory_space<any>>
      %c5_i32_360 = arith.constant 5 : i32
      %c0_i32_361 = arith.constant 0 : i32
      %453 = tpu.memref_slice %arg5[%221, %c0_i32_358, %c5_i32_360, %c0_i32_361] : memref<2x5x8x128xf32, #tpu.memory_space<vmem>> -> memref<1x1x1x128xf32, #tpu.memory_space<vmem>>
      %454 = tpu.memref_squeeze %453 : memref<1x1x1x128xf32, #tpu.memory_space<vmem>> -> memref<1x128xf32, #tpu.memory_space<vmem>>
      %455 = tpu.memref_slice %arg6[%221] : memref<2x!tpu.dma_semaphore, #tpu.memory_space<semaphore_mem>> -> memref<1x!tpu.dma_semaphore, #tpu.memory_space<semaphore_mem>>
      %456 = tpu.memref_squeeze %455 : memref<1x!tpu.dma_semaphore, #tpu.memory_space<semaphore_mem>> -> memref<!tpu.dma_semaphore, #tpu.memory_space<semaphore_mem>>
      tpu.enqueue_dma source(%452 : memref<1x128xf32, #tpu.memory_space<any>>) target(%454 : memref<1x128xf32, #tpu.memory_space<vmem>>) target_semaphore(%456 : memref<!tpu.dma_semaphore, #tpu.memory_space<semaphore_mem>>)
      %c25_i32_362 = arith.constant 25 : i32
      %457 = arith.addi %222, %c25_i32_362 : i32
      %c1_i32_363 = arith.constant 1 : i32
      %458 = arith.addi %457, %c1_i32_363 : i32
      %459 = arith.index_cast %458 : i32 to index
      %460 = memref.load %arg1[%459] : memref<320xi32, #tpu.memory_space<smem>>
      %c1_i32_364 = arith.constant 1 : i32
      %c0_i32_365 = arith.constant 0 : i32
      %461 = tpu.memref_slice %arg2[%460, %c0_i32_365] : memref<512x128xf32, #tpu.memory_space<any>> -> memref<1x128xf32, #tpu.memory_space<any>>
      %c5_i32_366 = arith.constant 5 : i32
      %c0_i32_367 = arith.constant 0 : i32
      %462 = tpu.memref_slice %arg5[%221, %c1_i32_364, %c5_i32_366, %c0_i32_367] : memref<2x5x8x128xf32, #tpu.memory_space<vmem>> -> memref<1x1x1x128xf32, #tpu.memory_space<vmem>>
      %463 = tpu.memref_squeeze %462 : memref<1x1x1x128xf32, #tpu.memory_space<vmem>> -> memref<1x128xf32, #tpu.memory_space<vmem>>
      %464 = tpu.memref_slice %arg6[%221] : memref<2x!tpu.dma_semaphore, #tpu.memory_space<semaphore_mem>> -> memref<1x!tpu.dma_semaphore, #tpu.memory_space<semaphore_mem>>
      %465 = tpu.memref_squeeze %464 : memref<1x!tpu.dma_semaphore, #tpu.memory_space<semaphore_mem>> -> memref<!tpu.dma_semaphore, #tpu.memory_space<semaphore_mem>>
      tpu.enqueue_dma source(%461 : memref<1x128xf32, #tpu.memory_space<any>>) target(%463 : memref<1x128xf32, #tpu.memory_space<vmem>>) target_semaphore(%465 : memref<!tpu.dma_semaphore, #tpu.memory_space<semaphore_mem>>)
      %c25_i32_368 = arith.constant 25 : i32
      %466 = arith.addi %222, %c25_i32_368 : i32
      %c2_i32_369 = arith.constant 2 : i32
      %467 = arith.addi %466, %c2_i32_369 : i32
      %468 = arith.index_cast %467 : i32 to index
      %469 = memref.load %arg1[%468] : memref<320xi32, #tpu.memory_space<smem>>
      %c2_i32_370 = arith.constant 2 : i32
      %c0_i32_371 = arith.constant 0 : i32
      %470 = tpu.memref_slice %arg2[%469, %c0_i32_371] : memref<512x128xf32, #tpu.memory_space<any>> -> memref<1x128xf32, #tpu.memory_space<any>>
      %c5_i32_372 = arith.constant 5 : i32
      %c0_i32_373 = arith.constant 0 : i32
      %471 = tpu.memref_slice %arg5[%221, %c2_i32_370, %c5_i32_372, %c0_i32_373] : memref<2x5x8x128xf32, #tpu.memory_space<vmem>> -> memref<1x1x1x128xf32, #tpu.memory_space<vmem>>
      %472 = tpu.memref_squeeze %471 : memref<1x1x1x128xf32, #tpu.memory_space<vmem>> -> memref<1x128xf32, #tpu.memory_space<vmem>>
      %473 = tpu.memref_slice %arg6[%221] : memref<2x!tpu.dma_semaphore, #tpu.memory_space<semaphore_mem>> -> memref<1x!tpu.dma_semaphore, #tpu.memory_space<semaphore_mem>>
      %474 = tpu.memref_squeeze %473 : memref<1x!tpu.dma_semaphore, #tpu.memory_space<semaphore_mem>> -> memref<!tpu.dma_semaphore, #tpu.memory_space<semaphore_mem>>
      tpu.enqueue_dma source(%470 : memref<1x128xf32, #tpu.memory_space<any>>) target(%472 : memref<1x128xf32, #tpu.memory_space<vmem>>) target_semaphore(%474 : memref<!tpu.dma_semaphore, #tpu.memory_space<semaphore_mem>>)
      %c25_i32_374 = arith.constant 25 : i32
      %475 = arith.addi %222, %c25_i32_374 : i32
      %c3_i32_375 = arith.constant 3 : i32
      %476 = arith.addi %475, %c3_i32_375 : i32
      %477 = arith.index_cast %476 : i32 to index
      %478 = memref.load %arg1[%477] : memref<320xi32, #tpu.memory_space<smem>>
      %c3_i32_376 = arith.constant 3 : i32
      %c0_i32_377 = arith.constant 0 : i32
      %479 = tpu.memref_slice %arg2[%478, %c0_i32_377] : memref<512x128xf32, #tpu.memory_space<any>> -> memref<1x128xf32, #tpu.memory_space<any>>
      %c5_i32_378 = arith.constant 5 : i32
      %c0_i32_379 = arith.constant 0 : i32
      %480 = tpu.memref_slice %arg5[%221, %c3_i32_376, %c5_i32_378, %c0_i32_379] : memref<2x5x8x128xf32, #tpu.memory_space<vmem>> -> memref<1x1x1x128xf32, #tpu.memory_space<vmem>>
      %481 = tpu.memref_squeeze %480 : memref<1x1x1x128xf32, #tpu.memory_space<vmem>> -> memref<1x128xf32, #tpu.memory_space<vmem>>
      %482 = tpu.memref_slice %arg6[%221] : memref<2x!tpu.dma_semaphore, #tpu.memory_space<semaphore_mem>> -> memref<1x!tpu.dma_semaphore, #tpu.memory_space<semaphore_mem>>
      %483 = tpu.memref_squeeze %482 : memref<1x!tpu.dma_semaphore, #tpu.memory_space<semaphore_mem>> -> memref<!tpu.dma_semaphore, #tpu.memory_space<semaphore_mem>>
      tpu.enqueue_dma source(%479 : memref<1x128xf32, #tpu.memory_space<any>>) target(%481 : memref<1x128xf32, #tpu.memory_space<vmem>>) target_semaphore(%483 : memref<!tpu.dma_semaphore, #tpu.memory_space<semaphore_mem>>)
      %c25_i32_380 = arith.constant 25 : i32
      %484 = arith.addi %222, %c25_i32_380 : i32
      %c4_i32_381 = arith.constant 4 : i32
      %485 = arith.addi %484, %c4_i32_381 : i32
      %486 = arith.index_cast %485 : i32 to index
      %487 = memref.load %arg1[%486] : memref<320xi32, #tpu.memory_space<smem>>
      %c4_i32_382 = arith.constant 4 : i32
      %c0_i32_383 = arith.constant 0 : i32
      %488 = tpu.memref_slice %arg2[%487, %c0_i32_383] : memref<512x128xf32, #tpu.memory_space<any>> -> memref<1x128xf32, #tpu.memory_space<any>>
      %c5_i32_384 = arith.constant 5 : i32
      %c0_i32_385 = arith.constant 0 : i32
      %489 = tpu.memref_slice %arg5[%221, %c4_i32_382, %c5_i32_384, %c0_i32_385] : memref<2x5x8x128xf32, #tpu.memory_space<vmem>> -> memref<1x1x1x128xf32, #tpu.memory_space<vmem>>
      %490 = tpu.memref_squeeze %489 : memref<1x1x1x128xf32, #tpu.memory_space<vmem>> -> memref<1x128xf32, #tpu.memory_space<vmem>>
      %491 = tpu.memref_slice %arg6[%221] : memref<2x!tpu.dma_semaphore, #tpu.memory_space<semaphore_mem>> -> memref<1x!tpu.dma_semaphore, #tpu.memory_space<semaphore_mem>>
      %492 = tpu.memref_squeeze %491 : memref<1x!tpu.dma_semaphore, #tpu.memory_space<semaphore_mem>> -> memref<!tpu.dma_semaphore, #tpu.memory_space<semaphore_mem>>
      tpu.enqueue_dma source(%488 : memref<1x128xf32, #tpu.memory_space<any>>) target(%490 : memref<1x128xf32, #tpu.memory_space<vmem>>) target_semaphore(%492 : memref<!tpu.dma_semaphore, #tpu.memory_space<semaphore_mem>>)
      %c30_i32 = arith.constant 30 : i32
      %493 = arith.addi %222, %c30_i32 : i32
      %c0_i32_386 = arith.constant 0 : i32
      %494 = arith.addi %493, %c0_i32_386 : i32
      %495 = arith.index_cast %494 : i32 to index
      %496 = memref.load %arg1[%495] : memref<320xi32, #tpu.memory_space<smem>>
      %c0_i32_387 = arith.constant 0 : i32
      %c0_i32_388 = arith.constant 0 : i32
      %497 = tpu.memref_slice %arg2[%496, %c0_i32_388] : memref<512x128xf32, #tpu.memory_space<any>> -> memref<1x128xf32, #tpu.memory_space<any>>
      %c6_i32 = arith.constant 6 : i32
      %c0_i32_389 = arith.constant 0 : i32
      %498 = tpu.memref_slice %arg5[%221, %c0_i32_387, %c6_i32, %c0_i32_389] : memref<2x5x8x128xf32, #tpu.memory_space<vmem>> -> memref<1x1x1x128xf32, #tpu.memory_space<vmem>>
      %499 = tpu.memref_squeeze %498 : memref<1x1x1x128xf32, #tpu.memory_space<vmem>> -> memref<1x128xf32, #tpu.memory_space<vmem>>
      %500 = tpu.memref_slice %arg6[%221] : memref<2x!tpu.dma_semaphore, #tpu.memory_space<semaphore_mem>> -> memref<1x!tpu.dma_semaphore, #tpu.memory_space<semaphore_mem>>
      %501 = tpu.memref_squeeze %500 : memref<1x!tpu.dma_semaphore, #tpu.memory_space<semaphore_mem>> -> memref<!tpu.dma_semaphore, #tpu.memory_space<semaphore_mem>>
      tpu.enqueue_dma source(%497 : memref<1x128xf32, #tpu.memory_space<any>>) target(%499 : memref<1x128xf32, #tpu.memory_space<vmem>>) target_semaphore(%501 : memref<!tpu.dma_semaphore, #tpu.memory_space<semaphore_mem>>)
      %c30_i32_390 = arith.constant 30 : i32
      %502 = arith.addi %222, %c30_i32_390 : i32
      %c1_i32_391 = arith.constant 1 : i32
      %503 = arith.addi %502, %c1_i32_391 : i32
      %504 = arith.index_cast %503 : i32 to index
      %505 = memref.load %arg1[%504] : memref<320xi32, #tpu.memory_space<smem>>
      %c1_i32_392 = arith.constant 1 : i32
      %c0_i32_393 = arith.constant 0 : i32
      %506 = tpu.memref_slice %arg2[%505, %c0_i32_393] : memref<512x128xf32, #tpu.memory_space<any>> -> memref<1x128xf32, #tpu.memory_space<any>>
      %c6_i32_394 = arith.constant 6 : i32
      %c0_i32_395 = arith.constant 0 : i32
      %507 = tpu.memref_slice %arg5[%221, %c1_i32_392, %c6_i32_394, %c0_i32_395] : memref<2x5x8x128xf32, #tpu.memory_space<vmem>> -> memref<1x1x1x128xf32, #tpu.memory_space<vmem>>
      %508 = tpu.memref_squeeze %507 : memref<1x1x1x128xf32, #tpu.memory_space<vmem>> -> memref<1x128xf32, #tpu.memory_space<vmem>>
      %509 = tpu.memref_slice %arg6[%221] : memref<2x!tpu.dma_semaphore, #tpu.memory_space<semaphore_mem>> -> memref<1x!tpu.dma_semaphore, #tpu.memory_space<semaphore_mem>>
      %510 = tpu.memref_squeeze %509 : memref<1x!tpu.dma_semaphore, #tpu.memory_space<semaphore_mem>> -> memref<!tpu.dma_semaphore, #tpu.memory_space<semaphore_mem>>
      tpu.enqueue_dma source(%506 : memref<1x128xf32, #tpu.memory_space<any>>) target(%508 : memref<1x128xf32, #tpu.memory_space<vmem>>) target_semaphore(%510 : memref<!tpu.dma_semaphore, #tpu.memory_space<semaphore_mem>>)
      %c30_i32_396 = arith.constant 30 : i32
      %511 = arith.addi %222, %c30_i32_396 : i32
      %c2_i32_397 = arith.constant 2 : i32
      %512 = arith.addi %511, %c2_i32_397 : i32
      %513 = arith.index_cast %512 : i32 to index
      %514 = memref.load %arg1[%513] : memref<320xi32, #tpu.memory_space<smem>>
      %c2_i32_398 = arith.constant 2 : i32
      %c0_i32_399 = arith.constant 0 : i32
      %515 = tpu.memref_slice %arg2[%514, %c0_i32_399] : memref<512x128xf32, #tpu.memory_space<any>> -> memref<1x128xf32, #tpu.memory_space<any>>
      %c6_i32_400 = arith.constant 6 : i32
      %c0_i32_401 = arith.constant 0 : i32
      %516 = tpu.memref_slice %arg5[%221, %c2_i32_398, %c6_i32_400, %c0_i32_401] : memref<2x5x8x128xf32, #tpu.memory_space<vmem>> -> memref<1x1x1x128xf32, #tpu.memory_space<vmem>>
      %517 = tpu.memref_squeeze %516 : memref<1x1x1x128xf32, #tpu.memory_space<vmem>> -> memref<1x128xf32, #tpu.memory_space<vmem>>
      %518 = tpu.memref_slice %arg6[%221] : memref<2x!tpu.dma_semaphore, #tpu.memory_space<semaphore_mem>> -> memref<1x!tpu.dma_semaphore, #tpu.memory_space<semaphore_mem>>
      %519 = tpu.memref_squeeze %518 : memref<1x!tpu.dma_semaphore, #tpu.memory_space<semaphore_mem>> -> memref<!tpu.dma_semaphore, #tpu.memory_space<semaphore_mem>>
      tpu.enqueue_dma source(%515 : memref<1x128xf32, #tpu.memory_space<any>>) target(%517 : memref<1x128xf32, #tpu.memory_space<vmem>>) target_semaphore(%519 : memref<!tpu.dma_semaphore, #tpu.memory_space<semaphore_mem>>)
      %c30_i32_402 = arith.constant 30 : i32
      %520 = arith.addi %222, %c30_i32_402 : i32
      %c3_i32_403 = arith.constant 3 : i32
      %521 = arith.addi %520, %c3_i32_403 : i32
      %522 = arith.index_cast %521 : i32 to index
      %523 = memref.load %arg1[%522] : memref<320xi32, #tpu.memory_space<smem>>
      %c3_i32_404 = arith.constant 3 : i32
      %c0_i32_405 = arith.constant 0 : i32
      %524 = tpu.memref_slice %arg2[%523, %c0_i32_405] : memref<512x128xf32, #tpu.memory_space<any>> -> memref<1x128xf32, #tpu.memory_space<any>>
      %c6_i32_406 = arith.constant 6 : i32
      %c0_i32_407 = arith.constant 0 : i32
      %525 = tpu.memref_slice %arg5[%221, %c3_i32_404, %c6_i32_406, %c0_i32_407] : memref<2x5x8x128xf32, #tpu.memory_space<vmem>> -> memref<1x1x1x128xf32, #tpu.memory_space<vmem>>
      %526 = tpu.memref_squeeze %525 : memref<1x1x1x128xf32, #tpu.memory_space<vmem>> -> memref<1x128xf32, #tpu.memory_space<vmem>>
      %527 = tpu.memref_slice %arg6[%221] : memref<2x!tpu.dma_semaphore, #tpu.memory_space<semaphore_mem>> -> memref<1x!tpu.dma_semaphore, #tpu.memory_space<semaphore_mem>>
      %528 = tpu.memref_squeeze %527 : memref<1x!tpu.dma_semaphore, #tpu.memory_space<semaphore_mem>> -> memref<!tpu.dma_semaphore, #tpu.memory_space<semaphore_mem>>
      tpu.enqueue_dma source(%524 : memref<1x128xf32, #tpu.memory_space<any>>) target(%526 : memref<1x128xf32, #tpu.memory_space<vmem>>) target_semaphore(%528 : memref<!tpu.dma_semaphore, #tpu.memory_space<semaphore_mem>>)
      %c30_i32_408 = arith.constant 30 : i32
      %529 = arith.addi %222, %c30_i32_408 : i32
      %c4_i32_409 = arith.constant 4 : i32
      %530 = arith.addi %529, %c4_i32_409 : i32
      %531 = arith.index_cast %530 : i32 to index
      %532 = memref.load %arg1[%531] : memref<320xi32, #tpu.memory_space<smem>>
      %c4_i32_410 = arith.constant 4 : i32
      %c0_i32_411 = arith.constant 0 : i32
      %533 = tpu.memref_slice %arg2[%532, %c0_i32_411] : memref<512x128xf32, #tpu.memory_space<any>> -> memref<1x128xf32, #tpu.memory_space<any>>
      %c6_i32_412 = arith.constant 6 : i32
      %c0_i32_413 = arith.constant 0 : i32
      %534 = tpu.memref_slice %arg5[%221, %c4_i32_410, %c6_i32_412, %c0_i32_413] : memref<2x5x8x128xf32, #tpu.memory_space<vmem>> -> memref<1x1x1x128xf32, #tpu.memory_space<vmem>>
      %535 = tpu.memref_squeeze %534 : memref<1x1x1x128xf32, #tpu.memory_space<vmem>> -> memref<1x128xf32, #tpu.memory_space<vmem>>
      %536 = tpu.memref_slice %arg6[%221] : memref<2x!tpu.dma_semaphore, #tpu.memory_space<semaphore_mem>> -> memref<1x!tpu.dma_semaphore, #tpu.memory_space<semaphore_mem>>
      %537 = tpu.memref_squeeze %536 : memref<1x!tpu.dma_semaphore, #tpu.memory_space<semaphore_mem>> -> memref<!tpu.dma_semaphore, #tpu.memory_space<semaphore_mem>>
      tpu.enqueue_dma source(%533 : memref<1x128xf32, #tpu.memory_space<any>>) target(%535 : memref<1x128xf32, #tpu.memory_space<vmem>>) target_semaphore(%537 : memref<!tpu.dma_semaphore, #tpu.memory_space<semaphore_mem>>)
      %c35_i32 = arith.constant 35 : i32
      %538 = arith.addi %222, %c35_i32 : i32
      %c0_i32_414 = arith.constant 0 : i32
      %539 = arith.addi %538, %c0_i32_414 : i32
      %540 = arith.index_cast %539 : i32 to index
      %541 = memref.load %arg1[%540] : memref<320xi32, #tpu.memory_space<smem>>
      %c0_i32_415 = arith.constant 0 : i32
      %c0_i32_416 = arith.constant 0 : i32
      %542 = tpu.memref_slice %arg2[%541, %c0_i32_416] : memref<512x128xf32, #tpu.memory_space<any>> -> memref<1x128xf32, #tpu.memory_space<any>>
      %c7_i32 = arith.constant 7 : i32
      %c0_i32_417 = arith.constant 0 : i32
      %543 = tpu.memref_slice %arg5[%221, %c0_i32_415, %c7_i32, %c0_i32_417] : memref<2x5x8x128xf32, #tpu.memory_space<vmem>> -> memref<1x1x1x128xf32, #tpu.memory_space<vmem>>
      %544 = tpu.memref_squeeze %543 : memref<1x1x1x128xf32, #tpu.memory_space<vmem>> -> memref<1x128xf32, #tpu.memory_space<vmem>>
      %545 = tpu.memref_slice %arg6[%221] : memref<2x!tpu.dma_semaphore, #tpu.memory_space<semaphore_mem>> -> memref<1x!tpu.dma_semaphore, #tpu.memory_space<semaphore_mem>>
      %546 = tpu.memref_squeeze %545 : memref<1x!tpu.dma_semaphore, #tpu.memory_space<semaphore_mem>> -> memref<!tpu.dma_semaphore, #tpu.memory_space<semaphore_mem>>
      tpu.enqueue_dma source(%542 : memref<1x128xf32, #tpu.memory_space<any>>) target(%544 : memref<1x128xf32, #tpu.memory_space<vmem>>) target_semaphore(%546 : memref<!tpu.dma_semaphore, #tpu.memory_space<semaphore_mem>>)
      %c35_i32_418 = arith.constant 35 : i32
      %547 = arith.addi %222, %c35_i32_418 : i32
      %c1_i32_419 = arith.constant 1 : i32
      %548 = arith.addi %547, %c1_i32_419 : i32
      %549 = arith.index_cast %548 : i32 to index
      %550 = memref.load %arg1[%549] : memref<320xi32, #tpu.memory_space<smem>>
      %c1_i32_420 = arith.constant 1 : i32
      %c0_i32_421 = arith.constant 0 : i32
      %551 = tpu.memref_slice %arg2[%550, %c0_i32_421] : memref<512x128xf32, #tpu.memory_space<any>> -> memref<1x128xf32, #tpu.memory_space<any>>
      %c7_i32_422 = arith.constant 7 : i32
      %c0_i32_423 = arith.constant 0 : i32
      %552 = tpu.memref_slice %arg5[%221, %c1_i32_420, %c7_i32_422, %c0_i32_423] : memref<2x5x8x128xf32, #tpu.memory_space<vmem>> -> memref<1x1x1x128xf32, #tpu.memory_space<vmem>>
      %553 = tpu.memref_squeeze %552 : memref<1x1x1x128xf32, #tpu.memory_space<vmem>> -> memref<1x128xf32, #tpu.memory_space<vmem>>
      %554 = tpu.memref_slice %arg6[%221] : memref<2x!tpu.dma_semaphore, #tpu.memory_space<semaphore_mem>> -> memref<1x!tpu.dma_semaphore, #tpu.memory_space<semaphore_mem>>
      %555 = tpu.memref_squeeze %554 : memref<1x!tpu.dma_semaphore, #tpu.memory_space<semaphore_mem>> -> memref<!tpu.dma_semaphore, #tpu.memory_space<semaphore_mem>>
      tpu.enqueue_dma source(%551 : memref<1x128xf32, #tpu.memory_space<any>>) target(%553 : memref<1x128xf32, #tpu.memory_space<vmem>>) target_semaphore(%555 : memref<!tpu.dma_semaphore, #tpu.memory_space<semaphore_mem>>)
      %c35_i32_424 = arith.constant 35 : i32
      %556 = arith.addi %222, %c35_i32_424 : i32
      %c2_i32_425 = arith.constant 2 : i32
      %557 = arith.addi %556, %c2_i32_425 : i32
      %558 = arith.index_cast %557 : i32 to index
      %559 = memref.load %arg1[%558] : memref<320xi32, #tpu.memory_space<smem>>
      %c2_i32_426 = arith.constant 2 : i32
      %c0_i32_427 = arith.constant 0 : i32
      %560 = tpu.memref_slice %arg2[%559, %c0_i32_427] : memref<512x128xf32, #tpu.memory_space<any>> -> memref<1x128xf32, #tpu.memory_space<any>>
      %c7_i32_428 = arith.constant 7 : i32
      %c0_i32_429 = arith.constant 0 : i32
      %561 = tpu.memref_slice %arg5[%221, %c2_i32_426, %c7_i32_428, %c0_i32_429] : memref<2x5x8x128xf32, #tpu.memory_space<vmem>> -> memref<1x1x1x128xf32, #tpu.memory_space<vmem>>
      %562 = tpu.memref_squeeze %561 : memref<1x1x1x128xf32, #tpu.memory_space<vmem>> -> memref<1x128xf32, #tpu.memory_space<vmem>>
      %563 = tpu.memref_slice %arg6[%221] : memref<2x!tpu.dma_semaphore, #tpu.memory_space<semaphore_mem>> -> memref<1x!tpu.dma_semaphore, #tpu.memory_space<semaphore_mem>>
      %564 = tpu.memref_squeeze %563 : memref<1x!tpu.dma_semaphore, #tpu.memory_space<semaphore_mem>> -> memref<!tpu.dma_semaphore, #tpu.memory_space<semaphore_mem>>
      tpu.enqueue_dma source(%560 : memref<1x128xf32, #tpu.memory_space<any>>) target(%562 : memref<1x128xf32, #tpu.memory_space<vmem>>) target_semaphore(%564 : memref<!tpu.dma_semaphore, #tpu.memory_space<semaphore_mem>>)
      %c35_i32_430 = arith.constant 35 : i32
      %565 = arith.addi %222, %c35_i32_430 : i32
      %c3_i32_431 = arith.constant 3 : i32
      %566 = arith.addi %565, %c3_i32_431 : i32
      %567 = arith.index_cast %566 : i32 to index
      %568 = memref.load %arg1[%567] : memref<320xi32, #tpu.memory_space<smem>>
      %c3_i32_432 = arith.constant 3 : i32
      %c0_i32_433 = arith.constant 0 : i32
      %569 = tpu.memref_slice %arg2[%568, %c0_i32_433] : memref<512x128xf32, #tpu.memory_space<any>> -> memref<1x128xf32, #tpu.memory_space<any>>
      %c7_i32_434 = arith.constant 7 : i32
      %c0_i32_435 = arith.constant 0 : i32
      %570 = tpu.memref_slice %arg5[%221, %c3_i32_432, %c7_i32_434, %c0_i32_435] : memref<2x5x8x128xf32, #tpu.memory_space<vmem>> -> memref<1x1x1x128xf32, #tpu.memory_space<vmem>>
      %571 = tpu.memref_squeeze %570 : memref<1x1x1x128xf32, #tpu.memory_space<vmem>> -> memref<1x128xf32, #tpu.memory_space<vmem>>
      %572 = tpu.memref_slice %arg6[%221] : memref<2x!tpu.dma_semaphore, #tpu.memory_space<semaphore_mem>> -> memref<1x!tpu.dma_semaphore, #tpu.memory_space<semaphore_mem>>
      %573 = tpu.memref_squeeze %572 : memref<1x!tpu.dma_semaphore, #tpu.memory_space<semaphore_mem>> -> memref<!tpu.dma_semaphore, #tpu.memory_space<semaphore_mem>>
      tpu.enqueue_dma source(%569 : memref<1x128xf32, #tpu.memory_space<any>>) target(%571 : memref<1x128xf32, #tpu.memory_space<vmem>>) target_semaphore(%573 : memref<!tpu.dma_semaphore, #tpu.memory_space<semaphore_mem>>)
      %c35_i32_436 = arith.constant 35 : i32
      %574 = arith.addi %222, %c35_i32_436 : i32
      %c4_i32_437 = arith.constant 4 : i32
      %575 = arith.addi %574, %c4_i32_437 : i32
      %576 = arith.index_cast %575 : i32 to index
      %577 = memref.load %arg1[%576] : memref<320xi32, #tpu.memory_space<smem>>
      %c4_i32_438 = arith.constant 4 : i32
      %c0_i32_439 = arith.constant 0 : i32
      %578 = tpu.memref_slice %arg2[%577, %c0_i32_439] : memref<512x128xf32, #tpu.memory_space<any>> -> memref<1x128xf32, #tpu.memory_space<any>>
      %c7_i32_440 = arith.constant 7 : i32
      %c0_i32_441 = arith.constant 0 : i32
      %579 = tpu.memref_slice %arg5[%221, %c4_i32_438, %c7_i32_440, %c0_i32_441] : memref<2x5x8x128xf32, #tpu.memory_space<vmem>> -> memref<1x1x1x128xf32, #tpu.memory_space<vmem>>
      %580 = tpu.memref_squeeze %579 : memref<1x1x1x128xf32, #tpu.memory_space<vmem>> -> memref<1x128xf32, #tpu.memory_space<vmem>>
      %581 = tpu.memref_slice %arg6[%221] : memref<2x!tpu.dma_semaphore, #tpu.memory_space<semaphore_mem>> -> memref<1x!tpu.dma_semaphore, #tpu.memory_space<semaphore_mem>>
      %582 = tpu.memref_squeeze %581 : memref<1x!tpu.dma_semaphore, #tpu.memory_space<semaphore_mem>> -> memref<!tpu.dma_semaphore, #tpu.memory_space<semaphore_mem>>
      tpu.enqueue_dma source(%578 : memref<1x128xf32, #tpu.memory_space<any>>) target(%580 : memref<1x128xf32, #tpu.memory_space<vmem>>) target_semaphore(%582 : memref<!tpu.dma_semaphore, #tpu.memory_space<semaphore_mem>>)
    } else {
    }
    %c0_i32_2 = arith.constant 0 : i32
    %c0_i32_3 = arith.constant 0 : i32
    %c0_i32_4 = arith.constant 0 : i32
    %8 = tpu.memref_slice %arg2[%c0_i32_3, %c0_i32_4] : memref<512x128xf32, #tpu.memory_space<any>> -> memref<1x128xf32, #tpu.memory_space<any>>
    %c0_i32_5 = arith.constant 0 : i32
    %c0_i32_6 = arith.constant 0 : i32
    %9 = tpu.memref_slice %arg5[%0, %c0_i32_2, %c0_i32_5, %c0_i32_6] : memref<2x5x8x128xf32, #tpu.memory_space<vmem>> -> memref<1x1x1x128xf32, #tpu.memory_space<vmem>>
    %10 = tpu.memref_squeeze %9 : memref<1x1x1x128xf32, #tpu.memory_space<vmem>> -> memref<1x128xf32, #tpu.memory_space<vmem>>
    %11 = tpu.memref_slice %arg6[%0] : memref<2x!tpu.dma_semaphore, #tpu.memory_space<semaphore_mem>> -> memref<1x!tpu.dma_semaphore, #tpu.memory_space<semaphore_mem>>
    %12 = tpu.memref_squeeze %11 : memref<1x!tpu.dma_semaphore, #tpu.memory_space<semaphore_mem>> -> memref<!tpu.dma_semaphore, #tpu.memory_space<semaphore_mem>>
    tpu.wait_dma2 semaphore(%12 : memref<!tpu.dma_semaphore, #tpu.memory_space<semaphore_mem>>) src(%8 : memref<1x128xf32, #tpu.memory_space<any>>) dst(%10 : memref<1x128xf32, #tpu.memory_space<vmem>>)
    %c0_i32_7 = arith.constant 0 : i32
    %c0_i32_8 = arith.constant 0 : i32
    %c0_i32_9 = arith.constant 0 : i32
    %13 = tpu.memref_slice %arg2[%c0_i32_8, %c0_i32_9] : memref<512x128xf32, #tpu.memory_space<any>> -> memref<1x128xf32, #tpu.memory_space<any>>
    %c0_i32_10 = arith.constant 0 : i32
    %c0_i32_11 = arith.constant 0 : i32
    %14 = tpu.memref_slice %arg5[%0, %c0_i32_7, %c0_i32_10, %c0_i32_11] : memref<2x5x8x128xf32, #tpu.memory_space<vmem>> -> memref<1x1x1x128xf32, #tpu.memory_space<vmem>>
    %15 = tpu.memref_squeeze %14 : memref<1x1x1x128xf32, #tpu.memory_space<vmem>> -> memref<1x128xf32, #tpu.memory_space<vmem>>
    %16 = tpu.memref_slice %arg6[%0] : memref<2x!tpu.dma_semaphore, #tpu.memory_space<semaphore_mem>> -> memref<1x!tpu.dma_semaphore, #tpu.memory_space<semaphore_mem>>
    %17 = tpu.memref_squeeze %16 : memref<1x!tpu.dma_semaphore, #tpu.memory_space<semaphore_mem>> -> memref<!tpu.dma_semaphore, #tpu.memory_space<semaphore_mem>>
    tpu.wait_dma2 semaphore(%17 : memref<!tpu.dma_semaphore, #tpu.memory_space<semaphore_mem>>) src(%13 : memref<1x128xf32, #tpu.memory_space<any>>) dst(%15 : memref<1x128xf32, #tpu.memory_space<vmem>>)
    %c0_i32_12 = arith.constant 0 : i32
    %c0_i32_13 = arith.constant 0 : i32
    %c0_i32_14 = arith.constant 0 : i32
    %18 = tpu.memref_slice %arg2[%c0_i32_13, %c0_i32_14] : memref<512x128xf32, #tpu.memory_space<any>> -> memref<1x128xf32, #tpu.memory_space<any>>
    %c0_i32_15 = arith.constant 0 : i32
    %c0_i32_16 = arith.constant 0 : i32
    %19 = tpu.memref_slice %arg5[%0, %c0_i32_12, %c0_i32_15, %c0_i32_16] : memref<2x5x8x128xf32, #tpu.memory_space<vmem>> -> memref<1x1x1x128xf32, #tpu.memory_space<vmem>>
    %20 = tpu.memref_squeeze %19 : memref<1x1x1x128xf32, #tpu.memory_space<vmem>> -> memref<1x128xf32, #tpu.memory_space<vmem>>
    %21 = tpu.memref_slice %arg6[%0] : memref<2x!tpu.dma_semaphore, #tpu.memory_space<semaphore_mem>> -> memref<1x!tpu.dma_semaphore, #tpu.memory_space<semaphore_mem>>
    %22 = tpu.memref_squeeze %21 : memref<1x!tpu.dma_semaphore, #tpu.memory_space<semaphore_mem>> -> memref<!tpu.dma_semaphore, #tpu.memory_space<semaphore_mem>>
    tpu.wait_dma2 semaphore(%22 : memref<!tpu.dma_semaphore, #tpu.memory_space<semaphore_mem>>) src(%18 : memref<1x128xf32, #tpu.memory_space<any>>) dst(%20 : memref<1x128xf32, #tpu.memory_space<vmem>>)
    %c0_i32_17 = arith.constant 0 : i32
    %c0_i32_18 = arith.constant 0 : i32
    %c0_i32_19 = arith.constant 0 : i32
    %23 = tpu.memref_slice %arg2[%c0_i32_18, %c0_i32_19] : memref<512x128xf32, #tpu.memory_space<any>> -> memref<1x128xf32, #tpu.memory_space<any>>
    %c0_i32_20 = arith.constant 0 : i32
    %c0_i32_21 = arith.constant 0 : i32
    %24 = tpu.memref_slice %arg5[%0, %c0_i32_17, %c0_i32_20, %c0_i32_21] : memref<2x5x8x128xf32, #tpu.memory_space<vmem>> -> memref<1x1x1x128xf32, #tpu.memory_space<vmem>>
    %25 = tpu.memref_squeeze %24 : memref<1x1x1x128xf32, #tpu.memory_space<vmem>> -> memref<1x128xf32, #tpu.memory_space<vmem>>
    %26 = tpu.memref_slice %arg6[%0] : memref<2x!tpu.dma_semaphore, #tpu.memory_space<semaphore_mem>> -> memref<1x!tpu.dma_semaphore, #tpu.memory_space<semaphore_mem>>
    %27 = tpu.memref_squeeze %26 : memref<1x!tpu.dma_semaphore, #tpu.memory_space<semaphore_mem>> -> memref<!tpu.dma_semaphore, #tpu.memory_space<semaphore_mem>>
    tpu.wait_dma2 semaphore(%27 : memref<!tpu.dma_semaphore, #tpu.memory_space<semaphore_mem>>) src(%23 : memref<1x128xf32, #tpu.memory_space<any>>) dst(%25 : memref<1x128xf32, #tpu.memory_space<vmem>>)
    %c0_i32_22 = arith.constant 0 : i32
    %c0_i32_23 = arith.constant 0 : i32
    %c0_i32_24 = arith.constant 0 : i32
    %28 = tpu.memref_slice %arg2[%c0_i32_23, %c0_i32_24] : memref<512x128xf32, #tpu.memory_space<any>> -> memref<1x128xf32, #tpu.memory_space<any>>
    %c0_i32_25 = arith.constant 0 : i32
    %c0_i32_26 = arith.constant 0 : i32
    %29 = tpu.memref_slice %arg5[%0, %c0_i32_22, %c0_i32_25, %c0_i32_26] : memref<2x5x8x128xf32, #tpu.memory_space<vmem>> -> memref<1x1x1x128xf32, #tpu.memory_space<vmem>>
    %30 = tpu.memref_squeeze %29 : memref<1x1x1x128xf32, #tpu.memory_space<vmem>> -> memref<1x128xf32, #tpu.memory_space<vmem>>
    %31 = tpu.memref_slice %arg6[%0] : memref<2x!tpu.dma_semaphore, #tpu.memory_space<semaphore_mem>> -> memref<1x!tpu.dma_semaphore, #tpu.memory_space<semaphore_mem>>
    %32 = tpu.memref_squeeze %31 : memref<1x!tpu.dma_semaphore, #tpu.memory_space<semaphore_mem>> -> memref<!tpu.dma_semaphore, #tpu.memory_space<semaphore_mem>>
    tpu.wait_dma2 semaphore(%32 : memref<!tpu.dma_semaphore, #tpu.memory_space<semaphore_mem>>) src(%28 : memref<1x128xf32, #tpu.memory_space<any>>) dst(%30 : memref<1x128xf32, #tpu.memory_space<vmem>>)
    %c0_i32_27 = arith.constant 0 : i32
    %c0_i32_28 = arith.constant 0 : i32
    %c0_i32_29 = arith.constant 0 : i32
    %33 = tpu.memref_slice %arg2[%c0_i32_28, %c0_i32_29] : memref<512x128xf32, #tpu.memory_space<any>> -> memref<1x128xf32, #tpu.memory_space<any>>
    %c0_i32_30 = arith.constant 0 : i32
    %c0_i32_31 = arith.constant 0 : i32
    %34 = tpu.memref_slice %arg5[%0, %c0_i32_27, %c0_i32_30, %c0_i32_31] : memref<2x5x8x128xf32, #tpu.memory_space<vmem>> -> memref<1x1x1x128xf32, #tpu.memory_space<vmem>>
    %35 = tpu.memref_squeeze %34 : memref<1x1x1x128xf32, #tpu.memory_space<vmem>> -> memref<1x128xf32, #tpu.memory_space<vmem>>
    %36 = tpu.memref_slice %arg6[%0] : memref<2x!tpu.dma_semaphore, #tpu.memory_space<semaphore_mem>> -> memref<1x!tpu.dma_semaphore, #tpu.memory_space<semaphore_mem>>
    %37 = tpu.memref_squeeze %36 : memref<1x!tpu.dma_semaphore, #tpu.memory_space<semaphore_mem>> -> memref<!tpu.dma_semaphore, #tpu.memory_space<semaphore_mem>>
    tpu.wait_dma2 semaphore(%37 : memref<!tpu.dma_semaphore, #tpu.memory_space<semaphore_mem>>) src(%33 : memref<1x128xf32, #tpu.memory_space<any>>) dst(%35 : memref<1x128xf32, #tpu.memory_space<vmem>>)
    %c0_i32_32 = arith.constant 0 : i32
    %c0_i32_33 = arith.constant 0 : i32
    %c0_i32_34 = arith.constant 0 : i32
    %38 = tpu.memref_slice %arg2[%c0_i32_33, %c0_i32_34] : memref<512x128xf32, #tpu.memory_space<any>> -> memref<1x128xf32, #tpu.memory_space<any>>
    %c0_i32_35 = arith.constant 0 : i32
    %c0_i32_36 = arith.constant 0 : i32
    %39 = tpu.memref_slice %arg5[%0, %c0_i32_32, %c0_i32_35, %c0_i32_36] : memref<2x5x8x128xf32, #tpu.memory_space<vmem>> -> memref<1x1x1x128xf32, #tpu.memory_space<vmem>>
    %40 = tpu.memref_squeeze %39 : memref<1x1x1x128xf32, #tpu.memory_space<vmem>> -> memref<1x128xf32, #tpu.memory_space<vmem>>
    %41 = tpu.memref_slice %arg6[%0] : memref<2x!tpu.dma_semaphore, #tpu.memory_space<semaphore_mem>> -> memref<1x!tpu.dma_semaphore, #tpu.memory_space<semaphore_mem>>
    %42 = tpu.memref_squeeze %41 : memref<1x!tpu.dma_semaphore, #tpu.memory_space<semaphore_mem>> -> memref<!tpu.dma_semaphore, #tpu.memory_space<semaphore_mem>>
    tpu.wait_dma2 semaphore(%42 : memref<!tpu.dma_semaphore, #tpu.memory_space<semaphore_mem>>) src(%38 : memref<1x128xf32, #tpu.memory_space<any>>) dst(%40 : memref<1x128xf32, #tpu.memory_space<vmem>>)
    %c0_i32_37 = arith.constant 0 : i32
    %c0_i32_38 = arith.constant 0 : i32
    %c0_i32_39 = arith.constant 0 : i32
    %43 = tpu.memref_slice %arg2[%c0_i32_38, %c0_i32_39] : memref<512x128xf32, #tpu.memory_space<any>> -> memref<1x128xf32, #tpu.memory_space<any>>
    %c0_i32_40 = arith.constant 0 : i32
    %c0_i32_41 = arith.constant 0 : i32
    %44 = tpu.memref_slice %arg5[%0, %c0_i32_37, %c0_i32_40, %c0_i32_41] : memref<2x5x8x128xf32, #tpu.memory_space<vmem>> -> memref<1x1x1x128xf32, #tpu.memory_space<vmem>>
    %45 = tpu.memref_squeeze %44 : memref<1x1x1x128xf32, #tpu.memory_space<vmem>> -> memref<1x128xf32, #tpu.memory_space<vmem>>
    %46 = tpu.memref_slice %arg6[%0] : memref<2x!tpu.dma_semaphore, #tpu.memory_space<semaphore_mem>> -> memref<1x!tpu.dma_semaphore, #tpu.memory_space<semaphore_mem>>
    %47 = tpu.memref_squeeze %46 : memref<1x!tpu.dma_semaphore, #tpu.memory_space<semaphore_mem>> -> memref<!tpu.dma_semaphore, #tpu.memory_space<semaphore_mem>>
    tpu.wait_dma2 semaphore(%47 : memref<!tpu.dma_semaphore, #tpu.memory_space<semaphore_mem>>) src(%43 : memref<1x128xf32, #tpu.memory_space<any>>) dst(%45 : memref<1x128xf32, #tpu.memory_space<vmem>>)
    %c0_i32_42 = arith.constant 0 : i32
    %c0_i32_43 = arith.constant 0 : i32
    %c0_i32_44 = arith.constant 0 : i32
    %48 = tpu.memref_slice %arg2[%c0_i32_43, %c0_i32_44] : memref<512x128xf32, #tpu.memory_space<any>> -> memref<1x128xf32, #tpu.memory_space<any>>
    %c0_i32_45 = arith.constant 0 : i32
    %c0_i32_46 = arith.constant 0 : i32
    %49 = tpu.memref_slice %arg5[%0, %c0_i32_42, %c0_i32_45, %c0_i32_46] : memref<2x5x8x128xf32, #tpu.memory_space<vmem>> -> memref<1x1x1x128xf32, #tpu.memory_space<vmem>>
    %50 = tpu.memref_squeeze %49 : memref<1x1x1x128xf32, #tpu.memory_space<vmem>> -> memref<1x128xf32, #tpu.memory_space<vmem>>
    %51 = tpu.memref_slice %arg6[%0] : memref<2x!tpu.dma_semaphore, #tpu.memory_space<semaphore_mem>> -> memref<1x!tpu.dma_semaphore, #tpu.memory_space<semaphore_mem>>
    %52 = tpu.memref_squeeze %51 : memref<1x!tpu.dma_semaphore, #tpu.memory_space<semaphore_mem>> -> memref<!tpu.dma_semaphore, #tpu.memory_space<semaphore_mem>>
    tpu.wait_dma2 semaphore(%52 : memref<!tpu.dma_semaphore, #tpu.memory_space<semaphore_mem>>) src(%48 : memref<1x128xf32, #tpu.memory_space<any>>) dst(%50 : memref<1x128xf32, #tpu.memory_space<vmem>>)
    %c0_i32_47 = arith.constant 0 : i32
    %c0_i32_48 = arith.constant 0 : i32
    %c0_i32_49 = arith.constant 0 : i32
    %53 = tpu.memref_slice %arg2[%c0_i32_48, %c0_i32_49] : memref<512x128xf32, #tpu.memory_space<any>> -> memref<1x128xf32, #tpu.memory_space<any>>
    %c0_i32_50 = arith.constant 0 : i32
    %c0_i32_51 = arith.constant 0 : i32
    %54 = tpu.memref_slice %arg5[%0, %c0_i32_47, %c0_i32_50, %c0_i32_51] : memref<2x5x8x128xf32, #tpu.memory_space<vmem>> -> memref<1x1x1x128xf32, #tpu.memory_space<vmem>>
    %55 = tpu.memref_squeeze %54 : memref<1x1x1x128xf32, #tpu.memory_space<vmem>> -> memref<1x128xf32, #tpu.memory_space<vmem>>
    %56 = tpu.memref_slice %arg6[%0] : memref<2x!tpu.dma_semaphore, #tpu.memory_space<semaphore_mem>> -> memref<1x!tpu.dma_semaphore, #tpu.memory_space<semaphore_mem>>
    %57 = tpu.memref_squeeze %56 : memref<1x!tpu.dma_semaphore, #tpu.memory_space<semaphore_mem>> -> memref<!tpu.dma_semaphore, #tpu.memory_space<semaphore_mem>>
    tpu.wait_dma2 semaphore(%57 : memref<!tpu.dma_semaphore, #tpu.memory_space<semaphore_mem>>) src(%53 : memref<1x128xf32, #tpu.memory_space<any>>) dst(%55 : memref<1x128xf32, #tpu.memory_space<vmem>>)
    %c0_i32_52 = arith.constant 0 : i32
    %c0_i32_53 = arith.constant 0 : i32
    %c0_i32_54 = arith.constant 0 : i32
    %58 = tpu.memref_slice %arg2[%c0_i32_53, %c0_i32_54] : memref<512x128xf32, #tpu.memory_space<any>> -> memref<1x128xf32, #tpu.memory_space<any>>
    %c0_i32_55 = arith.constant 0 : i32
    %c0_i32_56 = arith.constant 0 : i32
    %59 = tpu.memref_slice %arg5[%0, %c0_i32_52, %c0_i32_55, %c0_i32_56] : memref<2x5x8x128xf32, #tpu.memory_space<vmem>> -> memref<1x1x1x128xf32, #tpu.memory_space<vmem>>
    %60 = tpu.memref_squeeze %59 : memref<1x1x1x128xf32, #tpu.memory_space<vmem>> -> memref<1x128xf32, #tpu.memory_space<vmem>>
    %61 = tpu.memref_slice %arg6[%0] : memref<2x!tpu.dma_semaphore, #tpu.memory_space<semaphore_mem>> -> memref<1x!tpu.dma_semaphore, #tpu.memory_space<semaphore_mem>>
    %62 = tpu.memref_squeeze %61 : memref<1x!tpu.dma_semaphore, #tpu.memory_space<semaphore_mem>> -> memref<!tpu.dma_semaphore, #tpu.memory_space<semaphore_mem>>
    tpu.wait_dma2 semaphore(%62 : memref<!tpu.dma_semaphore, #tpu.memory_space<semaphore_mem>>) src(%58 : memref<1x128xf32, #tpu.memory_space<any>>) dst(%60 : memref<1x128xf32, #tpu.memory_space<vmem>>)
    %c0_i32_57 = arith.constant 0 : i32
    %c0_i32_58 = arith.constant 0 : i32
    %c0_i32_59 = arith.constant 0 : i32
    %63 = tpu.memref_slice %arg2[%c0_i32_58, %c0_i32_59] : memref<512x128xf32, #tpu.memory_space<any>> -> memref<1x128xf32, #tpu.memory_space<any>>
    %c0_i32_60 = arith.constant 0 : i32
    %c0_i32_61 = arith.constant 0 : i32
    %64 = tpu.memref_slice %arg5[%0, %c0_i32_57, %c0_i32_60, %c0_i32_61] : memref<2x5x8x128xf32, #tpu.memory_space<vmem>> -> memref<1x1x1x128xf32, #tpu.memory_space<vmem>>
    %65 = tpu.memref_squeeze %64 : memref<1x1x1x128xf32, #tpu.memory_space<vmem>> -> memref<1x128xf32, #tpu.memory_space<vmem>>
    %66 = tpu.memref_slice %arg6[%0] : memref<2x!tpu.dma_semaphore, #tpu.memory_space<semaphore_mem>> -> memref<1x!tpu.dma_semaphore, #tpu.memory_space<semaphore_mem>>
    %67 = tpu.memref_squeeze %66 : memref<1x!tpu.dma_semaphore, #tpu.memory_space<semaphore_mem>> -> memref<!tpu.dma_semaphore, #tpu.memory_space<semaphore_mem>>
    tpu.wait_dma2 semaphore(%67 : memref<!tpu.dma_semaphore, #tpu.memory_space<semaphore_mem>>) src(%63 : memref<1x128xf32, #tpu.memory_space<any>>) dst(%65 : memref<1x128xf32, #tpu.memory_space<vmem>>)
    %c0_i32_62 = arith.constant 0 : i32
    %c0_i32_63 = arith.constant 0 : i32
    %c0_i32_64 = arith.constant 0 : i32
    %68 = tpu.memref_slice %arg2[%c0_i32_63, %c0_i32_64] : memref<512x128xf32, #tpu.memory_space<any>> -> memref<1x128xf32, #tpu.memory_space<any>>
    %c0_i32_65 = arith.constant 0 : i32
    %c0_i32_66 = arith.constant 0 : i32
    %69 = tpu.memref_slice %arg5[%0, %c0_i32_62, %c0_i32_65, %c0_i32_66] : memref<2x5x8x128xf32, #tpu.memory_space<vmem>> -> memref<1x1x1x128xf32, #tpu.memory_space<vmem>>
    %70 = tpu.memref_squeeze %69 : memref<1x1x1x128xf32, #tpu.memory_space<vmem>> -> memref<1x128xf32, #tpu.memory_space<vmem>>
    %71 = tpu.memref_slice %arg6[%0] : memref<2x!tpu.dma_semaphore, #tpu.memory_space<semaphore_mem>> -> memref<1x!tpu.dma_semaphore, #tpu.memory_space<semaphore_mem>>
    %72 = tpu.memref_squeeze %71 : memref<1x!tpu.dma_semaphore, #tpu.memory_space<semaphore_mem>> -> memref<!tpu.dma_semaphore, #tpu.memory_space<semaphore_mem>>
    tpu.wait_dma2 semaphore(%72 : memref<!tpu.dma_semaphore, #tpu.memory_space<semaphore_mem>>) src(%68 : memref<1x128xf32, #tpu.memory_space<any>>) dst(%70 : memref<1x128xf32, #tpu.memory_space<vmem>>)
    %c0_i32_67 = arith.constant 0 : i32
    %c0_i32_68 = arith.constant 0 : i32
    %c0_i32_69 = arith.constant 0 : i32
    %73 = tpu.memref_slice %arg2[%c0_i32_68, %c0_i32_69] : memref<512x128xf32, #tpu.memory_space<any>> -> memref<1x128xf32, #tpu.memory_space<any>>
    %c0_i32_70 = arith.constant 0 : i32
    %c0_i32_71 = arith.constant 0 : i32
    %74 = tpu.memref_slice %arg5[%0, %c0_i32_67, %c0_i32_70, %c0_i32_71] : memref<2x5x8x128xf32, #tpu.memory_space<vmem>> -> memref<1x1x1x128xf32, #tpu.memory_space<vmem>>
    %75 = tpu.memref_squeeze %74 : memref<1x1x1x128xf32, #tpu.memory_space<vmem>> -> memref<1x128xf32, #tpu.memory_space<vmem>>
    %76 = tpu.memref_slice %arg6[%0] : memref<2x!tpu.dma_semaphore, #tpu.memory_space<semaphore_mem>> -> memref<1x!tpu.dma_semaphore, #tpu.memory_space<semaphore_mem>>
    %77 = tpu.memref_squeeze %76 : memref<1x!tpu.dma_semaphore, #tpu.memory_space<semaphore_mem>> -> memref<!tpu.dma_semaphore, #tpu.memory_space<semaphore_mem>>
    tpu.wait_dma2 semaphore(%77 : memref<!tpu.dma_semaphore, #tpu.memory_space<semaphore_mem>>) src(%73 : memref<1x128xf32, #tpu.memory_space<any>>) dst(%75 : memref<1x128xf32, #tpu.memory_space<vmem>>)
    %c0_i32_72 = arith.constant 0 : i32
    %c0_i32_73 = arith.constant 0 : i32
    %c0_i32_74 = arith.constant 0 : i32
    %78 = tpu.memref_slice %arg2[%c0_i32_73, %c0_i32_74] : memref<512x128xf32, #tpu.memory_space<any>> -> memref<1x128xf32, #tpu.memory_space<any>>
    %c0_i32_75 = arith.constant 0 : i32
    %c0_i32_76 = arith.constant 0 : i32
    %79 = tpu.memref_slice %arg5[%0, %c0_i32_72, %c0_i32_75, %c0_i32_76] : memref<2x5x8x128xf32, #tpu.memory_space<vmem>> -> memref<1x1x1x128xf32, #tpu.memory_space<vmem>>
    %80 = tpu.memref_squeeze %79 : memref<1x1x1x128xf32, #tpu.memory_space<vmem>> -> memref<1x128xf32, #tpu.memory_space<vmem>>
    %81 = tpu.memref_slice %arg6[%0] : memref<2x!tpu.dma_semaphore, #tpu.memory_space<semaphore_mem>> -> memref<1x!tpu.dma_semaphore, #tpu.memory_space<semaphore_mem>>
    %82 = tpu.memref_squeeze %81 : memref<1x!tpu.dma_semaphore, #tpu.memory_space<semaphore_mem>> -> memref<!tpu.dma_semaphore, #tpu.memory_space<semaphore_mem>>
    tpu.wait_dma2 semaphore(%82 : memref<!tpu.dma_semaphore, #tpu.memory_space<semaphore_mem>>) src(%78 : memref<1x128xf32, #tpu.memory_space<any>>) dst(%80 : memref<1x128xf32, #tpu.memory_space<vmem>>)
    %c0_i32_77 = arith.constant 0 : i32
    %c0_i32_78 = arith.constant 0 : i32
    %c0_i32_79 = arith.constant 0 : i32
    %83 = tpu.memref_slice %arg2[%c0_i32_78, %c0_i32_79] : memref<512x128xf32, #tpu.memory_space<any>> -> memref<1x128xf32, #tpu.memory_space<any>>
    %c0_i32_80 = arith.constant 0 : i32
    %c0_i32_81 = arith.constant 0 : i32
    %84 = tpu.memref_slice %arg5[%0, %c0_i32_77, %c0_i32_80, %c0_i32_81] : memref<2x5x8x128xf32, #tpu.memory_space<vmem>> -> memref<1x1x1x128xf32, #tpu.memory_space<vmem>>
    %85 = tpu.memref_squeeze %84 : memref<1x1x1x128xf32, #tpu.memory_space<vmem>> -> memref<1x128xf32, #tpu.memory_space<vmem>>
    %86 = tpu.memref_slice %arg6[%0] : memref<2x!tpu.dma_semaphore, #tpu.memory_space<semaphore_mem>> -> memref<1x!tpu.dma_semaphore, #tpu.memory_space<semaphore_mem>>
    %87 = tpu.memref_squeeze %86 : memref<1x!tpu.dma_semaphore, #tpu.memory_space<semaphore_mem>> -> memref<!tpu.dma_semaphore, #tpu.memory_space<semaphore_mem>>
    tpu.wait_dma2 semaphore(%87 : memref<!tpu.dma_semaphore, #tpu.memory_space<semaphore_mem>>) src(%83 : memref<1x128xf32, #tpu.memory_space<any>>) dst(%85 : memref<1x128xf32, #tpu.memory_space<vmem>>)
    %c0_i32_82 = arith.constant 0 : i32
    %c0_i32_83 = arith.constant 0 : i32
    %c0_i32_84 = arith.constant 0 : i32
    %88 = tpu.memref_slice %arg2[%c0_i32_83, %c0_i32_84] : memref<512x128xf32, #tpu.memory_space<any>> -> memref<1x128xf32, #tpu.memory_space<any>>
    %c0_i32_85 = arith.constant 0 : i32
    %c0_i32_86 = arith.constant 0 : i32
    %89 = tpu.memref_slice %arg5[%0, %c0_i32_82, %c0_i32_85, %c0_i32_86] : memref<2x5x8x128xf32, #tpu.memory_space<vmem>> -> memref<1x1x1x128xf32, #tpu.memory_space<vmem>>
    %90 = tpu.memref_squeeze %89 : memref<1x1x1x128xf32, #tpu.memory_space<vmem>> -> memref<1x128xf32, #tpu.memory_space<vmem>>
    %91 = tpu.memref_slice %arg6[%0] : memref<2x!tpu.dma_semaphore, #tpu.memory_space<semaphore_mem>> -> memref<1x!tpu.dma_semaphore, #tpu.memory_space<semaphore_mem>>
    %92 = tpu.memref_squeeze %91 : memref<1x!tpu.dma_semaphore, #tpu.memory_space<semaphore_mem>> -> memref<!tpu.dma_semaphore, #tpu.memory_space<semaphore_mem>>
    tpu.wait_dma2 semaphore(%92 : memref<!tpu.dma_semaphore, #tpu.memory_space<semaphore_mem>>) src(%88 : memref<1x128xf32, #tpu.memory_space<any>>) dst(%90 : memref<1x128xf32, #tpu.memory_space<vmem>>)
    %c0_i32_87 = arith.constant 0 : i32
    %c0_i32_88 = arith.constant 0 : i32
    %c0_i32_89 = arith.constant 0 : i32
    %93 = tpu.memref_slice %arg2[%c0_i32_88, %c0_i32_89] : memref<512x128xf32, #tpu.memory_space<any>> -> memref<1x128xf32, #tpu.memory_space<any>>
    %c0_i32_90 = arith.constant 0 : i32
    %c0_i32_91 = arith.constant 0 : i32
    %94 = tpu.memref_slice %arg5[%0, %c0_i32_87, %c0_i32_90, %c0_i32_91] : memref<2x5x8x128xf32, #tpu.memory_space<vmem>> -> memref<1x1x1x128xf32, #tpu.memory_space<vmem>>
    %95 = tpu.memref_squeeze %94 : memref<1x1x1x128xf32, #tpu.memory_space<vmem>> -> memref<1x128xf32, #tpu.memory_space<vmem>>
    %96 = tpu.memref_slice %arg6[%0] : memref<2x!tpu.dma_semaphore, #tpu.memory_space<semaphore_mem>> -> memref<1x!tpu.dma_semaphore, #tpu.memory_space<semaphore_mem>>
    %97 = tpu.memref_squeeze %96 : memref<1x!tpu.dma_semaphore, #tpu.memory_space<semaphore_mem>> -> memref<!tpu.dma_semaphore, #tpu.memory_space<semaphore_mem>>
    tpu.wait_dma2 semaphore(%97 : memref<!tpu.dma_semaphore, #tpu.memory_space<semaphore_mem>>) src(%93 : memref<1x128xf32, #tpu.memory_space<any>>) dst(%95 : memref<1x128xf32, #tpu.memory_space<vmem>>)
    %c0_i32_92 = arith.constant 0 : i32
    %c0_i32_93 = arith.constant 0 : i32
    %c0_i32_94 = arith.constant 0 : i32
    %98 = tpu.memref_slice %arg2[%c0_i32_93, %c0_i32_94] : memref<512x128xf32, #tpu.memory_space<any>> -> memref<1x128xf32, #tpu.memory_space<any>>
    %c0_i32_95 = arith.constant 0 : i32
    %c0_i32_96 = arith.constant 0 : i32
    %99 = tpu.memref_slice %arg5[%0, %c0_i32_92, %c0_i32_95, %c0_i32_96] : memref<2x5x8x128xf32, #tpu.memory_space<vmem>> -> memref<1x1x1x128xf32, #tpu.memory_space<vmem>>
    %100 = tpu.memref_squeeze %99 : memref<1x1x1x128xf32, #tpu.memory_space<vmem>> -> memref<1x128xf32, #tpu.memory_space<vmem>>
    %101 = tpu.memref_slice %arg6[%0] : memref<2x!tpu.dma_semaphore, #tpu.memory_space<semaphore_mem>> -> memref<1x!tpu.dma_semaphore, #tpu.memory_space<semaphore_mem>>
    %102 = tpu.memref_squeeze %101 : memref<1x!tpu.dma_semaphore, #tpu.memory_space<semaphore_mem>> -> memref<!tpu.dma_semaphore, #tpu.memory_space<semaphore_mem>>
    tpu.wait_dma2 semaphore(%102 : memref<!tpu.dma_semaphore, #tpu.memory_space<semaphore_mem>>) src(%98 : memref<1x128xf32, #tpu.memory_space<any>>) dst(%100 : memref<1x128xf32, #tpu.memory_space<vmem>>)
    %c0_i32_97 = arith.constant 0 : i32
    %c0_i32_98 = arith.constant 0 : i32
    %c0_i32_99 = arith.constant 0 : i32
    %103 = tpu.memref_slice %arg2[%c0_i32_98, %c0_i32_99] : memref<512x128xf32, #tpu.memory_space<any>> -> memref<1x128xf32, #tpu.memory_space<any>>
    %c0_i32_100 = arith.constant 0 : i32
    %c0_i32_101 = arith.constant 0 : i32
    %104 = tpu.memref_slice %arg5[%0, %c0_i32_97, %c0_i32_100, %c0_i32_101] : memref<2x5x8x128xf32, #tpu.memory_space<vmem>> -> memref<1x1x1x128xf32, #tpu.memory_space<vmem>>
    %105 = tpu.memref_squeeze %104 : memref<1x1x1x128xf32, #tpu.memory_space<vmem>> -> memref<1x128xf32, #tpu.memory_space<vmem>>
    %106 = tpu.memref_slice %arg6[%0] : memref<2x!tpu.dma_semaphore, #tpu.memory_space<semaphore_mem>> -> memref<1x!tpu.dma_semaphore, #tpu.memory_space<semaphore_mem>>
    %107 = tpu.memref_squeeze %106 : memref<1x!tpu.dma_semaphore, #tpu.memory_space<semaphore_mem>> -> memref<!tpu.dma_semaphore, #tpu.memory_space<semaphore_mem>>
    tpu.wait_dma2 semaphore(%107 : memref<!tpu.dma_semaphore, #tpu.memory_space<semaphore_mem>>) src(%103 : memref<1x128xf32, #tpu.memory_space<any>>) dst(%105 : memref<1x128xf32, #tpu.memory_space<vmem>>)
    %c0_i32_102 = arith.constant 0 : i32
    %c0_i32_103 = arith.constant 0 : i32
    %c0_i32_104 = arith.constant 0 : i32
    %108 = tpu.memref_slice %arg2[%c0_i32_103, %c0_i32_104] : memref<512x128xf32, #tpu.memory_space<any>> -> memref<1x128xf32, #tpu.memory_space<any>>
    %c0_i32_105 = arith.constant 0 : i32
    %c0_i32_106 = arith.constant 0 : i32
    %109 = tpu.memref_slice %arg5[%0, %c0_i32_102, %c0_i32_105, %c0_i32_106] : memref<2x5x8x128xf32, #tpu.memory_space<vmem>> -> memref<1x1x1x128xf32, #tpu.memory_space<vmem>>
    %110 = tpu.memref_squeeze %109 : memref<1x1x1x128xf32, #tpu.memory_space<vmem>> -> memref<1x128xf32, #tpu.memory_space<vmem>>
    %111 = tpu.memref_slice %arg6[%0] : memref<2x!tpu.dma_semaphore, #tpu.memory_space<semaphore_mem>> -> memref<1x!tpu.dma_semaphore, #tpu.memory_space<semaphore_mem>>
    %112 = tpu.memref_squeeze %111 : memref<1x!tpu.dma_semaphore, #tpu.memory_space<semaphore_mem>> -> memref<!tpu.dma_semaphore, #tpu.memory_space<semaphore_mem>>
    tpu.wait_dma2 semaphore(%112 : memref<!tpu.dma_semaphore, #tpu.memory_space<semaphore_mem>>) src(%108 : memref<1x128xf32, #tpu.memory_space<any>>) dst(%110 : memref<1x128xf32, #tpu.memory_space<vmem>>)
    %c0_i32_107 = arith.constant 0 : i32
    %c0_i32_108 = arith.constant 0 : i32
    %c0_i32_109 = arith.constant 0 : i32
    %113 = tpu.memref_slice %arg2[%c0_i32_108, %c0_i32_109] : memref<512x128xf32, #tpu.memory_space<any>> -> memref<1x128xf32, #tpu.memory_space<any>>
    %c0_i32_110 = arith.constant 0 : i32
    %c0_i32_111 = arith.constant 0 : i32
    %114 = tpu.memref_slice %arg5[%0, %c0_i32_107, %c0_i32_110, %c0_i32_111] : memref<2x5x8x128xf32, #tpu.memory_space<vmem>> -> memref<1x1x1x128xf32, #tpu.memory_space<vmem>>
    %115 = tpu.memref_squeeze %114 : memref<1x1x1x128xf32, #tpu.memory_space<vmem>> -> memref<1x128xf32, #tpu.memory_space<vmem>>
    %116 = tpu.memref_slice %arg6[%0] : memref<2x!tpu.dma_semaphore, #tpu.memory_space<semaphore_mem>> -> memref<1x!tpu.dma_semaphore, #tpu.memory_space<semaphore_mem>>
    %117 = tpu.memref_squeeze %116 : memref<1x!tpu.dma_semaphore, #tpu.memory_space<semaphore_mem>> -> memref<!tpu.dma_semaphore, #tpu.memory_space<semaphore_mem>>
    tpu.wait_dma2 semaphore(%117 : memref<!tpu.dma_semaphore, #tpu.memory_space<semaphore_mem>>) src(%113 : memref<1x128xf32, #tpu.memory_space<any>>) dst(%115 : memref<1x128xf32, #tpu.memory_space<vmem>>)
    %c0_i32_112 = arith.constant 0 : i32
    %c0_i32_113 = arith.constant 0 : i32
    %c0_i32_114 = arith.constant 0 : i32
    %118 = tpu.memref_slice %arg2[%c0_i32_113, %c0_i32_114] : memref<512x128xf32, #tpu.memory_space<any>> -> memref<1x128xf32, #tpu.memory_space<any>>
    %c0_i32_115 = arith.constant 0 : i32
    %c0_i32_116 = arith.constant 0 : i32
    %119 = tpu.memref_slice %arg5[%0, %c0_i32_112, %c0_i32_115, %c0_i32_116] : memref<2x5x8x128xf32, #tpu.memory_space<vmem>> -> memref<1x1x1x128xf32, #tpu.memory_space<vmem>>
    %120 = tpu.memref_squeeze %119 : memref<1x1x1x128xf32, #tpu.memory_space<vmem>> -> memref<1x128xf32, #tpu.memory_space<vmem>>
    %121 = tpu.memref_slice %arg6[%0] : memref<2x!tpu.dma_semaphore, #tpu.memory_space<semaphore_mem>> -> memref<1x!tpu.dma_semaphore, #tpu.memory_space<semaphore_mem>>
    %122 = tpu.memref_squeeze %121 : memref<1x!tpu.dma_semaphore, #tpu.memory_space<semaphore_mem>> -> memref<!tpu.dma_semaphore, #tpu.memory_space<semaphore_mem>>
    tpu.wait_dma2 semaphore(%122 : memref<!tpu.dma_semaphore, #tpu.memory_space<semaphore_mem>>) src(%118 : memref<1x128xf32, #tpu.memory_space<any>>) dst(%120 : memref<1x128xf32, #tpu.memory_space<vmem>>)
    %c0_i32_117 = arith.constant 0 : i32
    %c0_i32_118 = arith.constant 0 : i32
    %c0_i32_119 = arith.constant 0 : i32
    %123 = tpu.memref_slice %arg2[%c0_i32_118, %c0_i32_119] : memref<512x128xf32, #tpu.memory_space<any>> -> memref<1x128xf32, #tpu.memory_space<any>>
    %c0_i32_120 = arith.constant 0 : i32
    %c0_i32_121 = arith.constant 0 : i32
    %124 = tpu.memref_slice %arg5[%0, %c0_i32_117, %c0_i32_120, %c0_i32_121] : memref<2x5x8x128xf32, #tpu.memory_space<vmem>> -> memref<1x1x1x128xf32, #tpu.memory_space<vmem>>
    %125 = tpu.memref_squeeze %124 : memref<1x1x1x128xf32, #tpu.memory_space<vmem>> -> memref<1x128xf32, #tpu.memory_space<vmem>>
    %126 = tpu.memref_slice %arg6[%0] : memref<2x!tpu.dma_semaphore, #tpu.memory_space<semaphore_mem>> -> memref<1x!tpu.dma_semaphore, #tpu.memory_space<semaphore_mem>>
    %127 = tpu.memref_squeeze %126 : memref<1x!tpu.dma_semaphore, #tpu.memory_space<semaphore_mem>> -> memref<!tpu.dma_semaphore, #tpu.memory_space<semaphore_mem>>
    tpu.wait_dma2 semaphore(%127 : memref<!tpu.dma_semaphore, #tpu.memory_space<semaphore_mem>>) src(%123 : memref<1x128xf32, #tpu.memory_space<any>>) dst(%125 : memref<1x128xf32, #tpu.memory_space<vmem>>)
    %c0_i32_122 = arith.constant 0 : i32
    %c0_i32_123 = arith.constant 0 : i32
    %c0_i32_124 = arith.constant 0 : i32
    %128 = tpu.memref_slice %arg2[%c0_i32_123, %c0_i32_124] : memref<512x128xf32, #tpu.memory_space<any>> -> memref<1x128xf32, #tpu.memory_space<any>>
    %c0_i32_125 = arith.constant 0 : i32
    %c0_i32_126 = arith.constant 0 : i32
    %129 = tpu.memref_slice %arg5[%0, %c0_i32_122, %c0_i32_125, %c0_i32_126] : memref<2x5x8x128xf32, #tpu.memory_space<vmem>> -> memref<1x1x1x128xf32, #tpu.memory_space<vmem>>
    %130 = tpu.memref_squeeze %129 : memref<1x1x1x128xf32, #tpu.memory_space<vmem>> -> memref<1x128xf32, #tpu.memory_space<vmem>>
    %131 = tpu.memref_slice %arg6[%0] : memref<2x!tpu.dma_semaphore, #tpu.memory_space<semaphore_mem>> -> memref<1x!tpu.dma_semaphore, #tpu.memory_space<semaphore_mem>>
    %132 = tpu.memref_squeeze %131 : memref<1x!tpu.dma_semaphore, #tpu.memory_space<semaphore_mem>> -> memref<!tpu.dma_semaphore, #tpu.memory_space<semaphore_mem>>
    tpu.wait_dma2 semaphore(%132 : memref<!tpu.dma_semaphore, #tpu.memory_space<semaphore_mem>>) src(%128 : memref<1x128xf32, #tpu.memory_space<any>>) dst(%130 : memref<1x128xf32, #tpu.memory_space<vmem>>)
    %c0_i32_127 = arith.constant 0 : i32
    %c0_i32_128 = arith.constant 0 : i32
    %c0_i32_129 = arith.constant 0 : i32
    %133 = tpu.memref_slice %arg2[%c0_i32_128, %c0_i32_129] : memref<512x128xf32, #tpu.memory_space<any>> -> memref<1x128xf32, #tpu.memory_space<any>>
    %c0_i32_130 = arith.constant 0 : i32
    %c0_i32_131 = arith.constant 0 : i32
    %134 = tpu.memref_slice %arg5[%0, %c0_i32_127, %c0_i32_130, %c0_i32_131] : memref<2x5x8x128xf32, #tpu.memory_space<vmem>> -> memref<1x1x1x128xf32, #tpu.memory_space<vmem>>
    %135 = tpu.memref_squeeze %134 : memref<1x1x1x128xf32, #tpu.memory_space<vmem>> -> memref<1x128xf32, #tpu.memory_space<vmem>>
    %136 = tpu.memref_slice %arg6[%0] : memref<2x!tpu.dma_semaphore, #tpu.memory_space<semaphore_mem>> -> memref<1x!tpu.dma_semaphore, #tpu.memory_space<semaphore_mem>>
    %137 = tpu.memref_squeeze %136 : memref<1x!tpu.dma_semaphore, #tpu.memory_space<semaphore_mem>> -> memref<!tpu.dma_semaphore, #tpu.memory_space<semaphore_mem>>
    tpu.wait_dma2 semaphore(%137 : memref<!tpu.dma_semaphore, #tpu.memory_space<semaphore_mem>>) src(%133 : memref<1x128xf32, #tpu.memory_space<any>>) dst(%135 : memref<1x128xf32, #tpu.memory_space<vmem>>)
    %c0_i32_132 = arith.constant 0 : i32
    %c0_i32_133 = arith.constant 0 : i32
    %c0_i32_134 = arith.constant 0 : i32
    %138 = tpu.memref_slice %arg2[%c0_i32_133, %c0_i32_134] : memref<512x128xf32, #tpu.memory_space<any>> -> memref<1x128xf32, #tpu.memory_space<any>>
    %c0_i32_135 = arith.constant 0 : i32
    %c0_i32_136 = arith.constant 0 : i32
    %139 = tpu.memref_slice %arg5[%0, %c0_i32_132, %c0_i32_135, %c0_i32_136] : memref<2x5x8x128xf32, #tpu.memory_space<vmem>> -> memref<1x1x1x128xf32, #tpu.memory_space<vmem>>
    %140 = tpu.memref_squeeze %139 : memref<1x1x1x128xf32, #tpu.memory_space<vmem>> -> memref<1x128xf32, #tpu.memory_space<vmem>>
    %141 = tpu.memref_slice %arg6[%0] : memref<2x!tpu.dma_semaphore, #tpu.memory_space<semaphore_mem>> -> memref<1x!tpu.dma_semaphore, #tpu.memory_space<semaphore_mem>>
    %142 = tpu.memref_squeeze %141 : memref<1x!tpu.dma_semaphore, #tpu.memory_space<semaphore_mem>> -> memref<!tpu.dma_semaphore, #tpu.memory_space<semaphore_mem>>
    tpu.wait_dma2 semaphore(%142 : memref<!tpu.dma_semaphore, #tpu.memory_space<semaphore_mem>>) src(%138 : memref<1x128xf32, #tpu.memory_space<any>>) dst(%140 : memref<1x128xf32, #tpu.memory_space<vmem>>)
    %c0_i32_137 = arith.constant 0 : i32
    %c0_i32_138 = arith.constant 0 : i32
    %c0_i32_139 = arith.constant 0 : i32
    %143 = tpu.memref_slice %arg2[%c0_i32_138, %c0_i32_139] : memref<512x128xf32, #tpu.memory_space<any>> -> memref<1x128xf32, #tpu.memory_space<any>>
    %c0_i32_140 = arith.constant 0 : i32
    %c0_i32_141 = arith.constant 0 : i32
    %144 = tpu.memref_slice %arg5[%0, %c0_i32_137, %c0_i32_140, %c0_i32_141] : memref<2x5x8x128xf32, #tpu.memory_space<vmem>> -> memref<1x1x1x128xf32, #tpu.memory_space<vmem>>
    %145 = tpu.memref_squeeze %144 : memref<1x1x1x128xf32, #tpu.memory_space<vmem>> -> memref<1x128xf32, #tpu.memory_space<vmem>>
    %146 = tpu.memref_slice %arg6[%0] : memref<2x!tpu.dma_semaphore, #tpu.memory_space<semaphore_mem>> -> memref<1x!tpu.dma_semaphore, #tpu.memory_space<semaphore_mem>>
    %147 = tpu.memref_squeeze %146 : memref<1x!tpu.dma_semaphore, #tpu.memory_space<semaphore_mem>> -> memref<!tpu.dma_semaphore, #tpu.memory_space<semaphore_mem>>
    tpu.wait_dma2 semaphore(%147 : memref<!tpu.dma_semaphore, #tpu.memory_space<semaphore_mem>>) src(%143 : memref<1x128xf32, #tpu.memory_space<any>>) dst(%145 : memref<1x128xf32, #tpu.memory_space<vmem>>)
    %c0_i32_142 = arith.constant 0 : i32
    %c0_i32_143 = arith.constant 0 : i32
    %c0_i32_144 = arith.constant 0 : i32
    %148 = tpu.memref_slice %arg2[%c0_i32_143, %c0_i32_144] : memref<512x128xf32, #tpu.memory_space<any>> -> memref<1x128xf32, #tpu.memory_space<any>>
    %c0_i32_145 = arith.constant 0 : i32
    %c0_i32_146 = arith.constant 0 : i32
    %149 = tpu.memref_slice %arg5[%0, %c0_i32_142, %c0_i32_145, %c0_i32_146] : memref<2x5x8x128xf32, #tpu.memory_space<vmem>> -> memref<1x1x1x128xf32, #tpu.memory_space<vmem>>
    %150 = tpu.memref_squeeze %149 : memref<1x1x1x128xf32, #tpu.memory_space<vmem>> -> memref<1x128xf32, #tpu.memory_space<vmem>>
    %151 = tpu.memref_slice %arg6[%0] : memref<2x!tpu.dma_semaphore, #tpu.memory_space<semaphore_mem>> -> memref<1x!tpu.dma_semaphore, #tpu.memory_space<semaphore_mem>>
    %152 = tpu.memref_squeeze %151 : memref<1x!tpu.dma_semaphore, #tpu.memory_space<semaphore_mem>> -> memref<!tpu.dma_semaphore, #tpu.memory_space<semaphore_mem>>
    tpu.wait_dma2 semaphore(%152 : memref<!tpu.dma_semaphore, #tpu.memory_space<semaphore_mem>>) src(%148 : memref<1x128xf32, #tpu.memory_space<any>>) dst(%150 : memref<1x128xf32, #tpu.memory_space<vmem>>)
    %c0_i32_147 = arith.constant 0 : i32
    %c0_i32_148 = arith.constant 0 : i32
    %c0_i32_149 = arith.constant 0 : i32
    %153 = tpu.memref_slice %arg2[%c0_i32_148, %c0_i32_149] : memref<512x128xf32, #tpu.memory_space<any>> -> memref<1x128xf32, #tpu.memory_space<any>>
    %c0_i32_150 = arith.constant 0 : i32
    %c0_i32_151 = arith.constant 0 : i32
    %154 = tpu.memref_slice %arg5[%0, %c0_i32_147, %c0_i32_150, %c0_i32_151] : memref<2x5x8x128xf32, #tpu.memory_space<vmem>> -> memref<1x1x1x128xf32, #tpu.memory_space<vmem>>
    %155 = tpu.memref_squeeze %154 : memref<1x1x1x128xf32, #tpu.memory_space<vmem>> -> memref<1x128xf32, #tpu.memory_space<vmem>>
    %156 = tpu.memref_slice %arg6[%0] : memref<2x!tpu.dma_semaphore, #tpu.memory_space<semaphore_mem>> -> memref<1x!tpu.dma_semaphore, #tpu.memory_space<semaphore_mem>>
    %157 = tpu.memref_squeeze %156 : memref<1x!tpu.dma_semaphore, #tpu.memory_space<semaphore_mem>> -> memref<!tpu.dma_semaphore, #tpu.memory_space<semaphore_mem>>
    tpu.wait_dma2 semaphore(%157 : memref<!tpu.dma_semaphore, #tpu.memory_space<semaphore_mem>>) src(%153 : memref<1x128xf32, #tpu.memory_space<any>>) dst(%155 : memref<1x128xf32, #tpu.memory_space<vmem>>)
    %c0_i32_152 = arith.constant 0 : i32
    %c0_i32_153 = arith.constant 0 : i32
    %c0_i32_154 = arith.constant 0 : i32
    %158 = tpu.memref_slice %arg2[%c0_i32_153, %c0_i32_154] : memref<512x128xf32, #tpu.memory_space<any>> -> memref<1x128xf32, #tpu.memory_space<any>>
    %c0_i32_155 = arith.constant 0 : i32
    %c0_i32_156 = arith.constant 0 : i32
    %159 = tpu.memref_slice %arg5[%0, %c0_i32_152, %c0_i32_155, %c0_i32_156] : memref<2x5x8x128xf32, #tpu.memory_space<vmem>> -> memref<1x1x1x128xf32, #tpu.memory_space<vmem>>
    %160 = tpu.memref_squeeze %159 : memref<1x1x1x128xf32, #tpu.memory_space<vmem>> -> memref<1x128xf32, #tpu.memory_space<vmem>>
    %161 = tpu.memref_slice %arg6[%0] : memref<2x!tpu.dma_semaphore, #tpu.memory_space<semaphore_mem>> -> memref<1x!tpu.dma_semaphore, #tpu.memory_space<semaphore_mem>>
    %162 = tpu.memref_squeeze %161 : memref<1x!tpu.dma_semaphore, #tpu.memory_space<semaphore_mem>> -> memref<!tpu.dma_semaphore, #tpu.memory_space<semaphore_mem>>
    tpu.wait_dma2 semaphore(%162 : memref<!tpu.dma_semaphore, #tpu.memory_space<semaphore_mem>>) src(%158 : memref<1x128xf32, #tpu.memory_space<any>>) dst(%160 : memref<1x128xf32, #tpu.memory_space<vmem>>)
    %c0_i32_157 = arith.constant 0 : i32
    %c0_i32_158 = arith.constant 0 : i32
    %c0_i32_159 = arith.constant 0 : i32
    %163 = tpu.memref_slice %arg2[%c0_i32_158, %c0_i32_159] : memref<512x128xf32, #tpu.memory_space<any>> -> memref<1x128xf32, #tpu.memory_space<any>>
    %c0_i32_160 = arith.constant 0 : i32
    %c0_i32_161 = arith.constant 0 : i32
    %164 = tpu.memref_slice %arg5[%0, %c0_i32_157, %c0_i32_160, %c0_i32_161] : memref<2x5x8x128xf32, #tpu.memory_space<vmem>> -> memref<1x1x1x128xf32, #tpu.memory_space<vmem>>
    %165 = tpu.memref_squeeze %164 : memref<1x1x1x128xf32, #tpu.memory_space<vmem>> -> memref<1x128xf32, #tpu.memory_space<vmem>>
    %166 = tpu.memref_slice %arg6[%0] : memref<2x!tpu.dma_semaphore, #tpu.memory_space<semaphore_mem>> -> memref<1x!tpu.dma_semaphore, #tpu.memory_space<semaphore_mem>>
    %167 = tpu.memref_squeeze %166 : memref<1x!tpu.dma_semaphore, #tpu.memory_space<semaphore_mem>> -> memref<!tpu.dma_semaphore, #tpu.memory_space<semaphore_mem>>
    tpu.wait_dma2 semaphore(%167 : memref<!tpu.dma_semaphore, #tpu.memory_space<semaphore_mem>>) src(%163 : memref<1x128xf32, #tpu.memory_space<any>>) dst(%165 : memref<1x128xf32, #tpu.memory_space<vmem>>)
    %c0_i32_162 = arith.constant 0 : i32
    %c0_i32_163 = arith.constant 0 : i32
    %c0_i32_164 = arith.constant 0 : i32
    %168 = tpu.memref_slice %arg2[%c0_i32_163, %c0_i32_164] : memref<512x128xf32, #tpu.memory_space<any>> -> memref<1x128xf32, #tpu.memory_space<any>>
    %c0_i32_165 = arith.constant 0 : i32
    %c0_i32_166 = arith.constant 0 : i32
    %169 = tpu.memref_slice %arg5[%0, %c0_i32_162, %c0_i32_165, %c0_i32_166] : memref<2x5x8x128xf32, #tpu.memory_space<vmem>> -> memref<1x1x1x128xf32, #tpu.memory_space<vmem>>
    %170 = tpu.memref_squeeze %169 : memref<1x1x1x128xf32, #tpu.memory_space<vmem>> -> memref<1x128xf32, #tpu.memory_space<vmem>>
    %171 = tpu.memref_slice %arg6[%0] : memref<2x!tpu.dma_semaphore, #tpu.memory_space<semaphore_mem>> -> memref<1x!tpu.dma_semaphore, #tpu.memory_space<semaphore_mem>>
    %172 = tpu.memref_squeeze %171 : memref<1x!tpu.dma_semaphore, #tpu.memory_space<semaphore_mem>> -> memref<!tpu.dma_semaphore, #tpu.memory_space<semaphore_mem>>
    tpu.wait_dma2 semaphore(%172 : memref<!tpu.dma_semaphore, #tpu.memory_space<semaphore_mem>>) src(%168 : memref<1x128xf32, #tpu.memory_space<any>>) dst(%170 : memref<1x128xf32, #tpu.memory_space<vmem>>)
    %c0_i32_167 = arith.constant 0 : i32
    %c0_i32_168 = arith.constant 0 : i32
    %c0_i32_169 = arith.constant 0 : i32
    %173 = tpu.memref_slice %arg2[%c0_i32_168, %c0_i32_169] : memref<512x128xf32, #tpu.memory_space<any>> -> memref<1x128xf32, #tpu.memory_space<any>>
    %c0_i32_170 = arith.constant 0 : i32
    %c0_i32_171 = arith.constant 0 : i32
    %174 = tpu.memref_slice %arg5[%0, %c0_i32_167, %c0_i32_170, %c0_i32_171] : memref<2x5x8x128xf32, #tpu.memory_space<vmem>> -> memref<1x1x1x128xf32, #tpu.memory_space<vmem>>
    %175 = tpu.memref_squeeze %174 : memref<1x1x1x128xf32, #tpu.memory_space<vmem>> -> memref<1x128xf32, #tpu.memory_space<vmem>>
    %176 = tpu.memref_slice %arg6[%0] : memref<2x!tpu.dma_semaphore, #tpu.memory_space<semaphore_mem>> -> memref<1x!tpu.dma_semaphore, #tpu.memory_space<semaphore_mem>>
    %177 = tpu.memref_squeeze %176 : memref<1x!tpu.dma_semaphore, #tpu.memory_space<semaphore_mem>> -> memref<!tpu.dma_semaphore, #tpu.memory_space<semaphore_mem>>
    tpu.wait_dma2 semaphore(%177 : memref<!tpu.dma_semaphore, #tpu.memory_space<semaphore_mem>>) src(%173 : memref<1x128xf32, #tpu.memory_space<any>>) dst(%175 : memref<1x128xf32, #tpu.memory_space<vmem>>)
    %c0_i32_172 = arith.constant 0 : i32
    %c0_i32_173 = arith.constant 0 : i32
    %c0_i32_174 = arith.constant 0 : i32
    %178 = tpu.memref_slice %arg2[%c0_i32_173, %c0_i32_174] : memref<512x128xf32, #tpu.memory_space<any>> -> memref<1x128xf32, #tpu.memory_space<any>>
    %c0_i32_175 = arith.constant 0 : i32
    %c0_i32_176 = arith.constant 0 : i32
    %179 = tpu.memref_slice %arg5[%0, %c0_i32_172, %c0_i32_175, %c0_i32_176] : memref<2x5x8x128xf32, #tpu.memory_space<vmem>> -> memref<1x1x1x128xf32, #tpu.memory_space<vmem>>
    %180 = tpu.memref_squeeze %179 : memref<1x1x1x128xf32, #tpu.memory_space<vmem>> -> memref<1x128xf32, #tpu.memory_space<vmem>>
    %181 = tpu.memref_slice %arg6[%0] : memref<2x!tpu.dma_semaphore, #tpu.memory_space<semaphore_mem>> -> memref<1x!tpu.dma_semaphore, #tpu.memory_space<semaphore_mem>>
    %182 = tpu.memref_squeeze %181 : memref<1x!tpu.dma_semaphore, #tpu.memory_space<semaphore_mem>> -> memref<!tpu.dma_semaphore, #tpu.memory_space<semaphore_mem>>
    tpu.wait_dma2 semaphore(%182 : memref<!tpu.dma_semaphore, #tpu.memory_space<semaphore_mem>>) src(%178 : memref<1x128xf32, #tpu.memory_space<any>>) dst(%180 : memref<1x128xf32, #tpu.memory_space<vmem>>)
    %c0_i32_177 = arith.constant 0 : i32
    %c0_i32_178 = arith.constant 0 : i32
    %c0_i32_179 = arith.constant 0 : i32
    %183 = tpu.memref_slice %arg2[%c0_i32_178, %c0_i32_179] : memref<512x128xf32, #tpu.memory_space<any>> -> memref<1x128xf32, #tpu.memory_space<any>>
    %c0_i32_180 = arith.constant 0 : i32
    %c0_i32_181 = arith.constant 0 : i32
    %184 = tpu.memref_slice %arg5[%0, %c0_i32_177, %c0_i32_180, %c0_i32_181] : memref<2x5x8x128xf32, #tpu.memory_space<vmem>> -> memref<1x1x1x128xf32, #tpu.memory_space<vmem>>
    %185 = tpu.memref_squeeze %184 : memref<1x1x1x128xf32, #tpu.memory_space<vmem>> -> memref<1x128xf32, #tpu.memory_space<vmem>>
    %186 = tpu.memref_slice %arg6[%0] : memref<2x!tpu.dma_semaphore, #tpu.memory_space<semaphore_mem>> -> memref<1x!tpu.dma_semaphore, #tpu.memory_space<semaphore_mem>>
    %187 = tpu.memref_squeeze %186 : memref<1x!tpu.dma_semaphore, #tpu.memory_space<semaphore_mem>> -> memref<!tpu.dma_semaphore, #tpu.memory_space<semaphore_mem>>
    tpu.wait_dma2 semaphore(%187 : memref<!tpu.dma_semaphore, #tpu.memory_space<semaphore_mem>>) src(%183 : memref<1x128xf32, #tpu.memory_space<any>>) dst(%185 : memref<1x128xf32, #tpu.memory_space<vmem>>)
    %c0_i32_182 = arith.constant 0 : i32
    %c0_i32_183 = arith.constant 0 : i32
    %c0_i32_184 = arith.constant 0 : i32
    %188 = tpu.memref_slice %arg2[%c0_i32_183, %c0_i32_184] : memref<512x128xf32, #tpu.memory_space<any>> -> memref<1x128xf32, #tpu.memory_space<any>>
    %c0_i32_185 = arith.constant 0 : i32
    %c0_i32_186 = arith.constant 0 : i32
    %189 = tpu.memref_slice %arg5[%0, %c0_i32_182, %c0_i32_185, %c0_i32_186] : memref<2x5x8x128xf32, #tpu.memory_space<vmem>> -> memref<1x1x1x128xf32, #tpu.memory_space<vmem>>
    %190 = tpu.memref_squeeze %189 : memref<1x1x1x128xf32, #tpu.memory_space<vmem>> -> memref<1x128xf32, #tpu.memory_space<vmem>>
    %191 = tpu.memref_slice %arg6[%0] : memref<2x!tpu.dma_semaphore, #tpu.memory_space<semaphore_mem>> -> memref<1x!tpu.dma_semaphore, #tpu.memory_space<semaphore_mem>>
    %192 = tpu.memref_squeeze %191 : memref<1x!tpu.dma_semaphore, #tpu.memory_space<semaphore_mem>> -> memref<!tpu.dma_semaphore, #tpu.memory_space<semaphore_mem>>
    tpu.wait_dma2 semaphore(%192 : memref<!tpu.dma_semaphore, #tpu.memory_space<semaphore_mem>>) src(%188 : memref<1x128xf32, #tpu.memory_space<any>>) dst(%190 : memref<1x128xf32, #tpu.memory_space<vmem>>)
    %c0_i32_187 = arith.constant 0 : i32
    %c0_i32_188 = arith.constant 0 : i32
    %c0_i32_189 = arith.constant 0 : i32
    %193 = tpu.memref_slice %arg2[%c0_i32_188, %c0_i32_189] : memref<512x128xf32, #tpu.memory_space<any>> -> memref<1x128xf32, #tpu.memory_space<any>>
    %c0_i32_190 = arith.constant 0 : i32
    %c0_i32_191 = arith.constant 0 : i32
    %194 = tpu.memref_slice %arg5[%0, %c0_i32_187, %c0_i32_190, %c0_i32_191] : memref<2x5x8x128xf32, #tpu.memory_space<vmem>> -> memref<1x1x1x128xf32, #tpu.memory_space<vmem>>
    %195 = tpu.memref_squeeze %194 : memref<1x1x1x128xf32, #tpu.memory_space<vmem>> -> memref<1x128xf32, #tpu.memory_space<vmem>>
    %196 = tpu.memref_slice %arg6[%0] : memref<2x!tpu.dma_semaphore, #tpu.memory_space<semaphore_mem>> -> memref<1x!tpu.dma_semaphore, #tpu.memory_space<semaphore_mem>>
    %197 = tpu.memref_squeeze %196 : memref<1x!tpu.dma_semaphore, #tpu.memory_space<semaphore_mem>> -> memref<!tpu.dma_semaphore, #tpu.memory_space<semaphore_mem>>
    tpu.wait_dma2 semaphore(%197 : memref<!tpu.dma_semaphore, #tpu.memory_space<semaphore_mem>>) src(%193 : memref<1x128xf32, #tpu.memory_space<any>>) dst(%195 : memref<1x128xf32, #tpu.memory_space<vmem>>)
    %c0_i32_192 = arith.constant 0 : i32
    %c0_i32_193 = arith.constant 0 : i32
    %c0_i32_194 = arith.constant 0 : i32
    %198 = tpu.memref_slice %arg2[%c0_i32_193, %c0_i32_194] : memref<512x128xf32, #tpu.memory_space<any>> -> memref<1x128xf32, #tpu.memory_space<any>>
    %c0_i32_195 = arith.constant 0 : i32
    %c0_i32_196 = arith.constant 0 : i32
    %199 = tpu.memref_slice %arg5[%0, %c0_i32_192, %c0_i32_195, %c0_i32_196] : memref<2x5x8x128xf32, #tpu.memory_space<vmem>> -> memref<1x1x1x128xf32, #tpu.memory_space<vmem>>
    %200 = tpu.memref_squeeze %199 : memref<1x1x1x128xf32, #tpu.memory_space<vmem>> -> memref<1x128xf32, #tpu.memory_space<vmem>>
    %201 = tpu.memref_slice %arg6[%0] : memref<2x!tpu.dma_semaphore, #tpu.memory_space<semaphore_mem>> -> memref<1x!tpu.dma_semaphore, #tpu.memory_space<semaphore_mem>>
    %202 = tpu.memref_squeeze %201 : memref<1x!tpu.dma_semaphore, #tpu.memory_space<semaphore_mem>> -> memref<!tpu.dma_semaphore, #tpu.memory_space<semaphore_mem>>
    tpu.wait_dma2 semaphore(%202 : memref<!tpu.dma_semaphore, #tpu.memory_space<semaphore_mem>>) src(%198 : memref<1x128xf32, #tpu.memory_space<any>>) dst(%200 : memref<1x128xf32, #tpu.memory_space<vmem>>)
    %c0_i32_197 = arith.constant 0 : i32
    %c0_i32_198 = arith.constant 0 : i32
    %c0_i32_199 = arith.constant 0 : i32
    %203 = tpu.memref_slice %arg2[%c0_i32_198, %c0_i32_199] : memref<512x128xf32, #tpu.memory_space<any>> -> memref<1x128xf32, #tpu.memory_space<any>>
    %c0_i32_200 = arith.constant 0 : i32
    %c0_i32_201 = arith.constant 0 : i32
    %204 = tpu.memref_slice %arg5[%0, %c0_i32_197, %c0_i32_200, %c0_i32_201] : memref<2x5x8x128xf32, #tpu.memory_space<vmem>> -> memref<1x1x1x128xf32, #tpu.memory_space<vmem>>
    %205 = tpu.memref_squeeze %204 : memref<1x1x1x128xf32, #tpu.memory_space<vmem>> -> memref<1x128xf32, #tpu.memory_space<vmem>>
    %206 = tpu.memref_slice %arg6[%0] : memref<2x!tpu.dma_semaphore, #tpu.memory_space<semaphore_mem>> -> memref<1x!tpu.dma_semaphore, #tpu.memory_space<semaphore_mem>>
    %207 = tpu.memref_squeeze %206 : memref<1x!tpu.dma_semaphore, #tpu.memory_space<semaphore_mem>> -> memref<!tpu.dma_semaphore, #tpu.memory_space<semaphore_mem>>
    tpu.wait_dma2 semaphore(%207 : memref<!tpu.dma_semaphore, #tpu.memory_space<semaphore_mem>>) src(%203 : memref<1x128xf32, #tpu.memory_space<any>>) dst(%205 : memref<1x128xf32, #tpu.memory_space<vmem>>)
    %208 = arith.index_cast %0 : i32 to index
    %c0 = arith.constant 0 : index
    %c0_202 = arith.constant 0 : index
    %c0_203 = arith.constant 0 : index
    %209 = vector.load %arg5[%208, %c0, %c0_202, %c0_203] : memref<2x5x8x128xf32, #tpu.memory_space<vmem>>, vector<1x5x8x128xf32>
    %210 = vector.shape_cast %209 : vector<1x5x8x128xf32> to vector<5x8x128xf32>
    %cst = arith.constant dense<0.000000e+00> : vector<8x128xf32>
    %211 = vector.multi_reduction <add>, %210, %cst [0] : vector<5x8x128xf32> to vector<8x128xf32>
    %cst_204 = arith.constant 2.000000e-01 : f32
    %212 = vector.broadcast %cst_204 : f32 to vector<8x128xf32>
    %213 = arith.mulf %211, %212 : vector<8x128xf32>
    %214 = arith.truncf %213 : vector<8x128xf32> to vector<8x128xbf16>
    %c0_205 = arith.constant 0 : index
    %c0_206 = arith.constant 0 : index
    %215 = vector.load %arg3[%c0_205, %c0_206] : memref<128x128xbf16, #tpu.memory_space<vmem>>, vector<128x128xbf16>
    %cst_207 = arith.constant dense<0.000000e+00> : vector<8x128xf32>
    %216 = tpu.matmul %214, %215, %cst_207 {dimension_numbers = #tpu.dot_dimension_numbers<[1], [0], [0], [1], [0, 0, 1, 1], [], []>} : vector<8x128xbf16>, vector<128x128xbf16>, vector<8x128xf32> -> vector<8x128xf32>
    %cst_208 = arith.constant 0.000000e+00 : f32
    %217 = vector.broadcast %cst_208 : f32 to vector<8x128xf32>
    %218 = arith.maximumf %216, %217 : vector<8x128xf32>
    %c0_209 = arith.constant 0 : index
    %c0_210 = arith.constant 0 : index
    %219 = vector.load %arg4[%c0_209, %c0_210] : memref<8x128xf32, #tpu.memory_space<vmem>>, vector<8x128xf32>
    tpu.vector_store %arg4[%c0_209, %c0_210], %218 {strides = array<i32>} : memref<8x128xf32, #tpu.memory_space<vmem>>, vector<8x128xf32>,
    return
  }
  func.func @transform_1(%arg0: i32, %arg1: memref<320xi32, #tpu.memory_space<smem>>) -> (i32, i32) {
    %c0_i32 = arith.constant 0 : i32
    %c0_i32_0 = arith.constant 0 : i32
    %c0_i32_1 = arith.constant 0 : i32
    return %c0_i32, %c0_i32_0 : i32, i32
  }
  func.func @transform_2(%arg0: i32, %arg1: memref<320xi32, #tpu.memory_space<smem>>) -> (i32, i32) {
    %c0_i32 = arith.constant 0 : i32
    %c0_i32_0 = arith.constant 0 : i32
    return %arg0, %c0_i32 : i32, i32
  }
}

</mosaic_0001>

<llo_original>
// kernel: tpu_custom_call.1
$region0: #{tpu_custom_call.1}
  #allocation0 [shape = 'u32[]', space=smem, size = 0x4, offset = 0x4, fixed_abs, tag = 'smem constant byte address 0x4 - core index']
  #allocation1 [shape = 'u32[144,128]{1,0:T(1,128)}', space=vmem, size = 0x12000, scoped, tag = 'internal scratch']
  #allocation2 [shape = 'f32[2,5,8,128]{3,2,1,0:T(8,128)}', space=vmem, size = 0xa000, scoped, tag = 'scratch operand']
  #allocation3 [shape = 's32[2]{0}', space=sflag, size = 0x8, scoped, tag = 'scratch operand']
  #allocation4 [shape = 's32[1]{0}', space=sflag, size = 0x4, scoped, tag = 'scoped memory for tpu_custom_call.1']
  #allocation5 [shape = 'u8[1536]{0}', space=smem, size = 0x600, scoped, tag = 'prefetched SMEM operand 0']
  #allocation10 [shape = 's32[]', space=sflag, size = 0x4, offset = 0, fixed_abs, tag = 'sflag constant byte address 0x0 - dummy sync flag']
  #allocation11 [shape = 's32[]', space=sflag, size = 0x4, offset = 0, fixed_abs, tag = 'sflag constant byte address 0x0 - dummy sync flag']
  #allocation12 [shape = 'u32[]', space=smem, size = 0x4, offset = 0x44, fixed_abs, tag = 'smem constant byte address 0x44 - assertion arg 0']
  #allocation13 [shape = 'u32[]', space=smem, size = 0x4, offset = 0x48, fixed_abs, tag = 'smem constant byte address 0x48 - assertion arg 1']
  #allocation14 [shape = 's32[]', space=sflag, size = 0x4, offset = 0, fixed_abs, tag = 'sflag constant byte address 0x0 - dummy sync flag']
  #allocation15 [shape = 's32[]', space=sflag, size = 0x4, offset = 0, fixed_abs, tag = 'sflag constant byte address 0x0 - dummy sync flag']
  #allocation16 [shape = 's32[]', space=sflag, size = 0x4, offset = 0, fixed_abs, tag = 'sflag constant byte address 0x0 - dummy sync flag']
  #allocation17 [shape = 's32[]', space=sflag, size = 0x4, offset = 0, fixed_abs, tag = 'sflag constant byte address 0x0 - dummy sync flag']
  #allocation18 [shape = 's32[]', space=sflag, size = 0x4, offset = 0, fixed_abs, tag = 'sflag constant byte address 0x0 - dummy sync flag']
  #allocation19 [shape = 's32[]', space=sflag, size = 0x4, offset = 0, fixed_abs, tag = 'sflag constant byte address 0x0 - dummy sync flag']
  #allocation20 [shape = 's32[]', space=sflag, size = 0x4, offset = 0, fixed_abs, tag = 'sflag constant byte address 0x0 - dummy sync flag']
  #allocation21 [shape = 's32[]', space=sflag, size = 0x4, offset = 0, fixed_abs, tag = 'sflag constant byte address 0x0 - dummy sync flag']
  #allocation22 [shape = 's32[]', space=sflag, size = 0x4, offset = 0, fixed_abs, tag = 'sflag constant byte address 0x0 - dummy sync flag']
  #allocation23 [shape = 's32[]', space=sflag, size = 0x4, offset = 0, fixed_abs, tag = 'sflag constant byte address 0x0 - dummy sync flag']
  #allocation24 [shape = 's32[]', space=sflag, size = 0x4, offset = 0, fixed_abs, tag = 'sflag constant byte address 0x0 - dummy sync flag']
  #allocation25 [shape = 's32[]', space=sflag, size = 0x4, offset = 0, fixed_abs, tag = 'sflag constant byte address 0x0 - dummy sync flag']
  #allocation26 [shape = 's32[]', space=sflag, size = 0x4, offset = 0, fixed_abs, tag = 'sflag constant byte address 0x0 - dummy sync flag']
  #allocation27 [shape = 's32[]', space=sflag, size = 0x4, offset = 0, fixed_abs, tag = 'sflag constant byte address 0x0 - dummy sync flag']
  #allocation28 [shape = 's32[]', space=sflag, size = 0x4, offset = 0, fixed_abs, tag = 'sflag constant byte address 0x0 - dummy sync flag']
  #allocation29 [shape = 's32[]', space=sflag, size = 0x4, offset = 0, fixed_abs, tag = 'sflag constant byte address 0x0 - dummy sync flag']
  #allocation30 [shape = 's32[]', space=sflag, size = 0x4, offset = 0, fixed_abs, tag = 'sflag constant byte address 0x0 - dummy sync flag']
  #allocation31 [shape = 's32[]', space=sflag, size = 0x4, offset = 0, fixed_abs, tag = 'sflag constant byte address 0x0 - dummy sync flag']
  #allocation32 [shape = 's32[]', space=sflag, size = 0x4, offset = 0, fixed_abs, tag = 'sflag constant byte address 0x0 - dummy sync flag']
  #allocation33 [shape = 's32[]', space=sflag, size = 0x4, offset = 0, fixed_abs, tag = 'sflag constant byte address 0x0 - dummy sync flag']
  #allocation34 [shape = 's32[]', space=sflag, size = 0x4, offset = 0, fixed_abs, tag = 'sflag constant byte address 0x0 - dummy sync flag']
  #allocation35 [shape = 's32[]', space=sflag, size = 0x4, offset = 0, fixed_abs, tag = 'sflag constant byte address 0x0 - dummy sync flag']
  #allocation36 [shape = 's32[]', space=sflag, size = 0x4, offset = 0, fixed_abs, tag = 'sflag constant byte address 0x0 - dummy sync flag']
  #allocation37 [shape = 's32[]', space=sflag, size = 0x4, offset = 0, fixed_abs, tag = 'sflag constant byte address 0x0 - dummy sync flag']
  #allocation38 [shape = 's32[]', space=sflag, size = 0x4, offset = 0, fixed_abs, tag = 'sflag constant byte address 0x0 - dummy sync flag']
  #allocation39 [shape = 's32[]', space=sflag, size = 0x4, offset = 0, fixed_abs, tag = 'sflag constant byte address 0x0 - dummy sync flag']
  #allocation40 [shape = 's32[]', space=sflag, size = 0x4, offset = 0, fixed_abs, tag = 'sflag constant byte address 0x0 - dummy sync flag']
  #allocation41 [shape = 's32[]', space=sflag, size = 0x4, offset = 0, fixed_abs, tag = 'sflag constant byte address 0x0 - dummy sync flag']
  #allocation42 [shape = 's32[]', space=sflag, size = 0x4, offset = 0, fixed_abs, tag = 'sflag constant byte address 0x0 - dummy sync flag']
  #allocation43 [shape = 's32[]', space=sflag, size = 0x4, offset = 0, fixed_abs, tag = 'sflag constant byte address 0x0 - dummy sync flag']
  #allocation44 [shape = 's32[]', space=sflag, size = 0x4, offset = 0, fixed_abs, tag = 'sflag constant byte address 0x0 - dummy sync flag']
  #allocation45 [shape = 's32[]', space=sflag, size = 0x4, offset = 0, fixed_abs, tag = 'sflag constant byte address 0x0 - dummy sync flag']
  #allocation46 [shape = 's32[]', space=sflag, size = 0x4, offset = 0, fixed_abs, tag = 'sflag constant byte address 0x0 - dummy sync flag']
  #allocation47 [shape = 's32[]', space=sflag, size = 0x4, offset = 0, fixed_abs, tag = 'sflag constant byte address 0x0 - dummy sync flag']
  #allocation48 [shape = 's32[]', space=sflag, size = 0x4, offset = 0, fixed_abs, tag = 'sflag constant byte address 0x0 - dummy sync flag']
  #allocation49 [shape = 's32[]', space=sflag, size = 0x4, offset = 0, fixed_abs, tag = 'sflag constant byte address 0x0 - dummy sync flag']
  #allocation50 [shape = 's32[]', space=sflag, size = 0x4, offset = 0, fixed_abs, tag = 'sflag constant byte address 0x0 - dummy sync flag']
  #allocation51 [shape = 's32[]', space=sflag, size = 0x4, offset = 0, fixed_abs, tag = 'sflag constant byte address 0x0 - dummy sync flag']
  #allocation52 [shape = 's32[]', space=sflag, size = 0x4, offset = 0, fixed_abs, tag = 'sflag constant byte address 0x0 - dummy sync flag']
  #allocation53 [shape = 's32[]', space=sflag, size = 0x4, offset = 0, fixed_abs, tag = 'sflag constant byte address 0x0 - dummy sync flag']
  #allocation54 [shape = 's32[]', space=sflag, size = 0x4, offset = 0, fixed_abs, tag = 'sflag constant byte address 0x0 - dummy sync flag']
  #allocation55 [shape = 's32[]', space=sflag, size = 0x4, offset = 0, fixed_abs, tag = 'sflag constant byte address 0x0 - dummy sync flag']
  #allocation56 [shape = 's32[]', space=sflag, size = 0x4, offset = 0, fixed_abs, tag = 'sflag constant byte address 0x0 - dummy sync flag']
  #allocation57 [shape = 's32[]', space=sflag, size = 0x4, offset = 0, fixed_abs, tag = 'sflag constant byte address 0x0 - dummy sync flag']
  #allocation58 [shape = 's32[]', space=sflag, size = 0x4, offset = 0, fixed_abs, tag = 'sflag constant byte address 0x0 - dummy sync flag']
  #allocation59 [shape = 's32[]', space=sflag, size = 0x4, offset = 0, fixed_abs, tag = 'sflag constant byte address 0x0 - dummy sync flag']
  #allocation60 [shape = 's32[]', space=sflag, size = 0x4, offset = 0, fixed_abs, tag = 'sflag constant byte address 0x0 - dummy sync flag']
  #allocation61 [shape = 's32[]', space=sflag, size = 0x4, offset = 0, fixed_abs, tag = 'sflag constant byte address 0x0 - dummy sync flag']
  #allocation62 [shape = 's32[]', space=sflag, size = 0x4, offset = 0, fixed_abs, tag = 'sflag constant byte address 0x0 - dummy sync flag']
  #allocation63 [shape = 's32[]', space=sflag, size = 0x4, offset = 0, fixed_abs, tag = 'sflag constant byte address 0x0 - dummy sync flag']
  #allocation64 [shape = 's32[]', space=sflag, size = 0x4, offset = 0, fixed_abs, tag = 'sflag constant byte address 0x0 - dummy sync flag']
  #allocation65 [shape = 's32[]', space=sflag, size = 0x4, offset = 0, fixed_abs, tag = 'sflag constant byte address 0x0 - dummy sync flag']
  #allocation66 [shape = 's32[]', space=sflag, size = 0x4, offset = 0, fixed_abs, tag = 'sflag constant byte address 0x0 - dummy sync flag']
  #allocation67 [shape = 's32[]', space=sflag, size = 0x4, offset = 0, fixed_abs, tag = 'sflag constant byte address 0x0 - dummy sync flag']
  #allocation68 [shape = 's32[]', space=sflag, size = 0x4, offset = 0, fixed_abs, tag = 'sflag constant byte address 0x0 - dummy sync flag']
  #allocation69 [shape = 's32[]', space=sflag, size = 0x4, offset = 0, fixed_abs, tag = 'sflag constant byte address 0x0 - dummy sync flag']
  #allocation70 [shape = 's32[]', space=sflag, size = 0x4, offset = 0, fixed_abs, tag = 'sflag constant byte address 0x0 - dummy sync flag']
  #allocation71 [shape = 's32[]', space=sflag, size = 0x4, offset = 0, fixed_abs, tag = 'sflag constant byte address 0x0 - dummy sync flag']
  #allocation72 [shape = 's32[]', space=sflag, size = 0x4, offset = 0, fixed_abs, tag = 'sflag constant byte address 0x0 - dummy sync flag']
  #allocation73 [shape = 's32[]', space=sflag, size = 0x4, offset = 0, fixed_abs, tag = 'sflag constant byte address 0x0 - dummy sync flag']
  #allocation74 [shape = 's32[]', space=sflag, size = 0x4, offset = 0, fixed_abs, tag = 'sflag constant byte address 0x0 - dummy sync flag']
  #allocation75 [shape = 's32[]', space=sflag, size = 0x4, offset = 0, fixed_abs, tag = 'sflag constant byte address 0x0 - dummy sync flag']
  #allocation76 [shape = 's32[]', space=sflag, size = 0x4, offset = 0, fixed_abs, tag = 'sflag constant byte address 0x0 - dummy sync flag']
  #allocation77 [shape = 's32[]', space=sflag, size = 0x4, offset = 0, fixed_abs, tag = 'sflag constant byte address 0x0 - dummy sync flag']
  #allocation78 [shape = 's32[]', space=sflag, size = 0x4, offset = 0, fixed_abs, tag = 'sflag constant byte address 0x0 - dummy sync flag']
  #allocation79 [shape = 's32[]', space=sflag, size = 0x4, offset = 0, fixed_abs, tag = 'sflag constant byte address 0x0 - dummy sync flag']
  #allocation80 [shape = 's32[]', space=sflag, size = 0x4, offset = 0, fixed_abs, tag = 'sflag constant byte address 0x0 - dummy sync flag']
  #allocation81 [shape = 's32[]', space=sflag, size = 0x4, offset = 0, fixed_abs, tag = 'sflag constant byte address 0x0 - dummy sync flag']
  #allocation82 [shape = 's32[]', space=sflag, size = 0x4, offset = 0, fixed_abs, tag = 'sflag constant byte address 0x0 - dummy sync flag']
  #allocation83 [shape = 's32[]', space=sflag, size = 0x4, offset = 0, fixed_abs, tag = 'sflag constant byte address 0x0 - dummy sync flag']
  #allocation84 [shape = 's32[]', space=sflag, size = 0x4, offset = 0, fixed_abs, tag = 'sflag constant byte address 0x0 - dummy sync flag']
  #allocation85 [shape = 's32[]', space=sflag, size = 0x4, offset = 0, fixed_abs, tag = 'sflag constant byte address 0x0 - dummy sync flag']
  #allocation86 [shape = 's32[]', space=sflag, size = 0x4, offset = 0, fixed_abs, tag = 'sflag constant byte address 0x0 - dummy sync flag']
  #allocation87 [shape = 's32[]', space=sflag, size = 0x4, offset = 0, fixed_abs, tag = 'sflag constant byte address 0x0 - dummy sync flag']
  #allocation88 [shape = 's32[]', space=sflag, size = 0x4, offset = 0, fixed_abs, tag = 'sflag constant byte address 0x0 - dummy sync flag']
  #allocation89 [shape = 's32[]', space=sflag, size = 0x4, offset = 0, fixed_abs, tag = 'sflag constant byte address 0x0 - dummy sync flag']
  #allocation90 [shape = 's32[]', space=sflag, size = 0x4, offset = 0, fixed_abs, tag = 'sflag constant byte address 0x0 - dummy sync flag']
  #allocation91 [shape = 's32[]', space=sflag, size = 0x4, offset = 0, fixed_abs, tag = 'sflag constant byte address 0x0 - dummy sync flag']
  #allocation92 [shape = 's32[]', space=sflag, size = 0x4, offset = 0, fixed_abs, tag = 'sflag constant byte address 0x0 - dummy sync flag']
  #allocation93 [shape = 's32[]', space=sflag, size = 0x4, offset = 0, fixed_abs, tag = 'sflag constant byte address 0x0 - dummy sync flag']
  #allocation94 [shape = 's32[]', space=sflag, size = 0x4, offset = 0, fixed_abs, tag = 'sflag constant byte address 0x0 - dummy sync flag']
  #allocation95 [shape = 's32[]', space=sflag, size = 0x4, offset = 0, fixed_abs, tag = 'sflag constant byte address 0x0 - dummy sync flag']
  #allocation96 [shape = 's32[]', space=sflag, size = 0x4, offset = 0, fixed_abs, tag = 'sflag constant byte address 0x0 - dummy sync flag']
  #allocation97 [shape = 's32[]', space=sflag, size = 0x4, offset = 0, fixed_abs, tag = 'sflag constant byte address 0x0 - dummy sync flag']
  #allocation98 [shape = 's32[]', space=sflag, size = 0x4, offset = 0, fixed_abs, tag = 'sflag constant byte address 0x0 - dummy sync flag']
  #allocation99 [shape = 's32[]', space=sflag, size = 0x4, offset = 0, fixed_abs, tag = 'sflag constant byte address 0x0 - dummy sync flag']
  #allocation100 [shape = 's32[]', space=sflag, size = 0x4, offset = 0, fixed_abs, tag = 'sflag constant byte address 0x0 - dummy sync flag']
  #allocation101 [shape = 's32[]', space=sflag, size = 0x4, offset = 0, fixed_abs, tag = 'sflag constant byte address 0x0 - dummy sync flag']
  #allocation102 [shape = 's32[]', space=sflag, size = 0x4, offset = 0, fixed_abs, tag = 'sflag constant byte address 0x0 - dummy sync flag']
  #allocation103 [shape = 's32[]', space=sflag, size = 0x4, offset = 0, fixed_abs, tag = 'sflag constant byte address 0x0 - dummy sync flag']
  #allocation104 [shape = 's32[]', space=sflag, size = 0x4, offset = 0, fixed_abs, tag = 'sflag constant byte address 0x0 - dummy sync flag']
  #allocation105 [shape = 's32[]', space=sflag, size = 0x4, offset = 0, fixed_abs, tag = 'sflag constant byte address 0x0 - dummy sync flag']
  #allocation106 [shape = 's32[]', space=sflag, size = 0x4, offset = 0, fixed_abs, tag = 'sflag constant byte address 0x0 - dummy sync flag']
  #allocation107 [shape = 's32[]', space=sflag, size = 0x4, offset = 0, fixed_abs, tag = 'sflag constant byte address 0x0 - dummy sync flag']
  #allocation108 [shape = 's32[]', space=sflag, size = 0x4, offset = 0, fixed_abs, tag = 'sflag constant byte address 0x0 - dummy sync flag']
  #allocation109 [shape = 's32[]', space=sflag, size = 0x4, offset = 0, fixed_abs, tag = 'sflag constant byte address 0x0 - dummy sync flag']
  #allocation110 [shape = 's32[]', space=sflag, size = 0x4, offset = 0, fixed_abs, tag = 'sflag constant byte address 0x0 - dummy sync flag']
  #allocation111 [shape = 's32[]', space=sflag, size = 0x4, offset = 0, fixed_abs, tag = 'sflag constant byte address 0x0 - dummy sync flag']
  #allocation112 [shape = 's32[]', space=sflag, size = 0x4, offset = 0, fixed_abs, tag = 'sflag constant byte address 0x0 - dummy sync flag']
  #allocation113 [shape = 's32[]', space=sflag, size = 0x4, offset = 0, fixed_abs, tag = 'sflag constant byte address 0x0 - dummy sync flag']
  #allocation114 [shape = 's32[]', space=sflag, size = 0x4, offset = 0, fixed_abs, tag = 'sflag constant byte address 0x0 - dummy sync flag']
  #allocation115 [shape = 's32[]', space=sflag, size = 0x4, offset = 0, fixed_abs, tag = 'sflag constant byte address 0x0 - dummy sync flag']
  #allocation116 [shape = 's32[]', space=sflag, size = 0x4, offset = 0, fixed_abs, tag = 'sflag constant byte address 0x0 - dummy sync flag']
  #allocation117 [shape = 's32[]', space=sflag, size = 0x4, offset = 0, fixed_abs, tag = 'sflag constant byte address 0x0 - dummy sync flag']
  #allocation118 [shape = 's32[]', space=sflag, size = 0x4, offset = 0, fixed_abs, tag = 'sflag constant byte address 0x0 - dummy sync flag']
  #allocation119 [shape = 's32[]', space=sflag, size = 0x4, offset = 0, fixed_abs, tag = 'sflag constant byte address 0x0 - dummy sync flag']
  #allocation120 [shape = 's32[]', space=sflag, size = 0x4, offset = 0, fixed_abs, tag = 'sflag constant byte address 0x0 - dummy sync flag']
  #allocation121 [shape = 's32[]', space=sflag, size = 0x4, offset = 0, fixed_abs, tag = 'sflag constant byte address 0x0 - dummy sync flag']
  #allocation122 [shape = 's32[]', space=sflag, size = 0x4, offset = 0, fixed_abs, tag = 'sflag constant byte address 0x0 - dummy sync flag']
  #allocation123 [shape = 's32[]', space=sflag, size = 0x4, offset = 0, fixed_abs, tag = 'sflag constant byte address 0x0 - dummy sync flag']
  #allocation124 [shape = 's32[]', space=sflag, size = 0x4, offset = 0, fixed_abs, tag = 'sflag constant byte address 0x0 - dummy sync flag']
  #allocation125 [shape = 's32[]', space=sflag, size = 0x4, offset = 0, fixed_abs, tag = 'sflag constant byte address 0x0 - dummy sync flag']
  #allocation126 [shape = 's32[]', space=sflag, size = 0x4, offset = 0, fixed_abs, tag = 'sflag constant byte address 0x0 - dummy sync flag']
  #allocation127 [shape = 's32[]', space=sflag, size = 0x4, offset = 0, fixed_abs, tag = 'sflag constant byte address 0x0 - dummy sync flag']
  #allocation128 [shape = 's32[]', space=sflag, size = 0x4, offset = 0, fixed_abs, tag = 'sflag constant byte address 0x0 - dummy sync flag']
  #allocation129 [shape = 's32[]', space=sflag, size = 0x4, offset = 0, fixed_abs, tag = 'sflag constant byte address 0x0 - dummy sync flag']
  #allocation130 [shape = 's32[]', space=sflag, size = 0x4, offset = 0, fixed_abs, tag = 'sflag constant byte address 0x0 - dummy sync flag']
  #allocation131 [shape = 's32[]', space=sflag, size = 0x4, offset = 0, fixed_abs, tag = 'sflag constant byte address 0x0 - dummy sync flag']
  #allocation132 [shape = 's32[]', space=sflag, size = 0x4, offset = 0, fixed_abs, tag = 'sflag constant byte address 0x0 - dummy sync flag']
  #allocation133 [shape = 's32[]', space=sflag, size = 0x4, offset = 0, fixed_abs, tag = 'sflag constant byte address 0x0 - dummy sync flag']
  #allocation134 [shape = 's32[]', space=sflag, size = 0x4, offset = 0, fixed_abs, tag = 'sflag constant byte address 0x0 - dummy sync flag']
  #allocation135 [shape = 's32[]', space=sflag, size = 0x4, offset = 0, fixed_abs, tag = 'sflag constant byte address 0x0 - dummy sync flag']
  #allocation136 [shape = 's32[]', space=sflag, size = 0x4, offset = 0, fixed_abs, tag = 'sflag constant byte address 0x0 - dummy sync flag']
  #allocation137 [shape = 's32[]', space=sflag, size = 0x4, offset = 0, fixed_abs, tag = 'sflag constant byte address 0x0 - dummy sync flag']
  #allocation138 [shape = 's32[]', space=sflag, size = 0x4, offset = 0, fixed_abs, tag = 'sflag constant byte address 0x0 - dummy sync flag']
  #allocation139 [shape = 's32[]', space=sflag, size = 0x4, offset = 0, fixed_abs, tag = 'sflag constant byte address 0x0 - dummy sync flag']
  #allocation140 [shape = 's32[]', space=sflag, size = 0x4, offset = 0, fixed_abs, tag = 'sflag constant byte address 0x0 - dummy sync flag']
  #allocation141 [shape = 's32[]', space=sflag, size = 0x4, offset = 0, fixed_abs, tag = 'sflag constant byte address 0x0 - dummy sync flag']
  #allocation142 [shape = 's32[]', space=sflag, size = 0x4, offset = 0, fixed_abs, tag = 'sflag constant byte address 0x0 - dummy sync flag']
  #allocation143 [shape = 's32[]', space=sflag, size = 0x4, offset = 0, fixed_abs, tag = 'sflag constant byte address 0x0 - dummy sync flag']
  #allocation144 [shape = 's32[]', space=sflag, size = 0x4, offset = 0, fixed_abs, tag = 'sflag constant byte address 0x0 - dummy sync flag']
  #allocation145 [shape = 's32[]', space=sflag, size = 0x4, offset = 0, fixed_abs, tag = 'sflag constant byte address 0x0 - dummy sync flag']
  #allocation146 [shape = 's32[]', space=sflag, size = 0x4, offset = 0, fixed_abs, tag = 'sflag constant byte address 0x0 - dummy sync flag']
  #allocation147 [shape = 's32[]', space=sflag, size = 0x4, offset = 0, fixed_abs, tag = 'sflag constant byte address 0x0 - dummy sync flag']
  #allocation148 [shape = 's32[]', space=sflag, size = 0x4, offset = 0, fixed_abs, tag = 'sflag constant byte address 0x0 - dummy sync flag']
  #allocation149 [shape = 's32[]', space=sflag, size = 0x4, offset = 0, fixed_abs, tag = 'sflag constant byte address 0x0 - dummy sync flag']
  #allocation150 [shape = 's32[]', space=sflag, size = 0x4, offset = 0, fixed_abs, tag = 'sflag constant byte address 0x0 - dummy sync flag']
  #allocation151 [shape = 's32[]', space=sflag, size = 0x4, offset = 0, fixed_abs, tag = 'sflag constant byte address 0x0 - dummy sync flag']
  #allocation152 [shape = 's32[]', space=sflag, size = 0x4, offset = 0, fixed_abs, tag = 'sflag constant byte address 0x0 - dummy sync flag']
  #allocation153 [shape = 's32[]', space=sflag, size = 0x4, offset = 0, fixed_abs, tag = 'sflag constant byte address 0x0 - dummy sync flag']
  #allocation154 [shape = 's32[]', space=sflag, size = 0x4, offset = 0, fixed_abs, tag = 'sflag constant byte address 0x0 - dummy sync flag']
  #allocation155 [shape = 's32[]', space=sflag, size = 0x4, offset = 0, fixed_abs, tag = 'sflag constant byte address 0x0 - dummy sync flag']
  #allocation156 [shape = 's32[]', space=sflag, size = 0x4, offset = 0, fixed_abs, tag = 'sflag constant byte address 0x0 - dummy sync flag']
  #allocation157 [shape = 's32[]', space=sflag, size = 0x4, offset = 0, fixed_abs, tag = 'sflag constant byte address 0x0 - dummy sync flag']
  #allocation158 [shape = 's32[]', space=sflag, size = 0x4, offset = 0, fixed_abs, tag = 'sflag constant byte address 0x0 - dummy sync flag']
  #allocation159 [shape = 's32[]', space=sflag, size = 0x4, offset = 0, fixed_abs, tag = 'sflag constant byte address 0x0 - dummy sync flag']
  #allocation160 [shape = 's32[]', space=sflag, size = 0x4, offset = 0, fixed_abs, tag = 'sflag constant byte address 0x0 - dummy sync flag']
  #allocation161 [shape = 's32[]', space=sflag, size = 0x4, offset = 0, fixed_abs, tag = 'sflag constant byte address 0x0 - dummy sync flag']
  #allocation162 [shape = 's32[]', space=sflag, size = 0x4, offset = 0, fixed_abs, tag = 'sflag constant byte address 0x0 - dummy sync flag']
  #allocation163 [shape = 's32[]', space=sflag, size = 0x4, offset = 0, fixed_abs, tag = 'sflag constant byte address 0x0 - dummy sync flag']
  #allocation164 [shape = 's32[]', space=sflag, size = 0x4, offset = 0, fixed_abs, tag = 'sflag constant byte address 0x0 - dummy sync flag']
  #allocation165 [shape = 's32[]', space=sflag, size = 0x4, offset = 0, fixed_abs, tag = 'sflag constant byte address 0x0 - dummy sync flag']
  #allocation166 [shape = 's32[]', space=sflag, size = 0x4, offset = 0, fixed_abs, tag = 'sflag constant byte address 0x0 - dummy sync flag']
  #allocation167 [shape = 's32[]', space=sflag, size = 0x4, offset = 0, fixed_abs, tag = 'sflag constant byte address 0x0 - dummy sync flag']
  #allocation168 [shape = 's32[]', space=sflag, size = 0x4, offset = 0, fixed_abs, tag = 'sflag constant byte address 0x0 - dummy sync flag']
  #allocation169 [shape = 's32[]', space=sflag, size = 0x4, offset = 0, fixed_abs, tag = 'sflag constant byte address 0x0 - dummy sync flag']
  #allocation170 [shape = 's32[]', space=sflag, size = 0x4, offset = 0, fixed_abs, tag = 'sflag constant byte address 0x0 - dummy sync flag']
  #allocation171 [shape = 's32[]', space=sflag, size = 0x4, offset = 0, fixed_abs, tag = 'sflag constant byte address 0x0 - dummy sync flag']
  %s0 = inlined_call_operand.hbm [shape: s32[320], index: 0, kind: input, shape index: {}]
  %s1 = inlined_call_operand.hbm [shape: f32[512,128], index: 1, kind: input, shape index: {}]
  %s2 = inlined_call_operand.hbm [shape: bf16[128,128], index: 2, kind: input, shape index: {}]
  %s3 = inlined_call_operand.hbm [shape: f32[64,128], index: 3, kind: output, shape index: {}]
  %s4 = sld [smem:[#allocation0]]
  $region369: #{tpu_custom_call.1} parent=0
    _
  %s6 = ssub.s32 1, %s4
  %s7 = scalar_select 0, %s6, %s4
  %9 = dma.hbm_to_smem %s0, 48, [#allocation5], [#allocation4]
  %10 = dma.done [#allocation4], 48
  %11 = sfence
  $region1: #{tpu_custom_call.1} parent=0
    #allocation6 [shape = 'u8[32768]{0}', space=vmem, size = 0x8000, scoped, tag = 'input window, operand 2, single buffered']
    #allocation7 [shape = 's32[2]{0}', space=sflag, size = 0x8, scoped, tag = 'scoped memory for tpu_custom_call.1']
    #allocation8 [shape = 's32[2]{0}', space=sflag, size = 0x8, scoped, tag = 'scoped memory for tpu_custom_call.1']
    #allocation9 [shape = 'u8[8192]{0}', space=vmem, size = 0x2000, scoped, tag = 'output window, operand 0']
    %12 = vsyncpa [#allocation7], 0
    %13 = vsyncpa [#allocation8], 0
    %s14 = scalar_lea.sflag [#allocation8], 1
    %15 = vsyncpa %s14, 0
    loop: start=0, step=1, limit=10
    $region2: #{tpu_custom_call.1} parent=1 // loop_pre_header
      _
    $region3: #{tpu_custom_call.1} parent=1 // loop_header
      %s17 = sphi 0, %s21
      %p18 = scmp.ge.s32.totalorder %s17, 10
      %s25 = sphi 0, %s25
      %s27 = sphi 0, %s25
      %s28 = sphi 0, %s27
      %s42 = sphi 0, %s28
      %s48 = sphi 0, %s50
      %s51 = sphi 0, %s48
      %s52 = sphi 0, %s51
      %s68 = sphi 0, %s52
    $region4: #{tpu_custom_call.1} parent=1 // loop_header_branch
      %20 = sbr.rel (%p18) target = $region8
    $region5: #{tpu_custom_call.1} parent=1 // loop_body
      %s22 = ssub.s32 %s17, 1
      %s23 = ssub.s32 %s17, 2
      %s24 = sadd.s32 %s17, 1
      %s26 = sadd.s32 %s25, 1
      %p29 = scmp.eq.s32.totalorder %s17, 7
      %p30 = scmp.ne.s32.totalorder %s25, %s27
      %p31 = scmp.eq.s32.totalorder %s17, 0
      %p32 = por %p30, %p31
      %p33 = scmp.ne.s32.totalorder %s25, %s27
      %p34 = scmp.eq.s32.totalorder %s22, 7
      %p35 = por %p33, %p34
      %p36 = scmp.ne.s32.totalorder %s27, %s28
      %p37 = scmp.eq.s32.totalorder %s22, 0
      %p38 = por %p36, %p37
      %p39 = scmp.ne.s32.totalorder %s27, %s28
      %p40 = scmp.eq.s32.totalorder %s23, 7
      %p41 = por %p39, %p40
      %p43 = scmp.ne.s32.totalorder %s28, %s42
      %p44 = scmp.eq.s32.totalorder %s23, 0
      %p45 = por %p43, %p44
      %s46 = ssub.s32 %s17, %s24
      %p47 = scmp.eq.s32.totalorder %s46, 0
      %s49 = sadd.s32 %s48, 1
      %s50 = scalar_select %p47, %s48, %s49
      %p53 = pneg %p47
      %p54 = scmp.eq.s32.totalorder %s17, 7
      %p55 = por %p53, %p54
      %p56 = scmp.ne.s32.totalorder %s48, %s51
      %p57 = scmp.eq.s32.totalorder %s17, 0
      %p58 = por %p56, %p57
      %p59 = scmp.ne.s32.totalorder %s48, %s51
      %p60 = scmp.eq.s32.totalorder %s22, 7
      %p61 = por %p59, %p60
      %p62 = scmp.ne.s32.totalorder %s51, %s52
      %p63 = scmp.eq.s32.totalorder %s22, 0
      %p64 = por %p62, %p63
      %p65 = scmp.ne.s32.totalorder %s51, %s52
      %p66 = scmp.eq.s32.totalorder %s23, 7
      %p67 = por %p65, %p66
      %p69 = scmp.ne.s32.totalorder %s52, %s68
      %p70 = scmp.eq.s32.totalorder %s23, 0
      %p71 = por %p69, %p70
      %p72 = scmp.le.s32.totalorder 1, %s17
      %p73 = scmp.lt.s32.totalorder %s17, 9
      %p74 = pnand %p72, %p73
      %p75 = pneg %p74
      // Predicated region
      $region9: #{tpu_custom_call.1} parent=5 // pred_check
        _
      $region10: #{tpu_custom_call.1} parent=5 // pred_check_branch
        %77 = sbr.rel (%p74) target = $region12
      $region11: #{tpu_custom_call.1} parent=5 // pred_region
        %s78 = ssub.s32 %s17, 1
        // Predicated region
        $region13: #{tpu_custom_call.1} parent=11 // pred_check
          %p79 = pneg %p38
        $region14: #{tpu_custom_call.1} parent=11 // pred_check_branch
          %81 = sbr.rel (%p79) target = $region16
        $region15: #{tpu_custom_call.1} parent=11 // pred_region
          %s83 = ssub.s32 1024, 1024
          %84 = vsyncadd [#allocation7], %s83
          %s85 = sshll.u32 [#allocation6], 4
          %s86 = int_to_ptr.vmem [resolvable:$true] %s85
          %91 = dma.hbm_to_vmem [thread:$0]  %s2, 1024, %s86, [#allocation7], 64, 64, 4
        $region16: #{tpu_custom_call.1} parent=11 // pred_fallthru
          _
      $region12: #{tpu_custom_call.1} parent=5 // pred_fallthru
        _
      %p92 = scmp.lt.s32.totalorder %s17, 8
      // Predicated region
      $region17: #{tpu_custom_call.1} parent=5 // pred_check
        %p93 = pneg %p92
      $region18: #{tpu_custom_call.1} parent=5 // pred_check_branch
        %95 = sbr.rel (%p93) target = $region20
      $region19: #{tpu_custom_call.1} parent=5 // pred_region
        _
      $region20: #{tpu_custom_call.1} parent=5 // pred_fallthru
        _
      %p96 = scmp.le.s32.totalorder 1, %s17
      %p97 = scmp.lt.s32.totalorder %s17, 9
      %p98 = pnand %p96, %p97
      %p99 = pneg %p98
      // Predicated region
      $region21: #{tpu_custom_call.1} parent=5 // pred_check
        _
      $region22: #{tpu_custom_call.1} parent=5 // pred_check_branch
        %101 = sbr.rel (%p98) target = $region24
      $region23: #{tpu_custom_call.1} parent=5 // pred_region
        %s102 = ssub.s32 %s17, 1
        // Predicated region
        $region25: #{tpu_custom_call.1} parent=23 // pred_check
          %p103 = pneg %p38
        $region26: #{tpu_custom_call.1} parent=23 // pred_check_branch
          %105 = sbr.rel (%p103) target = $region28
        $region27: #{tpu_custom_call.1} parent=23 // pred_region
          %106 = dma.done [#allocation7], 1024
        $region28: #{tpu_custom_call.1} parent=23 // pred_fallthru
          _
        %p107 = pneg %p38
        %p108 = pneg %p35
        %p109 = pneg %p64
        %p110 = pneg %p61
        %s111 = sand.u32 %s51, 1
        %s112 = scalar_lea.sflag [#allocation8], %s111
        %s113 = sand.u32 %s51, 1
        %s114 = smul.addr %s113, 8
        %s115 = scalar_lea.vmem [#allocation9], %s114
        %p117 = scmp.lt.s32.totalorder %s22, 0
        %s118 = ssub.s32 0, %s22
        %s119 = scalar_select %p117, %s118, %s22
        %s120 = sand.u32 %s119, 1
        %s121 = ssub.s32 0, %s120
        %s122 = scalar_select %p117, %s121, %s120
        %p123 = scmp.eq.s32.totalorder %s22, 0
        // Predicated region
        $region29: #{tpu_custom_call.1} parent=23 // pred_check
          %p124 = pneg %p123
        $region30: #{tpu_custom_call.1} parent=23 // pred_check_branch
          %126 = sbr.rel (%p124) target = $region32
        $region31: #{tpu_custom_call.1} parent=23 // pred_region
          %s127 = sld [smem:[#allocation5]]
          %s128 = smul.addr %s127, 16
          %s129 = scalar_lea.hbm %s1, %s128
          // Predicated region
          $region33: #{tpu_custom_call.1} parent=31 // pred_check
            _
          $region34: #{tpu_custom_call.1} parent=31 // pred_check_branch
            %131 = sbr.rel target = $region36
          $region35: #{tpu_custom_call.1} parent=31 // pred_region
            %132 = sst [smem:[#allocation12]] [#allocation11]
            %133 = sst [smem:[#allocation13]] [#allocation10]
          $region36: #{tpu_custom_call.1} parent=31 // pred_fallthru
            _
          %135 = shalt.err (0)
          %s137 = sshll.u32 [#allocation2], 4
          %s138 = int_to_ptr.vmem [resolvable:$true] %s137
          %140 = dma.hbm_to_vmem [thread:$0]  %s129, 16, %s138, [#allocation3]
          %s141 = sld [smem:[#allocation5 + $0x1]]
          %s142 = smul.addr %s141, 16
          %s143 = scalar_lea.hbm %s1, %s142
          %s144 = scalar_lea.vmem [#allocation2], 8
          // Predicated region
          $region37: #{tpu_custom_call.1} parent=31 // pred_check
            _
          $region38: #{tpu_custom_call.1} parent=31 // pred_check_branch
            %146 = sbr.rel target = $region40
          $region39: #{tpu_custom_call.1} parent=31 // pred_region
            %147 = sst [smem:[#allocation12]] [#allocation15]
            %148 = sst [smem:[#allocation13]] [#allocation14]
          $region40: #{tpu_custom_call.1} parent=31 // pred_fallthru
            _
          %150 = shalt.err (0)
          %s152 = sshll.u32 %s144, 4
          %s153 = int_to_ptr.vmem [resolvable:$true] %s152
          %155 = dma.hbm_to_vmem [thread:$0]  %s143, 16, %s153, [#allocation3]
          %s156 = sld [smem:[#allocation5 + $0x2]]
          %s157 = smul.addr %s156, 16
          %s158 = scalar_lea.hbm %s1, %s157
          %s159 = scalar_lea.vmem [#allocation2], 16
          // Predicated region
          $region41: #{tpu_custom_call.1} parent=31 // pred_check
            _
          $region42: #{tpu_custom_call.1} parent=31 // pred_check_branch
            %161 = sbr.rel target = $region44
          $region43: #{tpu_custom_call.1} parent=31 // pred_region
            %162 = sst [smem:[#allocation12]] [#allocation17]
            %163 = sst [smem:[#allocation13]] [#allocation16]
          $region44: #{tpu_custom_call.1} parent=31 // pred_fallthru
            _
          %165 = shalt.err (0)
          %s167 = sshll.u32 %s159, 4
          %s168 = int_to_ptr.vmem [resolvable:$true] %s167
          %170 = dma.hbm_to_vmem [thread:$0]  %s158, 16, %s168, [#allocation3]
          %s171 = sld [smem:[#allocation5 + $0x3]]
          %s172 = smul.addr %s171, 16
          %s173 = scalar_lea.hbm %s1, %s172
          %s174 = scalar_lea.vmem [#allocation2], 24
          // Predicated region
          $region45: #{tpu_custom_call.1} parent=31 // pred_check
            _
          $region46: #{tpu_custom_call.1} parent=31 // pred_check_branch
            %176 = sbr.rel target = $region48
          $region47: #{tpu_custom_call.1} parent=31 // pred_region
            %177 = sst [smem:[#allocation12]] [#allocation19]
            %178 = sst [smem:[#allocation13]] [#allocation18]
          $region48: #{tpu_custom_call.1} parent=31 // pred_fallthru
            _
          %180 = shalt.err (0)
          %s182 = sshll.u32 %s174, 4
          %s183 = int_to_ptr.vmem [resolvable:$true] %s182
          %185 = dma.hbm_to_vmem [thread:$0]  %s173, 16, %s183, [#allocation3]
          %s186 = sld [smem:[#allocation5 + $0x4]]
          %s187 = smul.addr %s186, 16
          %s188 = scalar_lea.hbm %s1, %s187
          %s189 = scalar_lea.vmem [#allocation2], 32
          // Predicated region
          $region49: #{tpu_custom_call.1} parent=31 // pred_check
            _
          $region50: #{tpu_custom_call.1} parent=31 // pred_check_branch
            %191 = sbr.rel target = $region52
          $region51: #{tpu_custom_call.1} parent=31 // pred_region
            %192 = sst [smem:[#allocation12]] [#allocation21]
            %193 = sst [smem:[#allocation13]] [#allocation20]
          $region52: #{tpu_custom_call.1} parent=31 // pred_fallthru
            _
          %195 = shalt.err (0)
          %s197 = sshll.u32 %s189, 4
          %s198 = int_to_ptr.vmem [resolvable:$true] %s197
          %200 = dma.hbm_to_vmem [thread:$0]  %s188, 16, %s198, [#allocation3]
          %s201 = sld [smem:[#allocation5 + $0x5]]
          %s202 = smul.addr %s201, 16
          %s203 = scalar_lea.hbm %s1, %s202
          %s204 = scalar_lea.vmem [#allocation2], 1
          // Predicated region
          $region53: #{tpu_custom_call.1} parent=31 // pred_check
            _
          $region54: #{tpu_custom_call.1} parent=31 // pred_check_branch
            %206 = sbr.rel target = $region56
          $region55: #{tpu_custom_call.1} parent=31 // pred_region
            %207 = sst [smem:[#allocation12]] [#allocation23]
            %208 = sst [smem:[#allocation13]] [#allocation22]
          $region56: #{tpu_custom_call.1} parent=31 // pred_fallthru
            _
          %210 = shalt.err (0)
          %s212 = sshll.u32 %s204, 4
          %s213 = int_to_ptr.vmem [resolvable:$true] %s212
          %215 = dma.hbm_to_vmem [thread:$0]  %s203, 16, %s213, [#allocation3]
          %s216 = sld [smem:[#allocation5 + $0x6]]
          %s217 = smul.addr %s216, 16
          %s218 = scalar_lea.hbm %s1, %s217
          %s219 = scalar_lea.vmem [#allocation2], 9
          // Predicated region
          $region57: #{tpu_custom_call.1} parent=31 // pred_check
            _
          $region58: #{tpu_custom_call.1} parent=31 // pred_check_branch
            %221 = sbr.rel target = $region60
          $region59: #{tpu_custom_call.1} parent=31 // pred_region
            %222 = sst [smem:[#allocation12]] [#allocation25]
            %223 = sst [smem:[#allocation13]] [#allocation24]
          $region60: #{tpu_custom_call.1} parent=31 // pred_fallthru
            _
          %225 = shalt.err (0)
          %s227 = sshll.u32 %s219, 4
          %s228 = int_to_ptr.vmem [resolvable:$true] %s227
          %230 = dma.hbm_to_vmem [thread:$0]  %s218, 16, %s228, [#allocation3]
          %s231 = sld [smem:[#allocation5 + $0x7]]
          %s232 = smul.addr %s231, 16
          %s233 = scalar_lea.hbm %s1, %s232
          %s234 = scalar_lea.vmem [#allocation2], 17
          // Predicated region
          $region61: #{tpu_custom_call.1} parent=31 // pred_check
            _
          $region62: #{tpu_custom_call.1} parent=31 // pred_check_branch
            %236 = sbr.rel target = $region64
          $region63: #{tpu_custom_call.1} parent=31 // pred_region
            %237 = sst [smem:[#allocation12]] [#allocation27]
            %238 = sst [smem:[#allocation13]] [#allocation26]
          $region64: #{tpu_custom_call.1} parent=31 // pred_fallthru
            _
          %240 = shalt.err (0)
          %s242 = sshll.u32 %s234, 4
          %s243 = int_to_ptr.vmem [resolvable:$true] %s242
          %245 = dma.hbm_to_vmem [thread:$0]  %s233, 16, %s243, [#allocation3]
          %s246 = sld [smem:[#allocation5 + $0x8]]
          %s247 = smul.addr %s246, 16
          %s248 = scalar_lea.hbm %s1, %s247
          %s249 = scalar_lea.vmem [#allocation2], 25
          // Predicated region
          $region65: #{tpu_custom_call.1} parent=31 // pred_check
            _
          $region66: #{tpu_custom_call.1} parent=31 // pred_check_branch
            %251 = sbr.rel target = $region68
          $region67: #{tpu_custom_call.1} parent=31 // pred_region
            %252 = sst [smem:[#allocation12]] [#allocation29]
            %253 = sst [smem:[#allocation13]] [#allocation28]
          $region68: #{tpu_custom_call.1} parent=31 // pred_fallthru
            _
          %255 = shalt.err (0)
          %s257 = sshll.u32 %s249, 4
          %s258 = int_to_ptr.vmem [resolvable:$true] %s257
          %260 = dma.hbm_to_vmem [thread:$0]  %s248, 16, %s258, [#allocation3]
          %s261 = sld [smem:[#allocation5 + $0x9]]
          %s262 = smul.addr %s261, 16
          %s263 = scalar_lea.hbm %s1, %s262
          %s264 = scalar_lea.vmem [#allocation2], 33
          // Predicated region
          $region69: #{tpu_custom_call.1} parent=31 // pred_check
            _
          $region70: #{tpu_custom_call.1} parent=31 // pred_check_branch
            %266 = sbr.rel target = $region72
          $region71: #{tpu_custom_call.1} parent=31 // pred_region
            %267 = sst [smem:[#allocation12]] [#allocation31]
            %268 = sst [smem:[#allocation13]] [#allocation30]
          $region72: #{tpu_custom_call.1} parent=31 // pred_fallthru
            _
          %270 = shalt.err (0)
          %s272 = sshll.u32 %s264, 4
          %s273 = int_to_ptr.vmem [resolvable:$true] %s272
          %275 = dma.hbm_to_vmem [thread:$0]  %s263, 16, %s273, [#allocation3]
          %s276 = sld [smem:[#allocation5 + $0xa]]
          %s277 = smul.addr %s276, 16
          %s278 = scalar_lea.hbm %s1, %s277
          %s279 = scalar_lea.vmem [#allocation2], 2
          // Predicated region
          $region73: #{tpu_custom_call.1} parent=31 // pred_check
            _
          $region74: #{tpu_custom_call.1} parent=31 // pred_check_branch
            %281 = sbr.rel target = $region76
          $region75: #{tpu_custom_call.1} parent=31 // pred_region
            %282 = sst [smem:[#allocation12]] [#allocation33]
            %283 = sst [smem:[#allocation13]] [#allocation32]
          $region76: #{tpu_custom_call.1} parent=31 // pred_fallthru
            _
          %285 = shalt.err (0)
          %s287 = sshll.u32 %s279, 4
          %s288 = int_to_ptr.vmem [resolvable:$true] %s287
          %290 = dma.hbm_to_vmem [thread:$0]  %s278, 16, %s288, [#allocation3]
          %s291 = sld [smem:[#allocation5 + $0xb]]
          %s292 = smul.addr %s291, 16
          %s293 = scalar_lea.hbm %s1, %s292
          %s294 = scalar_lea.vmem [#allocation2], 10
          // Predicated region
          $region77: #{tpu_custom_call.1} parent=31 // pred_check
            _
          $region78: #{tpu_custom_call.1} parent=31 // pred_check_branch
            %296 = sbr.rel target = $region80
          $region79: #{tpu_custom_call.1} parent=31 // pred_region
            %297 = sst [smem:[#allocation12]] [#allocation35]
            %298 = sst [smem:[#allocation13]] [#allocation34]
          $region80: #{tpu_custom_call.1} parent=31 // pred_fallthru
            _
          %300 = shalt.err (0)
          %s302 = sshll.u32 %s294, 4
          %s303 = int_to_ptr.vmem [resolvable:$true] %s302
          %305 = dma.hbm_to_vmem [thread:$0]  %s293, 16, %s303, [#allocation3]
          %s306 = sld [smem:[#allocation5 + $0xc]]
          %s307 = smul.addr %s306, 16
          %s308 = scalar_lea.hbm %s1, %s307
          %s309 = scalar_lea.vmem [#allocation2], 18
          // Predicated region
          $region81: #{tpu_custom_call.1} parent=31 // pred_check
            _
          $region82: #{tpu_custom_call.1} parent=31 // pred_check_branch
            %311 = sbr.rel target = $region84
          $region83: #{tpu_custom_call.1} parent=31 // pred_region
            %312 = sst [smem:[#allocation12]] [#allocation37]
            %313 = sst [smem:[#allocation13]] [#allocation36]
          $region84: #{tpu_custom_call.1} parent=31 // pred_fallthru
            _
          %315 = shalt.err (0)
          %s317 = sshll.u32 %s309, 4
          %s318 = int_to_ptr.vmem [resolvable:$true] %s317
          %320 = dma.hbm_to_vmem [thread:$0]  %s308, 16, %s318, [#allocation3]
          %s321 = sld [smem:[#allocation5 + $0xd]]
          %s322 = smul.addr %s321, 16
          %s323 = scalar_lea.hbm %s1, %s322
          %s324 = scalar_lea.vmem [#allocation2], 26
          // Predicated region
          $region85: #{tpu_custom_call.1} parent=31 // pred_check
            _
          $region86: #{tpu_custom_call.1} parent=31 // pred_check_branch
            %326 = sbr.rel target = $region88
          $region87: #{tpu_custom_call.1} parent=31 // pred_region
            %327 = sst [smem:[#allocation12]] [#allocation39]
            %328 = sst [smem:[#allocation13]] [#allocation38]
          $region88: #{tpu_custom_call.1} parent=31 // pred_fallthru
            _
          %330 = shalt.err (0)
          %s332 = sshll.u32 %s324, 4
          %s333 = int_to_ptr.vmem [resolvable:$true] %s332
          %335 = dma.hbm_to_vmem [thread:$0]  %s323, 16, %s333, [#allocation3]
          %s336 = sld [smem:[#allocation5 + $0xe]]
          %s337 = smul.addr %s336, 16
          %s338 = scalar_lea.hbm %s1, %s337
          %s339 = scalar_lea.vmem [#allocation2], 34
          // Predicated region
          $region89: #{tpu_custom_call.1} parent=31 // pred_check
            _
          $region90: #{tpu_custom_call.1} parent=31 // pred_check_branch
            %341 = sbr.rel target = $region92
          $region91: #{tpu_custom_call.1} parent=31 // pred_region
            %342 = sst [smem:[#allocation12]] [#allocation41]
            %343 = sst [smem:[#allocation13]] [#allocation40]
          $region92: #{tpu_custom_call.1} parent=31 // pred_fallthru
            _
          %345 = shalt.err (0)
          %s347 = sshll.u32 %s339, 4
          %s348 = int_to_ptr.vmem [resolvable:$true] %s347
          %350 = dma.hbm_to_vmem [thread:$0]  %s338, 16, %s348, [#allocation3]
          %s351 = sld [smem:[#allocation5 + $0xf]]
          %s352 = smul.addr %s351, 16
          %s353 = scalar_lea.hbm %s1, %s352
          %s354 = scalar_lea.vmem [#allocation2], 3
          // Predicated region
          $region93: #{tpu_custom_call.1} parent=31 // pred_check
            _
          $region94: #{tpu_custom_call.1} parent=31 // pred_check_branch
            %356 = sbr.rel target = $region96
          $region95: #{tpu_custom_call.1} parent=31 // pred_region
            %357 = sst [smem:[#allocation12]] [#allocation43]
            %358 = sst [smem:[#allocation13]] [#allocation42]
          $region96: #{tpu_custom_call.1} parent=31 // pred_fallthru
            _
          %360 = shalt.err (0)
          %s362 = sshll.u32 %s354, 4
          %s363 = int_to_ptr.vmem [resolvable:$true] %s362
          %365 = dma.hbm_to_vmem [thread:$0]  %s353, 16, %s363, [#allocation3]
          %s366 = sld [smem:[#allocation5 + $0x10]]
          %s367 = smul.addr %s366, 16
          %s368 = scalar_lea.hbm %s1, %s367
          %s369 = scalar_lea.vmem [#allocation2], 11
          // Predicated region
          $region97: #{tpu_custom_call.1} parent=31 // pred_check
            _
          $region98: #{tpu_custom_call.1} parent=31 // pred_check_branch
            %371 = sbr.rel target = $region100
          $region99: #{tpu_custom_call.1} parent=31 // pred_region
            %372 = sst [smem:[#allocation12]] [#allocation45]
            %373 = sst [smem:[#allocation13]] [#allocation44]
          $region100: #{tpu_custom_call.1} parent=31 // pred_fallthru
            _
          %375 = shalt.err (0)
          %s377 = sshll.u32 %s369, 4
          %s378 = int_to_ptr.vmem [resolvable:$true] %s377
          %380 = dma.hbm_to_vmem [thread:$0]  %s368, 16, %s378, [#allocation3]
          %s381 = sld [smem:[#allocation5 + $0x11]]
          %s382 = smul.addr %s381, 16
          %s383 = scalar_lea.hbm %s1, %s382
          %s384 = scalar_lea.vmem [#allocation2], 19
          // Predicated region
          $region101: #{tpu_custom_call.1} parent=31 // pred_check
            _
          $region102: #{tpu_custom_call.1} parent=31 // pred_check_branch
            %386 = sbr.rel target = $region104
          $region103: #{tpu_custom_call.1} parent=31 // pred_region
            %387 = sst [smem:[#allocation12]] [#allocation47]
            %388 = sst [smem:[#allocation13]] [#allocation46]
          $region104: #{tpu_custom_call.1} parent=31 // pred_fallthru
            _
          %390 = shalt.err (0)
          %s392 = sshll.u32 %s384, 4
          %s393 = int_to_ptr.vmem [resolvable:$true] %s392
          %395 = dma.hbm_to_vmem [thread:$0]  %s383, 16, %s393, [#allocation3]
          %s396 = sld [smem:[#allocation5 + $0x12]]
          %s397 = smul.addr %s396, 16
          %s398 = scalar_lea.hbm %s1, %s397
          %s399 = scalar_lea.vmem [#allocation2], 27
          // Predicated region
          $region105: #{tpu_custom_call.1} parent=31 // pred_check
            _
          $region106: #{tpu_custom_call.1} parent=31 // pred_check_branch
            %401 = sbr.rel target = $region108
          $region107: #{tpu_custom_call.1} parent=31 // pred_region
            %402 = sst [smem:[#allocation12]] [#allocation49]
            %403 = sst [smem:[#allocation13]] [#allocation48]
          $region108: #{tpu_custom_call.1} parent=31 // pred_fallthru
            _
          %405 = shalt.err (0)
          %s407 = sshll.u32 %s399, 4
          %s408 = int_to_ptr.vmem [resolvable:$true] %s407
          %410 = dma.hbm_to_vmem [thread:$0]  %s398, 16, %s408, [#allocation3]
          %s411 = sld [smem:[#allocation5 + $0x13]]
          %s412 = smul.addr %s411, 16
          %s413 = scalar_lea.hbm %s1, %s412
          %s414 = scalar_lea.vmem [#allocation2], 35
          // Predicated region
          $region109: #{tpu_custom_call.1} parent=31 // pred_check
            _
          $region110: #{tpu_custom_call.1} parent=31 // pred_check_branch
            %416 = sbr.rel target = $region112
          $region111: #{tpu_custom_call.1} parent=31 // pred_region
            %417 = sst [smem:[#allocation12]] [#allocation51]
            %418 = sst [smem:[#allocation13]] [#allocation50]
          $region112: #{tpu_custom_call.1} parent=31 // pred_fallthru
            _
          %420 = shalt.err (0)
          %s422 = sshll.u32 %s414, 4
          %s423 = int_to_ptr.vmem [resolvable:$true] %s422
          %425 = dma.hbm_to_vmem [thread:$0]  %s413, 16, %s423, [#allocation3]
          %s426 = sld [smem:[#allocation5 + $0x14]]
          %s427 = smul.addr %s426, 16
          %s428 = scalar_lea.hbm %s1, %s427
          %s429 = scalar_lea.vmem [#allocation2], 4
          // Predicated region
          $region113: #{tpu_custom_call.1} parent=31 // pred_check
            _
          $region114: #{tpu_custom_call.1} parent=31 // pred_check_branch
            %431 = sbr.rel target = $region116
          $region115: #{tpu_custom_call.1} parent=31 // pred_region
            %432 = sst [smem:[#allocation12]] [#allocation53]
            %433 = sst [smem:[#allocation13]] [#allocation52]
          $region116: #{tpu_custom_call.1} parent=31 // pred_fallthru
            _
          %435 = shalt.err (0)
          %s437 = sshll.u32 %s429, 4
          %s438 = int_to_ptr.vmem [resolvable:$true] %s437
          %440 = dma.hbm_to_vmem [thread:$0]  %s428, 16, %s438, [#allocation3]
          %s441 = sld [smem:[#allocation5 + $0x15]]
          %s442 = smul.addr %s441, 16
          %s443 = scalar_lea.hbm %s1, %s442
          %s444 = scalar_lea.vmem [#allocation2], 12
          // Predicated region
          $region117: #{tpu_custom_call.1} parent=31 // pred_check
            _
          $region118: #{tpu_custom_call.1} parent=31 // pred_check_branch
            %446 = sbr.rel target = $region120
          $region119: #{tpu_custom_call.1} parent=31 // pred_region
            %447 = sst [smem:[#allocation12]] [#allocation55]
            %448 = sst [smem:[#allocation13]] [#allocation54]
          $region120: #{tpu_custom_call.1} parent=31 // pred_fallthru
            _
          %450 = shalt.err (0)
          %s452 = sshll.u32 %s444, 4
          %s453 = int_to_ptr.vmem [resolvable:$true] %s452
          %455 = dma.hbm_to_vmem [thread:$0]  %s443, 16, %s453, [#allocation3]
          %s456 = sld [smem:[#allocation5 + $0x16]]
          %s457 = smul.addr %s456, 16
          %s458 = scalar_lea.hbm %s1, %s457
          %s459 = scalar_lea.vmem [#allocation2], 20
          // Predicated region
          $region121: #{tpu_custom_call.1} parent=31 // pred_check
            _
          $region122: #{tpu_custom_call.1} parent=31 // pred_check_branch
            %461 = sbr.rel target = $region124
          $region123: #{tpu_custom_call.1} parent=31 // pred_region
            %462 = sst [smem:[#allocation12]] [#allocation57]
            %463 = sst [smem:[#allocation13]] [#allocation56]
          $region124: #{tpu_custom_call.1} parent=31 // pred_fallthru
            _
          %465 = shalt.err (0)
          %s467 = sshll.u32 %s459, 4
          %s468 = int_to_ptr.vmem [resolvable:$true] %s467
          %470 = dma.hbm_to_vmem [thread:$0]  %s458, 16, %s468, [#allocation3]
          %s471 = sld [smem:[#allocation5 + $0x17]]
          %s472 = smul.addr %s471, 16
          %s473 = scalar_lea.hbm %s1, %s472
          %s474 = scalar_lea.vmem [#allocation2], 28
          // Predicated region
          $region125: #{tpu_custom_call.1} parent=31 // pred_check
            _
          $region126: #{tpu_custom_call.1} parent=31 // pred_check_branch
            %476 = sbr.rel target = $region128
          $region127: #{tpu_custom_call.1} parent=31 // pred_region
            %477 = sst [smem:[#allocation12]] [#allocation59]
            %478 = sst [smem:[#allocation13]] [#allocation58]
          $region128: #{tpu_custom_call.1} parent=31 // pred_fallthru
            _
          %480 = shalt.err (0)
          %s482 = sshll.u32 %s474, 4
          %s483 = int_to_ptr.vmem [resolvable:$true] %s482
          %485 = dma.hbm_to_vmem [thread:$0]  %s473, 16, %s483, [#allocation3]
          %s486 = sld [smem:[#allocation5 + $0x18]]
          %s487 = smul.addr %s486, 16
          %s488 = scalar_lea.hbm %s1, %s487
          %s489 = scalar_lea.vmem [#allocation2], 36
          // Predicated region
          $region129: #{tpu_custom_call.1} parent=31 // pred_check
            _
          $region130: #{tpu_custom_call.1} parent=31 // pred_check_branch
            %491 = sbr.rel target = $region132
          $region131: #{tpu_custom_call.1} parent=31 // pred_region
            %492 = sst [smem:[#allocation12]] [#allocation61]
            %493 = sst [smem:[#allocation13]] [#allocation60]
          $region132: #{tpu_custom_call.1} parent=31 // pred_fallthru
            _
          %495 = shalt.err (0)
          %s497 = sshll.u32 %s489, 4
          %s498 = int_to_ptr.vmem [resolvable:$true] %s497
          %500 = dma.hbm_to_vmem [thread:$0]  %s488, 16, %s498, [#allocation3]
          %s501 = sld [smem:[#allocation5 + $0x19]]
          %s502 = smul.addr %s501, 16
          %s503 = scalar_lea.hbm %s1, %s502
          %s504 = scalar_lea.vmem [#allocation2], 5
          // Predicated region
          $region133: #{tpu_custom_call.1} parent=31 // pred_check
            _
          $region134: #{tpu_custom_call.1} parent=31 // pred_check_branch
            %506 = sbr.rel target = $region136
          $region135: #{tpu_custom_call.1} parent=31 // pred_region
            %507 = sst [smem:[#allocation12]] [#allocation63]
            %508 = sst [smem:[#allocation13]] [#allocation62]
          $region136: #{tpu_custom_call.1} parent=31 // pred_fallthru
            _
          %510 = shalt.err (0)
          %s512 = sshll.u32 %s504, 4
          %s513 = int_to_ptr.vmem [resolvable:$true] %s512
          %515 = dma.hbm_to_vmem [thread:$0]  %s503, 16, %s513, [#allocation3]
          %s516 = sld [smem:[#allocation5 + $0x1a]]
          %s517 = smul.addr %s516, 16
          %s518 = scalar_lea.hbm %s1, %s517
          %s519 = scalar_lea.vmem [#allocation2], 13
          // Predicated region
          $region137: #{tpu_custom_call.1} parent=31 // pred_check
            _
          $region138: #{tpu_custom_call.1} parent=31 // pred_check_branch
            %521 = sbr.rel target = $region140
          $region139: #{tpu_custom_call.1} parent=31 // pred_region
            %522 = sst [smem:[#allocation12]] [#allocation65]
            %523 = sst [smem:[#allocation13]] [#allocation64]
          $region140: #{tpu_custom_call.1} parent=31 // pred_fallthru
            _
          %525 = shalt.err (0)
          %s527 = sshll.u32 %s519, 4
          %s528 = int_to_ptr.vmem [resolvable:$true] %s527
          %530 = dma.hbm_to_vmem [thread:$0]  %s518, 16, %s528, [#allocation3]
          %s531 = sld [smem:[#allocation5 + $0x1b]]
          %s532 = smul.addr %s531, 16
          %s533 = scalar_lea.hbm %s1, %s532
          %s534 = scalar_lea.vmem [#allocation2], 21
          // Predicated region
          $region141: #{tpu_custom_call.1} parent=31 // pred_check
            _
          $region142: #{tpu_custom_call.1} parent=31 // pred_check_branch
            %536 = sbr.rel target = $region144
          $region143: #{tpu_custom_call.1} parent=31 // pred_region
            %537 = sst [smem:[#allocation12]] [#allocation67]
            %538 = sst [smem:[#allocation13]] [#allocation66]
          $region144: #{tpu_custom_call.1} parent=31 // pred_fallthru
            _
          %540 = shalt.err (0)
          %s542 = sshll.u32 %s534, 4
          %s543 = int_to_ptr.vmem [resolvable:$true] %s542
          %545 = dma.hbm_to_vmem [thread:$0]  %s533, 16, %s543, [#allocation3]
          %s546 = sld [smem:[#allocation5 + $0x1c]]
          %s547 = smul.addr %s546, 16
          %s548 = scalar_lea.hbm %s1, %s547
          %s549 = scalar_lea.vmem [#allocation2], 29
          // Predicated region
          $region145: #{tpu_custom_call.1} parent=31 // pred_check
            _
          $region146: #{tpu_custom_call.1} parent=31 // pred_check_branch
            %551 = sbr.rel target = $region148
          $region147: #{tpu_custom_call.1} parent=31 // pred_region
            %552 = sst [smem:[#allocation12]] [#allocation69]
            %553 = sst [smem:[#allocation13]] [#allocation68]
          $region148: #{tpu_custom_call.1} parent=31 // pred_fallthru
            _
          %555 = shalt.err (0)
          %s557 = sshll.u32 %s549, 4
          %s558 = int_to_ptr.vmem [resolvable:$true] %s557
          %560 = dma.hbm_to_vmem [thread:$0]  %s548, 16, %s558, [#allocation3]
          %s561 = sld [smem:[#allocation5 + $0x1d]]
          %s562 = smul.addr %s561, 16
          %s563 = scalar_lea.hbm %s1, %s562
          %s564 = scalar_lea.vmem [#allocation2], 37
          // Predicated region
          $region149: #{tpu_custom_call.1} parent=31 // pred_check
            _
          $region150: #{tpu_custom_call.1} parent=31 // pred_check_branch
            %566 = sbr.rel target = $region152
          $region151: #{tpu_custom_call.1} parent=31 // pred_region
            %567 = sst [smem:[#allocation12]] [#allocation71]
            %568 = sst [smem:[#allocation13]] [#allocation70]
          $region152: #{tpu_custom_call.1} parent=31 // pred_fallthru
            _
          %570 = shalt.err (0)
          %s572 = sshll.u32 %s564, 4
          %s573 = int_to_ptr.vmem [resolvable:$true] %s572
          %575 = dma.hbm_to_vmem [thread:$0]  %s563, 16, %s573, [#allocation3]
          %s576 = sld [smem:[#allocation5 + $0x1e]]
          %s577 = smul.addr %s576, 16
          %s578 = scalar_lea.hbm %s1, %s577
          %s579 = scalar_lea.vmem [#allocation2], 6
          // Predicated region
          $region153: #{tpu_custom_call.1} parent=31 // pred_check
            _
          $region154: #{tpu_custom_call.1} parent=31 // pred_check_branch
            %581 = sbr.rel target = $region156
          $region155: #{tpu_custom_call.1} parent=31 // pred_region
            %582 = sst [smem:[#allocation12]] [#allocation73]
            %583 = sst [smem:[#allocation13]] [#allocation72]
          $region156: #{tpu_custom_call.1} parent=31 // pred_fallthru
            _
          %585 = shalt.err (0)
          %s587 = sshll.u32 %s579, 4
          %s588 = int_to_ptr.vmem [resolvable:$true] %s587
          %590 = dma.hbm_to_vmem [thread:$0]  %s578, 16, %s588, [#allocation3]
          %s591 = sld [smem:[#allocation5 + $0x1f]]
          %s592 = smul.addr %s591, 16
          %s593 = scalar_lea.hbm %s1, %s592
          %s594 = scalar_lea.vmem [#allocation2], 14
          // Predicated region
          $region157: #{tpu_custom_call.1} parent=31 // pred_check
            _
          $region158: #{tpu_custom_call.1} parent=31 // pred_check_branch
            %596 = sbr.rel target = $region160
          $region159: #{tpu_custom_call.1} parent=31 // pred_region
            %597 = sst [smem:[#allocation12]] [#allocation75]
            %598 = sst [smem:[#allocation13]] [#allocation74]
          $region160: #{tpu_custom_call.1} parent=31 // pred_fallthru
            _
          %600 = shalt.err (0)
          %s602 = sshll.u32 %s594, 4
          %s603 = int_to_ptr.vmem [resolvable:$true] %s602
          %605 = dma.hbm_to_vmem [thread:$0]  %s593, 16, %s603, [#allocation3]
          %s606 = sld [smem:[#allocation5 + $0x20]]
          %s607 = smul.addr %s606, 16
          %s608 = scalar_lea.hbm %s1, %s607
          %s609 = scalar_lea.vmem [#allocation2], 22
          // Predicated region
          $region161: #{tpu_custom_call.1} parent=31 // pred_check
            _
          $region162: #{tpu_custom_call.1} parent=31 // pred_check_branch
            %611 = sbr.rel target = $region164
          $region163: #{tpu_custom_call.1} parent=31 // pred_region
            %612 = sst [smem:[#allocation12]] [#allocation77]
            %613 = sst [smem:[#allocation13]] [#allocation76]
          $region164: #{tpu_custom_call.1} parent=31 // pred_fallthru
            _
          %615 = shalt.err (0)
          %s617 = sshll.u32 %s609, 4
          %s618 = int_to_ptr.vmem [resolvable:$true] %s617
          %620 = dma.hbm_to_vmem [thread:$0]  %s608, 16, %s618, [#allocation3]
          %s621 = sld [smem:[#allocation5 + $0x21]]
          %s622 = smul.addr %s621, 16
          %s623 = scalar_lea.hbm %s1, %s622
          %s624 = scalar_lea.vmem [#allocation2], 30
          // Predicated region
          $region165: #{tpu_custom_call.1} parent=31 // pred_check
            _
          $region166: #{tpu_custom_call.1} parent=31 // pred_check_branch
            %626 = sbr.rel target = $region168
          $region167: #{tpu_custom_call.1} parent=31 // pred_region
            %627 = sst [smem:[#allocation12]] [#allocation79]
            %628 = sst [smem:[#allocation13]] [#allocation78]
          $region168: #{tpu_custom_call.1} parent=31 // pred_fallthru
            _
          %630 = shalt.err (0)
          %s632 = sshll.u32 %s624, 4
          %s633 = int_to_ptr.vmem [resolvable:$true] %s632
          %635 = dma.hbm_to_vmem [thread:$0]  %s623, 16, %s633, [#allocation3]
          %s636 = sld [smem:[#allocation5 + $0x22]]
          %s637 = smul.addr %s636, 16
          %s638 = scalar_lea.hbm %s1, %s637
          %s639 = scalar_lea.vmem [#allocation2], 38
          // Predicated region
          $region169: #{tpu_custom_call.1} parent=31 // pred_check
            _
          $region170: #{tpu_custom_call.1} parent=31 // pred_check_branch
            %641 = sbr.rel target = $region172
          $region171: #{tpu_custom_call.1} parent=31 // pred_region
            %642 = sst [smem:[#allocation12]] [#allocation81]
            %643 = sst [smem:[#allocation13]] [#allocation80]
          $region172: #{tpu_custom_call.1} parent=31 // pred_fallthru
            _
          %645 = shalt.err (0)
          %s647 = sshll.u32 %s639, 4
          %s648 = int_to_ptr.vmem [resolvable:$true] %s647
          %650 = dma.hbm_to_vmem [thread:$0]  %s638, 16, %s648, [#allocation3]
          %s651 = sld [smem:[#allocation5 + $0x23]]
          %s652 = smul.addr %s651, 16
          %s653 = scalar_lea.hbm %s1, %s652
          %s654 = scalar_lea.vmem [#allocation2], 7
          // Predicated region
          $region173: #{tpu_custom_call.1} parent=31 // pred_check
            _
          $region174: #{tpu_custom_call.1} parent=31 // pred_check_branch
            %656 = sbr.rel target = $region176
          $region175: #{tpu_custom_call.1} parent=31 // pred_region
            %657 = sst [smem:[#allocation12]] [#allocation83]
            %658 = sst [smem:[#allocation13]] [#allocation82]
          $region176: #{tpu_custom_call.1} parent=31 // pred_fallthru
            _
          %660 = shalt.err (0)
          %s662 = sshll.u32 %s654, 4
          %s663 = int_to_ptr.vmem [resolvable:$true] %s662
          %665 = dma.hbm_to_vmem [thread:$0]  %s653, 16, %s663, [#allocation3]
          %s666 = sld [smem:[#allocation5 + $0x24]]
          %s667 = smul.addr %s666, 16
          %s668 = scalar_lea.hbm %s1, %s667
          %s669 = scalar_lea.vmem [#allocation2], 15
          // Predicated region
          $region177: #{tpu_custom_call.1} parent=31 // pred_check
            _
          $region178: #{tpu_custom_call.1} parent=31 // pred_check_branch
            %671 = sbr.rel target = $region180
          $region179: #{tpu_custom_call.1} parent=31 // pred_region
            %672 = sst [smem:[#allocation12]] [#allocation85]
            %673 = sst [smem:[#allocation13]] [#allocation84]
          $region180: #{tpu_custom_call.1} parent=31 // pred_fallthru
            _
          %675 = shalt.err (0)
          %s677 = sshll.u32 %s669, 4
          %s678 = int_to_ptr.vmem [resolvable:$true] %s677
          %680 = dma.hbm_to_vmem [thread:$0]  %s668, 16, %s678, [#allocation3]
          %s681 = sld [smem:[#allocation5 + $0x25]]
          %s682 = smul.addr %s681, 16
          %s683 = scalar_lea.hbm %s1, %s682
          %s684 = scalar_lea.vmem [#allocation2], 23
          // Predicated region
          $region181: #{tpu_custom_call.1} parent=31 // pred_check
            _
          $region182: #{tpu_custom_call.1} parent=31 // pred_check_branch
            %686 = sbr.rel target = $region184
          $region183: #{tpu_custom_call.1} parent=31 // pred_region
            %687 = sst [smem:[#allocation12]] [#allocation87]
            %688 = sst [smem:[#allocation13]] [#allocation86]
          $region184: #{tpu_custom_call.1} parent=31 // pred_fallthru
            _
          %690 = shalt.err (0)
          %s692 = sshll.u32 %s684, 4
          %s693 = int_to_ptr.vmem [resolvable:$true] %s692
          %695 = dma.hbm_to_vmem [thread:$0]  %s683, 16, %s693, [#allocation3]
          %s696 = sld [smem:[#allocation5 + $0x26]]
          %s697 = smul.addr %s696, 16
          %s698 = scalar_lea.hbm %s1, %s697
          %s699 = scalar_lea.vmem [#allocation2], 31
          // Predicated region
          $region185: #{tpu_custom_call.1} parent=31 // pred_check
            _
          $region186: #{tpu_custom_call.1} parent=31 // pred_check_branch
            %701 = sbr.rel target = $region188
          $region187: #{tpu_custom_call.1} parent=31 // pred_region
            %702 = sst [smem:[#allocation12]] [#allocation89]
            %703 = sst [smem:[#allocation13]] [#allocation88]
          $region188: #{tpu_custom_call.1} parent=31 // pred_fallthru
            _
          %705 = shalt.err (0)
          %s707 = sshll.u32 %s699, 4
          %s708 = int_to_ptr.vmem [resolvable:$true] %s707
          %710 = dma.hbm_to_vmem [thread:$0]  %s698, 16, %s708, [#allocation3]
          %s711 = sld [smem:[#allocation5 + $0x27]]
          %s712 = smul.addr %s711, 16
          %s713 = scalar_lea.hbm %s1, %s712
          %s714 = scalar_lea.vmem [#allocation2], 39
          // Predicated region
          $region189: #{tpu_custom_call.1} parent=31 // pred_check
            _
          $region190: #{tpu_custom_call.1} parent=31 // pred_check_branch
            %716 = sbr.rel target = $region192
          $region191: #{tpu_custom_call.1} parent=31 // pred_region
            %717 = sst [smem:[#allocation12]] [#allocation91]
            %718 = sst [smem:[#allocation13]] [#allocation90]
          $region192: #{tpu_custom_call.1} parent=31 // pred_fallthru
            _
          %720 = shalt.err (0)
          %s722 = sshll.u32 %s714, 4
          %s723 = int_to_ptr.vmem [resolvable:$true] %s722
          %725 = dma.hbm_to_vmem [thread:$0]  %s713, 16, %s723, [#allocation3]
        $region32: #{tpu_custom_call.1} parent=23 // pred_fallthru
          _
        %s726 = sadd.s32 %s22, 1
        %p727 = scmp.lt.s32.totalorder %s726, 8
        // Predicated region
        $region193: #{tpu_custom_call.1} parent=23 // pred_check
          %p728 = pneg %p727
        $region194: #{tpu_custom_call.1} parent=23 // pred_check_branch
          %730 = sbr.rel (%p728) target = $region196
        $region195: #{tpu_custom_call.1} parent=23 // pred_region
          %s731 = ssub.s32 1, %s122
          %s732 = smul.u32 %s726, 40
          %s733 = sld [smem:[#allocation5 + %s732]]
          %s734 = smul.addr %s733, 16
          %s735 = scalar_lea.hbm %s1, %s734
          %s736 = smul.u32 %s731, 40
          %s737 = scalar_lea.vmem [#allocation2], %s736
          %s738 = scalar_lea.sflag [#allocation3], %s731
          // Predicated region
          $region197: #{tpu_custom_call.1} parent=195 // pred_check
            _
          $region198: #{tpu_custom_call.1} parent=195 // pred_check_branch
            %740 = sbr.rel target = $region200
          $region199: #{tpu_custom_call.1} parent=195 // pred_region
            %741 = sst [smem:[#allocation12]] [#allocation93]
            %742 = sst [smem:[#allocation13]] [#allocation92]
          $region200: #{tpu_custom_call.1} parent=195 // pred_fallthru
            _
          %744 = shalt.err (0)
          %s746 = sshll.u32 %s737, 4
          %s747 = int_to_ptr.vmem [resolvable:$true] %s746
          %749 = dma.hbm_to_vmem [thread:$0]  %s735, 16, %s747, %s738
          %s750 = sadd.s32 %s732, 1
          %s751 = sld [smem:[#allocation5 + %s750]]
          %s752 = smul.addr %s751, 16
          %s753 = scalar_lea.hbm %s1, %s752
          %s754 = sadd.s32 8, %s736
          %s755 = scalar_lea.vmem [#allocation2], %s754
          // Predicated region
          $region201: #{tpu_custom_call.1} parent=195 // pred_check
            _
          $region202: #{tpu_custom_call.1} parent=195 // pred_check_branch
            %757 = sbr.rel target = $region204
          $region203: #{tpu_custom_call.1} parent=195 // pred_region
            %758 = sst [smem:[#allocation12]] [#allocation95]
            %759 = sst [smem:[#allocation13]] [#allocation94]
          $region204: #{tpu_custom_call.1} parent=195 // pred_fallthru
            _
          %761 = shalt.err (0)
          %s763 = sshll.u32 %s755, 4
          %s764 = int_to_ptr.vmem [resolvable:$true] %s763
          %766 = dma.hbm_to_vmem [thread:$0]  %s753, 16, %s764, %s738
          %s767 = sadd.s32 %s732, 2
          %s768 = sld [smem:[#allocation5 + %s767]]
          %s769 = smul.addr %s768, 16
          %s770 = scalar_lea.hbm %s1, %s769
          %s771 = sadd.s32 16, %s736
          %s772 = scalar_lea.vmem [#allocation2], %s771
          // Predicated region
          $region205: #{tpu_custom_call.1} parent=195 // pred_check
            _
          $region206: #{tpu_custom_call.1} parent=195 // pred_check_branch
            %774 = sbr.rel target = $region208
          $region207: #{tpu_custom_call.1} parent=195 // pred_region
            %775 = sst [smem:[#allocation12]] [#allocation97]
            %776 = sst [smem:[#allocation13]] [#allocation96]
          $region208: #{tpu_custom_call.1} parent=195 // pred_fallthru
            _
          %778 = shalt.err (0)
          %s780 = sshll.u32 %s772, 4
          %s781 = int_to_ptr.vmem [resolvable:$true] %s780
          %783 = dma.hbm_to_vmem [thread:$0]  %s770, 16, %s781, %s738
          %s784 = sadd.s32 %s732, 3
          %s785 = sld [smem:[#allocation5 + %s784]]
          %s786 = smul.addr %s785, 16
          %s787 = scalar_lea.hbm %s1, %s786
          %s788 = sadd.s32 24, %s736
          %s789 = scalar_lea.vmem [#allocation2], %s788
          // Predicated region
          $region209: #{tpu_custom_call.1} parent=195 // pred_check
            _
          $region210: #{tpu_custom_call.1} parent=195 // pred_check_branch
            %791 = sbr.rel target = $region212
          $region211: #{tpu_custom_call.1} parent=195 // pred_region
            %792 = sst [smem:[#allocation12]] [#allocation99]
            %793 = sst [smem:[#allocation13]] [#allocation98]
          $region212: #{tpu_custom_call.1} parent=195 // pred_fallthru
            _
          %795 = shalt.err (0)
          %s797 = sshll.u32 %s789, 4
          %s798 = int_to_ptr.vmem [resolvable:$true] %s797
          %800 = dma.hbm_to_vmem [thread:$0]  %s787, 16, %s798, %s738
          %s801 = sadd.s32 %s732, 4
          %s802 = sld [smem:[#allocation5 + %s801]]
          %s803 = smul.addr %s802, 16
          %s804 = scalar_lea.hbm %s1, %s803
          %s805 = sadd.s32 32, %s736
          %s806 = scalar_lea.vmem [#allocation2], %s805
          // Predicated region
          $region213: #{tpu_custom_call.1} parent=195 // pred_check
            _
          $region214: #{tpu_custom_call.1} parent=195 // pred_check_branch
            %808 = sbr.rel target = $region216
          $region215: #{tpu_custom_call.1} parent=195 // pred_region
            %809 = sst [smem:[#allocation12]] [#allocation101]
            %810 = sst [smem:[#allocation13]] [#allocation100]
          $region216: #{tpu_custom_call.1} parent=195 // pred_fallthru
            _
          %812 = shalt.err (0)
          %s814 = sshll.u32 %s806, 4
          %s815 = int_to_ptr.vmem [resolvable:$true] %s814
          %817 = dma.hbm_to_vmem [thread:$0]  %s804, 16, %s815, %s738
          %s818 = sadd.s32 %s732, 5
          %s819 = sld [smem:[#allocation5 + %s818]]
          %s820 = smul.addr %s819, 16
          %s821 = scalar_lea.hbm %s1, %s820
          %s822 = sadd.s32 1, %s736
          %s823 = scalar_lea.vmem [#allocation2], %s822
          // Predicated region
          $region217: #{tpu_custom_call.1} parent=195 // pred_check
            _
          $region218: #{tpu_custom_call.1} parent=195 // pred_check_branch
            %825 = sbr.rel target = $region220
          $region219: #{tpu_custom_call.1} parent=195 // pred_region
            %826 = sst [smem:[#allocation12]] [#allocation103]
            %827 = sst [smem:[#allocation13]] [#allocation102]
          $region220: #{tpu_custom_call.1} parent=195 // pred_fallthru
            _
          %829 = shalt.err (0)
          %s831 = sshll.u32 %s823, 4
          %s832 = int_to_ptr.vmem [resolvable:$true] %s831
          %834 = dma.hbm_to_vmem [thread:$0]  %s821, 16, %s832, %s738
          %s835 = sadd.s32 %s732, 6
          %s836 = sld [smem:[#allocation5 + %s835]]
          %s837 = smul.addr %s836, 16
          %s838 = scalar_lea.hbm %s1, %s837
          %s839 = sadd.s32 9, %s736
          %s840 = scalar_lea.vmem [#allocation2], %s839
          // Predicated region
          $region221: #{tpu_custom_call.1} parent=195 // pred_check
            _
          $region222: #{tpu_custom_call.1} parent=195 // pred_check_branch
            %842 = sbr.rel target = $region224
          $region223: #{tpu_custom_call.1} parent=195 // pred_region
            %843 = sst [smem:[#allocation12]] [#allocation105]
            %844 = sst [smem:[#allocation13]] [#allocation104]
          $region224: #{tpu_custom_call.1} parent=195 // pred_fallthru
            _
          %846 = shalt.err (0)
          %s848 = sshll.u32 %s840, 4
          %s849 = int_to_ptr.vmem [resolvable:$true] %s848
          %851 = dma.hbm_to_vmem [thread:$0]  %s838, 16, %s849, %s738
          %s852 = sadd.s32 %s732, 7
          %s853 = sld [smem:[#allocation5 + %s852]]
          %s854 = smul.addr %s853, 16
          %s855 = scalar_lea.hbm %s1, %s854
          %s856 = sadd.s32 17, %s736
          %s857 = scalar_lea.vmem [#allocation2], %s856
          // Predicated region
          $region225: #{tpu_custom_call.1} parent=195 // pred_check
            _
          $region226: #{tpu_custom_call.1} parent=195 // pred_check_branch
            %859 = sbr.rel target = $region228
          $region227: #{tpu_custom_call.1} parent=195 // pred_region
            %860 = sst [smem:[#allocation12]] [#allocation107]
            %861 = sst [smem:[#allocation13]] [#allocation106]
          $region228: #{tpu_custom_call.1} parent=195 // pred_fallthru
            _
          %863 = shalt.err (0)
          %s865 = sshll.u32 %s857, 4
          %s866 = int_to_ptr.vmem [resolvable:$true] %s865
          %868 = dma.hbm_to_vmem [thread:$0]  %s855, 16, %s866, %s738
          %s869 = sadd.s32 %s732, 8
          %s870 = sld [smem:[#allocation5 + %s869]]
          %s871 = smul.addr %s870, 16
          %s872 = scalar_lea.hbm %s1, %s871
          %s873 = sadd.s32 25, %s736
          %s874 = scalar_lea.vmem [#allocation2], %s873
          // Predicated region
          $region229: #{tpu_custom_call.1} parent=195 // pred_check
            _
          $region230: #{tpu_custom_call.1} parent=195 // pred_check_branch
            %876 = sbr.rel target = $region232
          $region231: #{tpu_custom_call.1} parent=195 // pred_region
            %877 = sst [smem:[#allocation12]] [#allocation109]
            %878 = sst [smem:[#allocation13]] [#allocation108]
          $region232: #{tpu_custom_call.1} parent=195 // pred_fallthru
            _
          %880 = shalt.err (0)
          %s882 = sshll.u32 %s874, 4
          %s883 = int_to_ptr.vmem [resolvable:$true] %s882
          %885 = dma.hbm_to_vmem [thread:$0]  %s872, 16, %s883, %s738
          %s886 = sadd.s32 %s732, 9
          %s887 = sld [smem:[#allocation5 + %s886]]
          %s888 = smul.addr %s887, 16
          %s889 = scalar_lea.hbm %s1, %s888
          %s890 = sadd.s32 33, %s736
          %s891 = scalar_lea.vmem [#allocation2], %s890
          // Predicated region
          $region233: #{tpu_custom_call.1} parent=195 // pred_check
            _
          $region234: #{tpu_custom_call.1} parent=195 // pred_check_branch
            %893 = sbr.rel target = $region236
          $region235: #{tpu_custom_call.1} parent=195 // pred_region
            %894 = sst [smem:[#allocation12]] [#allocation111]
            %895 = sst [smem:[#allocation13]] [#allocation110]
          $region236: #{tpu_custom_call.1} parent=195 // pred_fallthru
            _
          %897 = shalt.err (0)
          %s899 = sshll.u32 %s891, 4
          %s900 = int_to_ptr.vmem [resolvable:$true] %s899
          %902 = dma.hbm_to_vmem [thread:$0]  %s889, 16, %s900, %s738
          %s903 = sadd.s32 %s732, 10
          %s904 = sld [smem:[#allocation5 + %s903]]
          %s905 = smul.addr %s904, 16
          %s906 = scalar_lea.hbm %s1, %s905
          %s907 = sadd.s32 2, %s736
          %s908 = scalar_lea.vmem [#allocation2], %s907
          // Predicated region
          $region237: #{tpu_custom_call.1} parent=195 // pred_check
            _
          $region238: #{tpu_custom_call.1} parent=195 // pred_check_branch
            %910 = sbr.rel target = $region240
          $region239: #{tpu_custom_call.1} parent=195 // pred_region
            %911 = sst [smem:[#allocation12]] [#allocation113]
            %912 = sst [smem:[#allocation13]] [#allocation112]
          $region240: #{tpu_custom_call.1} parent=195 // pred_fallthru
            _
          %914 = shalt.err (0)
          %s916 = sshll.u32 %s908, 4
          %s917 = int_to_ptr.vmem [resolvable:$true] %s916
          %919 = dma.hbm_to_vmem [thread:$0]  %s906, 16, %s917, %s738
          %s920 = sadd.s32 %s732, 11
          %s921 = sld [smem:[#allocation5 + %s920]]
          %s922 = smul.addr %s921, 16
          %s923 = scalar_lea.hbm %s1, %s922
          %s924 = sadd.s32 10, %s736
          %s925 = scalar_lea.vmem [#allocation2], %s924
          // Predicated region
          $region241: #{tpu_custom_call.1} parent=195 // pred_check
            _
          $region242: #{tpu_custom_call.1} parent=195 // pred_check_branch
            %927 = sbr.rel target = $region244
          $region243: #{tpu_custom_call.1} parent=195 // pred_region
            %928 = sst [smem:[#allocation12]] [#allocation115]
            %929 = sst [smem:[#allocation13]] [#allocation114]
          $region244: #{tpu_custom_call.1} parent=195 // pred_fallthru
            _
          %931 = shalt.err (0)
          %s933 = sshll.u32 %s925, 4
          %s934 = int_to_ptr.vmem [resolvable:$true] %s933
          %936 = dma.hbm_to_vmem [thread:$0]  %s923, 16, %s934, %s738
          %s937 = sadd.s32 %s732, 12
          %s938 = sld [smem:[#allocation5 + %s937]]
          %s939 = smul.addr %s938, 16
          %s940 = scalar_lea.hbm %s1, %s939
          %s941 = sadd.s32 18, %s736
          %s942 = scalar_lea.vmem [#allocation2], %s941
          // Predicated region
          $region245: #{tpu_custom_call.1} parent=195 // pred_check
            _
          $region246: #{tpu_custom_call.1} parent=195 // pred_check_branch
            %944 = sbr.rel target = $region248
          $region247: #{tpu_custom_call.1} parent=195 // pred_region
            %945 = sst [smem:[#allocation12]] [#allocation117]
            %946 = sst [smem:[#allocation13]] [#allocation116]
          $region248: #{tpu_custom_call.1} parent=195 // pred_fallthru
            _
          %948 = shalt.err (0)
          %s950 = sshll.u32 %s942, 4
          %s951 = int_to_ptr.vmem [resolvable:$true] %s950
          %953 = dma.hbm_to_vmem [thread:$0]  %s940, 16, %s951, %s738
          %s954 = sadd.s32 %s732, 13
          %s955 = sld [smem:[#allocation5 + %s954]]
          %s956 = smul.addr %s955, 16
          %s957 = scalar_lea.hbm %s1, %s956
          %s958 = sadd.s32 26, %s736
          %s959 = scalar_lea.vmem [#allocation2], %s958
          // Predicated region
          $region249: #{tpu_custom_call.1} parent=195 // pred_check
            _
          $region250: #{tpu_custom_call.1} parent=195 // pred_check_branch
            %961 = sbr.rel target = $region252
          $region251: #{tpu_custom_call.1} parent=195 // pred_region
            %962 = sst [smem:[#allocation12]] [#allocation119]
            %963 = sst [smem:[#allocation13]] [#allocation118]
          $region252: #{tpu_custom_call.1} parent=195 // pred_fallthru
            _
          %965 = shalt.err (0)
          %s967 = sshll.u32 %s959, 4
          %s968 = int_to_ptr.vmem [resolvable:$true] %s967
          %970 = dma.hbm_to_vmem [thread:$0]  %s957, 16, %s968, %s738
          %s971 = sadd.s32 %s732, 14
          %s972 = sld [smem:[#allocation5 + %s971]]
          %s973 = smul.addr %s972, 16
          %s974 = scalar_lea.hbm %s1, %s973
          %s975 = sadd.s32 34, %s736
          %s976 = scalar_lea.vmem [#allocation2], %s975
          // Predicated region
          $region253: #{tpu_custom_call.1} parent=195 // pred_check
            _
          $region254: #{tpu_custom_call.1} parent=195 // pred_check_branch
            %978 = sbr.rel target = $region256
          $region255: #{tpu_custom_call.1} parent=195 // pred_region
            %979 = sst [smem:[#allocation12]] [#allocation121]
            %980 = sst [smem:[#allocation13]] [#allocation120]
          $region256: #{tpu_custom_call.1} parent=195 // pred_fallthru
            _
          %982 = shalt.err (0)
          %s984 = sshll.u32 %s976, 4
          %s985 = int_to_ptr.vmem [resolvable:$true] %s984
          %987 = dma.hbm_to_vmem [thread:$0]  %s974, 16, %s985, %s738
          %s988 = sadd.s32 %s732, 15
          %s989 = sld [smem:[#allocation5 + %s988]]
          %s990 = smul.addr %s989, 16
          %s991 = scalar_lea.hbm %s1, %s990
          %s992 = sadd.s32 3, %s736
          %s993 = scalar_lea.vmem [#allocation2], %s992
          // Predicated region
          $region257: #{tpu_custom_call.1} parent=195 // pred_check
            _
          $region258: #{tpu_custom_call.1} parent=195 // pred_check_branch
            %995 = sbr.rel target = $region260
          $region259: #{tpu_custom_call.1} parent=195 // pred_region
            %996 = sst [smem:[#allocation12]] [#allocation123]
            %997 = sst [smem:[#allocation13]] [#allocation122]
          $region260: #{tpu_custom_call.1} parent=195 // pred_fallthru
            _
          %999 = shalt.err (0)
          %s1001 = sshll.u32 %s993, 4
          %s1002 = int_to_ptr.vmem [resolvable:$true] %s1001
          %1004 = dma.hbm_to_vmem [thread:$0]  %s991, 16, %s1002, %s738
          %s1005 = sadd.s32 %s732, 16
          %s1006 = sld [smem:[#allocation5 + %s1005]]
          %s1007 = smul.addr %s1006, 16
          %s1008 = scalar_lea.hbm %s1, %s1007
          %s1009 = sadd.s32 11, %s736
          %s1010 = scalar_lea.vmem [#allocation2], %s1009
          // Predicated region
          $region261: #{tpu_custom_call.1} parent=195 // pred_check
            _
          $region262: #{tpu_custom_call.1} parent=195 // pred_check_branch
            %1012 = sbr.rel target = $region264
          $region263: #{tpu_custom_call.1} parent=195 // pred_region
            %1013 = sst [smem:[#allocation12]] [#allocation125]
            %1014 = sst [smem:[#allocation13]] [#allocation124]
          $region264: #{tpu_custom_call.1} parent=195 // pred_fallthru
            _
          %1016 = shalt.err (0)
          %s1018 = sshll.u32 %s1010, 4
          %s1019 = int_to_ptr.vmem [resolvable:$true] %s1018
          %1021 = dma.hbm_to_vmem [thread:$0]  %s1008, 16, %s1019, %s738
          %s1022 = sadd.s32 %s732, 17
          %s1023 = sld [smem:[#allocation5 + %s1022]]
          %s1024 = smul.addr %s1023, 16
          %s1025 = scalar_lea.hbm %s1, %s1024
          %s1026 = sadd.s32 19, %s736
          %s1027 = scalar_lea.vmem [#allocation2], %s1026
          // Predicated region
          $region265: #{tpu_custom_call.1} parent=195 // pred_check
            _
          $region266: #{tpu_custom_call.1} parent=195 // pred_check_branch
            %1029 = sbr.rel target = $region268
          $region267: #{tpu_custom_call.1} parent=195 // pred_region
            %1030 = sst [smem:[#allocation12]] [#allocation127]
            %1031 = sst [smem:[#allocation13]] [#allocation126]
          $region268: #{tpu_custom_call.1} parent=195 // pred_fallthru
            _
          %1033 = shalt.err (0)
          %s1035 = sshll.u32 %s1027, 4
          %s1036 = int_to_ptr.vmem [resolvable:$true] %s1035
          %1038 = dma.hbm_to_vmem [thread:$0]  %s1025, 16, %s1036, %s738
          %s1039 = sadd.s32 %s732, 18
          %s1040 = sld [smem:[#allocation5 + %s1039]]
          %s1041 = smul.addr %s1040, 16
          %s1042 = scalar_lea.hbm %s1, %s1041
          %s1043 = sadd.s32 27, %s736
          %s1044 = scalar_lea.vmem [#allocation2], %s1043
          // Predicated region
          $region269: #{tpu_custom_call.1} parent=195 // pred_check
            _
          $region270: #{tpu_custom_call.1} parent=195 // pred_check_branch
            %1046 = sbr.rel target = $region272
          $region271: #{tpu_custom_call.1} parent=195 // pred_region
            %1047 = sst [smem:[#allocation12]] [#allocation129]
            %1048 = sst [smem:[#allocation13]] [#allocation128]
          $region272: #{tpu_custom_call.1} parent=195 // pred_fallthru
            _
          %1050 = shalt.err (0)
          %s1052 = sshll.u32 %s1044, 4
          %s1053 = int_to_ptr.vmem [resolvable:$true] %s1052
          %1055 = dma.hbm_to_vmem [thread:$0]  %s1042, 16, %s1053, %s738
          %s1056 = sadd.s32 %s732, 19
          %s1057 = sld [smem:[#allocation5 + %s1056]]
          %s1058 = smul.addr %s1057, 16
          %s1059 = scalar_lea.hbm %s1, %s1058
          %s1060 = sadd.s32 35, %s736
          %s1061 = scalar_lea.vmem [#allocation2], %s1060
          // Predicated region
          $region273: #{tpu_custom_call.1} parent=195 // pred_check
            _
          $region274: #{tpu_custom_call.1} parent=195 // pred_check_branch
            %1063 = sbr.rel target = $region276
          $region275: #{tpu_custom_call.1} parent=195 // pred_region
            %1064 = sst [smem:[#allocation12]] [#allocation131]
            %1065 = sst [smem:[#allocation13]] [#allocation130]
          $region276: #{tpu_custom_call.1} parent=195 // pred_fallthru
            _
          %1067 = shalt.err (0)
          %s1069 = sshll.u32 %s1061, 4
          %s1070 = int_to_ptr.vmem [resolvable:$true] %s1069
          %1072 = dma.hbm_to_vmem [thread:$0]  %s1059, 16, %s1070, %s738
          %s1073 = sadd.s32 %s732, 20
          %s1074 = sld [smem:[#allocation5 + %s1073]]
          %s1075 = smul.addr %s1074, 16
          %s1076 = scalar_lea.hbm %s1, %s1075
          %s1077 = sadd.s32 4, %s736
          %s1078 = scalar_lea.vmem [#allocation2], %s1077
          // Predicated region
          $region277: #{tpu_custom_call.1} parent=195 // pred_check
            _
          $region278: #{tpu_custom_call.1} parent=195 // pred_check_branch
            %1080 = sbr.rel target = $region280
          $region279: #{tpu_custom_call.1} parent=195 // pred_region
            %1081 = sst [smem:[#allocation12]] [#allocation133]
            %1082 = sst [smem:[#allocation13]] [#allocation132]
          $region280: #{tpu_custom_call.1} parent=195 // pred_fallthru
            _
          %1084 = shalt.err (0)
          %s1086 = sshll.u32 %s1078, 4
          %s1087 = int_to_ptr.vmem [resolvable:$true] %s1086
          %1089 = dma.hbm_to_vmem [thread:$0]  %s1076, 16, %s1087, %s738
          %s1090 = sadd.s32 %s732, 21
          %s1091 = sld [smem:[#allocation5 + %s1090]]
          %s1092 = smul.addr %s1091, 16
          %s1093 = scalar_lea.hbm %s1, %s1092
          %s1094 = sadd.s32 12, %s736
          %s1095 = scalar_lea.vmem [#allocation2], %s1094
          // Predicated region
          $region281: #{tpu_custom_call.1} parent=195 // pred_check
            _
          $region282: #{tpu_custom_call.1} parent=195 // pred_check_branch
            %1097 = sbr.rel target = $region284
          $region283: #{tpu_custom_call.1} parent=195 // pred_region
            %1098 = sst [smem:[#allocation12]] [#allocation135]
            %1099 = sst [smem:[#allocation13]] [#allocation134]
          $region284: #{tpu_custom_call.1} parent=195 // pred_fallthru
            _
          %1101 = shalt.err (0)
          %s1103 = sshll.u32 %s1095, 4
          %s1104 = int_to_ptr.vmem [resolvable:$true] %s1103
          %1106 = dma.hbm_to_vmem [thread:$0]  %s1093, 16, %s1104, %s738
          %s1107 = sadd.s32 %s732, 22
          %s1108 = sld [smem:[#allocation5 + %s1107]]
          %s1109 = smul.addr %s1108, 16
          %s1110 = scalar_lea.hbm %s1, %s1109
          %s1111 = sadd.s32 20, %s736
          %s1112 = scalar_lea.vmem [#allocation2], %s1111
          // Predicated region
          $region285: #{tpu_custom_call.1} parent=195 // pred_check
            _
          $region286: #{tpu_custom_call.1} parent=195 // pred_check_branch
            %1114 = sbr.rel target = $region288
          $region287: #{tpu_custom_call.1} parent=195 // pred_region
            %1115 = sst [smem:[#allocation12]] [#allocation137]
            %1116 = sst [smem:[#allocation13]] [#allocation136]
          $region288: #{tpu_custom_call.1} parent=195 // pred_fallthru
            _
          %1118 = shalt.err (0)
          %s1120 = sshll.u32 %s1112, 4
          %s1121 = int_to_ptr.vmem [resolvable:$true] %s1120
          %1123 = dma.hbm_to_vmem [thread:$0]  %s1110, 16, %s1121, %s738
          %s1124 = sadd.s32 %s732, 23
          %s1125 = sld [smem:[#allocation5 + %s1124]]
          %s1126 = smul.addr %s1125, 16
          %s1127 = scalar_lea.hbm %s1, %s1126
          %s1128 = sadd.s32 28, %s736
          %s1129 = scalar_lea.vmem [#allocation2], %s1128
          // Predicated region
          $region289: #{tpu_custom_call.1} parent=195 // pred_check
            _
          $region290: #{tpu_custom_call.1} parent=195 // pred_check_branch
            %1131 = sbr.rel target = $region292
          $region291: #{tpu_custom_call.1} parent=195 // pred_region
            %1132 = sst [smem:[#allocation12]] [#allocation139]
            %1133 = sst [smem:[#allocation13]] [#allocation138]
          $region292: #{tpu_custom_call.1} parent=195 // pred_fallthru
            _
          %1135 = shalt.err (0)
          %s1137 = sshll.u32 %s1129, 4
          %s1138 = int_to_ptr.vmem [resolvable:$true] %s1137
          %1140 = dma.hbm_to_vmem [thread:$0]  %s1127, 16, %s1138, %s738
          %s1141 = sadd.s32 %s732, 24
          %s1142 = sld [smem:[#allocation5 + %s1141]]
          %s1143 = smul.addr %s1142, 16
          %s1144 = scalar_lea.hbm %s1, %s1143
          %s1145 = sadd.s32 36, %s736
          %s1146 = scalar_lea.vmem [#allocation2], %s1145
          // Predicated region
          $region293: #{tpu_custom_call.1} parent=195 // pred_check
            _
          $region294: #{tpu_custom_call.1} parent=195 // pred_check_branch
            %1148 = sbr.rel target = $region296
          $region295: #{tpu_custom_call.1} parent=195 // pred_region
            %1149 = sst [smem:[#allocation12]] [#allocation141]
            %1150 = sst [smem:[#allocation13]] [#allocation140]
          $region296: #{tpu_custom_call.1} parent=195 // pred_fallthru
            _
          %1152 = shalt.err (0)
          %s1154 = sshll.u32 %s1146, 4
          %s1155 = int_to_ptr.vmem [resolvable:$true] %s1154
          %1157 = dma.hbm_to_vmem [thread:$0]  %s1144, 16, %s1155, %s738
          %s1158 = sadd.s32 %s732, 25
          %s1159 = sld [smem:[#allocation5 + %s1158]]
          %s1160 = smul.addr %s1159, 16
          %s1161 = scalar_lea.hbm %s1, %s1160
          %s1162 = sadd.s32 5, %s736
          %s1163 = scalar_lea.vmem [#allocation2], %s1162
          // Predicated region
          $region297: #{tpu_custom_call.1} parent=195 // pred_check
            _
          $region298: #{tpu_custom_call.1} parent=195 // pred_check_branch
            %1165 = sbr.rel target = $region300
          $region299: #{tpu_custom_call.1} parent=195 // pred_region
            %1166 = sst [smem:[#allocation12]] [#allocation143]
            %1167 = sst [smem:[#allocation13]] [#allocation142]
          $region300: #{tpu_custom_call.1} parent=195 // pred_fallthru
            _
          %1169 = shalt.err (0)
          %s1171 = sshll.u32 %s1163, 4
          %s1172 = int_to_ptr.vmem [resolvable:$true] %s1171
          %1174 = dma.hbm_to_vmem [thread:$0]  %s1161, 16, %s1172, %s738
          %s1175 = sadd.s32 %s732, 26
          %s1176 = sld [smem:[#allocation5 + %s1175]]
          %s1177 = smul.addr %s1176, 16
          %s1178 = scalar_lea.hbm %s1, %s1177
          %s1179 = sadd.s32 13, %s736
          %s1180 = scalar_lea.vmem [#allocation2], %s1179
          // Predicated region
          $region301: #{tpu_custom_call.1} parent=195 // pred_check
            _
          $region302: #{tpu_custom_call.1} parent=195 // pred_check_branch
            %1182 = sbr.rel target = $region304
          $region303: #{tpu_custom_call.1} parent=195 // pred_region
            %1183 = sst [smem:[#allocation12]] [#allocation145]
            %1184 = sst [smem:[#allocation13]] [#allocation144]
          $region304: #{tpu_custom_call.1} parent=195 // pred_fallthru
            _
          %1186 = shalt.err (0)
          %s1188 = sshll.u32 %s1180, 4
          %s1189 = int_to_ptr.vmem [resolvable:$true] %s1188
          %1191 = dma.hbm_to_vmem [thread:$0]  %s1178, 16, %s1189, %s738
          %s1192 = sadd.s32 %s732, 27
          %s1193 = sld [smem:[#allocation5 + %s1192]]
          %s1194 = smul.addr %s1193, 16
          %s1195 = scalar_lea.hbm %s1, %s1194
          %s1196 = sadd.s32 21, %s736
          %s1197 = scalar_lea.vmem [#allocation2], %s1196
          // Predicated region
          $region305: #{tpu_custom_call.1} parent=195 // pred_check
            _
          $region306: #{tpu_custom_call.1} parent=195 // pred_check_branch
            %1199 = sbr.rel target = $region308
          $region307: #{tpu_custom_call.1} parent=195 // pred_region
            %1200 = sst [smem:[#allocation12]] [#allocation147]
            %1201 = sst [smem:[#allocation13]] [#allocation146]
          $region308: #{tpu_custom_call.1} parent=195 // pred_fallthru
            _
          %1203 = shalt.err (0)
          %s1205 = sshll.u32 %s1197, 4
          %s1206 = int_to_ptr.vmem [resolvable:$true] %s1205
          %1208 = dma.hbm_to_vmem [thread:$0]  %s1195, 16, %s1206, %s738
          %s1209 = sadd.s32 %s732, 28
          %s1210 = sld [smem:[#allocation5 + %s1209]]
          %s1211 = smul.addr %s1210, 16
          %s1212 = scalar_lea.hbm %s1, %s1211
          %s1213 = sadd.s32 29, %s736
          %s1214 = scalar_lea.vmem [#allocation2], %s1213
          // Predicated region
          $region309: #{tpu_custom_call.1} parent=195 // pred_check
            _
          $region310: #{tpu_custom_call.1} parent=195 // pred_check_branch
            %1216 = sbr.rel target = $region312
          $region311: #{tpu_custom_call.1} parent=195 // pred_region
            %1217 = sst [smem:[#allocation12]] [#allocation149]
            %1218 = sst [smem:[#allocation13]] [#allocation148]
          $region312: #{tpu_custom_call.1} parent=195 // pred_fallthru
            _
          %1220 = shalt.err (0)
          %s1222 = sshll.u32 %s1214, 4
          %s1223 = int_to_ptr.vmem [resolvable:$true] %s1222
          %1225 = dma.hbm_to_vmem [thread:$0]  %s1212, 16, %s1223, %s738
          %s1226 = sadd.s32 %s732, 29
          %s1227 = sld [smem:[#allocation5 + %s1226]]
          %s1228 = smul.addr %s1227, 16
          %s1229 = scalar_lea.hbm %s1, %s1228
          %s1230 = sadd.s32 37, %s736
          %s1231 = scalar_lea.vmem [#allocation2], %s1230
          // Predicated region
          $region313: #{tpu_custom_call.1} parent=195 // pred_check
            _
          $region314: #{tpu_custom_call.1} parent=195 // pred_check_branch
            %1233 = sbr.rel target = $region316
          $region315: #{tpu_custom_call.1} parent=195 // pred_region
            %1234 = sst [smem:[#allocation12]] [#allocation151]
            %1235 = sst [smem:[#allocation13]] [#allocation150]
          $region316: #{tpu_custom_call.1} parent=195 // pred_fallthru
            _
          %1237 = shalt.err (0)
          %s1239 = sshll.u32 %s1231, 4
          %s1240 = int_to_ptr.vmem [resolvable:$true] %s1239
          %1242 = dma.hbm_to_vmem [thread:$0]  %s1229, 16, %s1240, %s738
          %s1243 = sadd.s32 %s732, 30
          %s1244 = sld [smem:[#allocation5 + %s1243]]
          %s1245 = smul.addr %s1244, 16
          %s1246 = scalar_lea.hbm %s1, %s1245
          %s1247 = sadd.s32 6, %s736
          %s1248 = scalar_lea.vmem [#allocation2], %s1247
          // Predicated region
          $region317: #{tpu_custom_call.1} parent=195 // pred_check
            _
          $region318: #{tpu_custom_call.1} parent=195 // pred_check_branch
            %1250 = sbr.rel target = $region320
          $region319: #{tpu_custom_call.1} parent=195 // pred_region
            %1251 = sst [smem:[#allocation12]] [#allocation153]
            %1252 = sst [smem:[#allocation13]] [#allocation152]
          $region320: #{tpu_custom_call.1} parent=195 // pred_fallthru
            _
          %1254 = shalt.err (0)
          %s1256 = sshll.u32 %s1248, 4
          %s1257 = int_to_ptr.vmem [resolvable:$true] %s1256
          %1259 = dma.hbm_to_vmem [thread:$0]  %s1246, 16, %s1257, %s738
          %s1260 = sadd.s32 %s732, 31
          %s1261 = sld [smem:[#allocation5 + %s1260]]
          %s1262 = smul.addr %s1261, 16
          %s1263 = scalar_lea.hbm %s1, %s1262
          %s1264 = sadd.s32 14, %s736
          %s1265 = scalar_lea.vmem [#allocation2], %s1264
          // Predicated region
          $region321: #{tpu_custom_call.1} parent=195 // pred_check
            _
          $region322: #{tpu_custom_call.1} parent=195 // pred_check_branch
            %1267 = sbr.rel target = $region324
          $region323: #{tpu_custom_call.1} parent=195 // pred_region
            %1268 = sst [smem:[#allocation12]] [#allocation155]
            %1269 = sst [smem:[#allocation13]] [#allocation154]
          $region324: #{tpu_custom_call.1} parent=195 // pred_fallthru
            _
          %1271 = shalt.err (0)
          %s1273 = sshll.u32 %s1265, 4
          %s1274 = int_to_ptr.vmem [resolvable:$true] %s1273
          %1276 = dma.hbm_to_vmem [thread:$0]  %s1263, 16, %s1274, %s738
          %s1277 = sadd.s32 %s732, 32
          %s1278 = sld [smem:[#allocation5 + %s1277]]
          %s1279 = smul.addr %s1278, 16
          %s1280 = scalar_lea.hbm %s1, %s1279
          %s1281 = sadd.s32 22, %s736
          %s1282 = scalar_lea.vmem [#allocation2], %s1281
          // Predicated region
          $region325: #{tpu_custom_call.1} parent=195 // pred_check
            _
          $region326: #{tpu_custom_call.1} parent=195 // pred_check_branch
            %1284 = sbr.rel target = $region328
          $region327: #{tpu_custom_call.1} parent=195 // pred_region
            %1285 = sst [smem:[#allocation12]] [#allocation157]
            %1286 = sst [smem:[#allocation13]] [#allocation156]
          $region328: #{tpu_custom_call.1} parent=195 // pred_fallthru
            _
          %1288 = shalt.err (0)
          %s1290 = sshll.u32 %s1282, 4
          %s1291 = int_to_ptr.vmem [resolvable:$true] %s1290
          %1293 = dma.hbm_to_vmem [thread:$0]  %s1280, 16, %s1291, %s738
          %s1294 = sadd.s32 %s732, 33
          %s1295 = sld [smem:[#allocation5 + %s1294]]
          %s1296 = smul.addr %s1295, 16
          %s1297 = scalar_lea.hbm %s1, %s1296
          %s1298 = sadd.s32 30, %s736
          %s1299 = scalar_lea.vmem [#allocation2], %s1298
          // Predicated region
          $region329: #{tpu_custom_call.1} parent=195 // pred_check
            _
          $region330: #{tpu_custom_call.1} parent=195 // pred_check_branch
            %1301 = sbr.rel target = $region332
          $region331: #{tpu_custom_call.1} parent=195 // pred_region
            %1302 = sst [smem:[#allocation12]] [#allocation159]
            %1303 = sst [smem:[#allocation13]] [#allocation158]
          $region332: #{tpu_custom_call.1} parent=195 // pred_fallthru
            _
          %1305 = shalt.err (0)
          %s1307 = sshll.u32 %s1299, 4
          %s1308 = int_to_ptr.vmem [resolvable:$true] %s1307
          %1310 = dma.hbm_to_vmem [thread:$0]  %s1297, 16, %s1308, %s738
          %s1311 = sadd.s32 %s732, 34
          %s1312 = sld [smem:[#allocation5 + %s1311]]
          %s1313 = smul.addr %s1312, 16
          %s1314 = scalar_lea.hbm %s1, %s1313
          %s1315 = sadd.s32 38, %s736
          %s1316 = scalar_lea.vmem [#allocation2], %s1315
          // Predicated region
          $region333: #{tpu_custom_call.1} parent=195 // pred_check
            _
          $region334: #{tpu_custom_call.1} parent=195 // pred_check_branch
            %1318 = sbr.rel target = $region336
          $region335: #{tpu_custom_call.1} parent=195 // pred_region
            %1319 = sst [smem:[#allocation12]] [#allocation161]
            %1320 = sst [smem:[#allocation13]] [#allocation160]
          $region336: #{tpu_custom_call.1} parent=195 // pred_fallthru
            _
          %1322 = shalt.err (0)
          %s1324 = sshll.u32 %s1316, 4
          %s1325 = int_to_ptr.vmem [resolvable:$true] %s1324
          %1327 = dma.hbm_to_vmem [thread:$0]  %s1314, 16, %s1325, %s738
          %s1328 = sadd.s32 %s732, 35
          %s1329 = sld [smem:[#allocation5 + %s1328]]
          %s1330 = smul.addr %s1329, 16
          %s1331 = scalar_lea.hbm %s1, %s1330
          %s1332 = sadd.s32 7, %s736
          %s1333 = scalar_lea.vmem [#allocation2], %s1332
          // Predicated region
          $region337: #{tpu_custom_call.1} parent=195 // pred_check
            _
          $region338: #{tpu_custom_call.1} parent=195 // pred_check_branch
            %1335 = sbr.rel target = $region340
          $region339: #{tpu_custom_call.1} parent=195 // pred_region
            %1336 = sst [smem:[#allocation12]] [#allocation163]
            %1337 = sst [smem:[#allocation13]] [#allocation162]
          $region340: #{tpu_custom_call.1} parent=195 // pred_fallthru
            _
          %1339 = shalt.err (0)
          %s1341 = sshll.u32 %s1333, 4
          %s1342 = int_to_ptr.vmem [resolvable:$true] %s1341
          %1344 = dma.hbm_to_vmem [thread:$0]  %s1331, 16, %s1342, %s738
          %s1345 = sadd.s32 %s732, 36
          %s1346 = sld [smem:[#allocation5 + %s1345]]
          %s1347 = smul.addr %s1346, 16
          %s1348 = scalar_lea.hbm %s1, %s1347
          %s1349 = sadd.s32 15, %s736
          %s1350 = scalar_lea.vmem [#allocation2], %s1349
          // Predicated region
          $region341: #{tpu_custom_call.1} parent=195 // pred_check
            _
          $region342: #{tpu_custom_call.1} parent=195 // pred_check_branch
            %1352 = sbr.rel target = $region344
          $region343: #{tpu_custom_call.1} parent=195 // pred_region
            %1353 = sst [smem:[#allocation12]] [#allocation165]
            %1354 = sst [smem:[#allocation13]] [#allocation164]
          $region344: #{tpu_custom_call.1} parent=195 // pred_fallthru
            _
          %1356 = shalt.err (0)
          %s1358 = sshll.u32 %s1350, 4
          %s1359 = int_to_ptr.vmem [resolvable:$true] %s1358
          %1361 = dma.hbm_to_vmem [thread:$0]  %s1348, 16, %s1359, %s738
          %s1362 = sadd.s32 %s732, 37
          %s1363 = sld [smem:[#allocation5 + %s1362]]
          %s1364 = smul.addr %s1363, 16
          %s1365 = scalar_lea.hbm %s1, %s1364
          %s1366 = sadd.s32 23, %s736
          %s1367 = scalar_lea.vmem [#allocation2], %s1366
          // Predicated region
          $region345: #{tpu_custom_call.1} parent=195 // pred_check
            _
          $region346: #{tpu_custom_call.1} parent=195 // pred_check_branch
            %1369 = sbr.rel target = $region348
          $region347: #{tpu_custom_call.1} parent=195 // pred_region
            %1370 = sst [smem:[#allocation12]] [#allocation167]
            %1371 = sst [smem:[#allocation13]] [#allocation166]
          $region348: #{tpu_custom_call.1} parent=195 // pred_fallthru
            _
          %1373 = shalt.err (0)
          %s1375 = sshll.u32 %s1367, 4
          %s1376 = int_to_ptr.vmem [resolvable:$true] %s1375
          %1378 = dma.hbm_to_vmem [thread:$0]  %s1365, 16, %s1376, %s738
          %s1379 = sadd.s32 %s732, 38
          %s1380 = sld [smem:[#allocation5 + %s1379]]
          %s1381 = smul.addr %s1380, 16
          %s1382 = scalar_lea.hbm %s1, %s1381
          %s1383 = sadd.s32 31, %s736
          %s1384 = scalar_lea.vmem [#allocation2], %s1383
          // Predicated region
          $region349: #{tpu_custom_call.1} parent=195 // pred_check
            _
          $region350: #{tpu_custom_call.1} parent=195 // pred_check_branch
            %1386 = sbr.rel target = $region352
          $region351: #{tpu_custom_call.1} parent=195 // pred_region
            %1387 = sst [smem:[#allocation12]] [#allocation169]
            %1388 = sst [smem:[#allocation13]] [#allocation168]
          $region352: #{tpu_custom_call.1} parent=195 // pred_fallthru
            _
          %1390 = shalt.err (0)
          %s1392 = sshll.u32 %s1384, 4
          %s1393 = int_to_ptr.vmem [resolvable:$true] %s1392
          %1395 = dma.hbm_to_vmem [thread:$0]  %s1382, 16, %s1393, %s738
          %s1396 = sadd.s32 %s732, 39
          %s1397 = sld [smem:[#allocation5 + %s1396]]
          %s1398 = smul.addr %s1397, 16
          %s1399 = scalar_lea.hbm %s1, %s1398
          %s1400 = sadd.s32 39, %s736
          %s1401 = scalar_lea.vmem [#allocation2], %s1400
          // Predicated region
          $region353: #{tpu_custom_call.1} parent=195 // pred_check
            _
          $region354: #{tpu_custom_call.1} parent=195 // pred_check_branch
            %1403 = sbr.rel target = $region356
          $region355: #{tpu_custom_call.1} parent=195 // pred_region
            %1404 = sst [smem:[#allocation12]] [#allocation171]
            %1405 = sst [smem:[#allocation13]] [#allocation170]
          $region356: #{tpu_custom_call.1} parent=195 // pred_fallthru
            _
          %1407 = shalt.err (0)
          %s1409 = sshll.u32 %s1401, 4
          %s1410 = int_to_ptr.vmem [resolvable:$true] %s1409
          %1412 = dma.hbm_to_vmem [thread:$0]  %s1399, 16, %s1410, %s738
        $region196: #{tpu_custom_call.1} parent=23 // pred_fallthru
          _
        %s1413 = scalar_lea.sflag [#allocation3], %s122
        %s1414 = smul.u32 1, 1
        %s1415 = sshll.u32 %s1414, 4
        %1416 = dma.done %s1413, %s1415
        %s1417 = sshll.u32 %s1414, 4
        %1418 = dma.done %s1413, %s1417
        %s1419 = sshll.u32 %s1414, 4
        %1420 = dma.done %s1413, %s1419
        %s1421 = sshll.u32 %s1414, 4
        %1422 = dma.done %s1413, %s1421
        %s1423 = sshll.u32 %s1414, 4
        %1424 = dma.done %s1413, %s1423
        %s1425 = sshll.u32 %s1414, 4
        %1426 = dma.done %s1413, %s1425
        %s1427 = sshll.u32 %s1414, 4
        %1428 = dma.done %s1413, %s1427
        %s1429 = sshll.u32 %s1414, 4
        %1430 = dma.done %s1413, %s1429
        %s1431 = sshll.u32 %s1414, 4
        %1432 = dma.done %s1413, %s1431
        %s1433 = sshll.u32 %s1414, 4
        %1434 = dma.done %s1413, %s1433
        %s1435 = sshll.u32 %s1414, 4
        %1436 = dma.done %s1413, %s1435
        %s1437 = sshll.u32 %s1414, 4
        %1438 = dma.done %s1413, %s1437
        %s1439 = sshll.u32 %s1414, 4
        %1440 = dma.done %s1413, %s1439
        %s1441 = sshll.u32 %s1414, 4
        %1442 = dma.done %s1413, %s1441
        %s1443 = sshll.u32 %s1414, 4
        %1444 = dma.done %s1413, %s1443
        %s1445 = sshll.u32 %s1414, 4
        %1446 = dma.done %s1413, %s1445
        %s1447 = sshll.u32 %s1414, 4
        %1448 = dma.done %s1413, %s1447
        %s1449 = sshll.u32 %s1414, 4
        %1450 = dma.done %s1413, %s1449
        %s1451 = sshll.u32 %s1414, 4
        %1452 = dma.done %s1413, %s1451
        %s1453 = sshll.u32 %s1414, 4
        %1454 = dma.done %s1413, %s1453
        %s1455 = sshll.u32 %s1414, 4
        %1456 = dma.done %s1413, %s1455
        %s1457 = sshll.u32 %s1414, 4
        %1458 = dma.done %s1413, %s1457
        %s1459 = sshll.u32 %s1414, 4
        %1460 = dma.done %s1413, %s1459
        %s1461 = sshll.u32 %s1414, 4
        %1462 = dma.done %s1413, %s1461
        %s1463 = sshll.u32 %s1414, 4
        %1464 = dma.done %s1413, %s1463
        %s1465 = sshll.u32 %s1414, 4
        %1466 = dma.done %s1413, %s1465
        %s1467 = sshll.u32 %s1414, 4
        %1468 = dma.done %s1413, %s1467
        %s1469 = sshll.u32 %s1414, 4
        %1470 = dma.done %s1413, %s1469
        %s1471 = sshll.u32 %s1414, 4
        %1472 = dma.done %s1413, %s1471
        %s1473 = sshll.u32 %s1414, 4
        %1474 = dma.done %s1413, %s1473
        %s1475 = sshll.u32 %s1414, 4
        %1476 = dma.done %s1413, %s1475
        %s1477 = sshll.u32 %s1414, 4
        %1478 = dma.done %s1413, %s1477
        %s1479 = sshll.u32 %s1414, 4
        %1480 = dma.done %s1413, %s1479
        %s1481 = sshll.u32 %s1414, 4
        %1482 = dma.done %s1413, %s1481
        %s1483 = sshll.u32 %s1414, 4
        %1484 = dma.done %s1413, %s1483
        %s1485 = sshll.u32 %s1414, 4
        %1486 = dma.done %s1413, %s1485
        %s1487 = sshll.u32 %s1414, 4
        %1488 = dma.done %s1413, %s1487
        %s1489 = sshll.u32 %s1414, 4
        %1490 = dma.done %s1413, %s1489
        %s1491 = sshll.u32 %s1414, 4
        %1492 = dma.done %s1413, %s1491
        %s1493 = sshll.u32 %s1414, 4
        %1494 = dma.done %s1413, %s1493
        %s1495 = smul.u32 %s122, 40
        %s1496 = scalar_lea.vmem [#allocation2], %s1495
        %v1497 = vld [vmem:[%s1496] sm:$0xff]
        %v1498 = vld [vmem:[%s1496 + $0x8] sm:$0xff]
        %v1499 = vld [vmem:[%s1496 + $0x10] sm:$0xff]
        %v1500 = vld [vmem:[%s1496 + $0x18] sm:$0xff]
        %v1501 = vld [vmem:[%s1496 + $0x20] sm:$0xff]
        %v1502 = vadd.f32 %v1497, %v1498
        %v1503 = vadd.f32 %v1502, %v1499
        %v1504 = vadd.f32 %v1503, %v1500
        %v1505 = vadd.f32 %v1504, %v1501
        %v1506 = vmul.f32 %v1505, 0.2
        %v1507 = vpack.c.bf16 %v1506, %v1506
        %v1508 = vld [vmem:[#allocation6] sm:$0xf]
        %v1509 = vld [vmem:[#allocation6 + $0x4] sm:$0xf]
        %v1510 = vld [vmem:[#allocation6 + $0x8] sm:$0xf]
        %v1511 = vld [vmem:[#allocation6 + $0xc] sm:$0xf]
        %v1512 = vld [vmem:[#allocation6 + $0x10] sm:$0xf]
        %v1513 = vld [vmem:[#allocation6 + $0x14] sm:$0xf]
        %v1514 = vld [vmem:[#allocation6 + $0x18] sm:$0xf]
        %v1515 = vld [vmem:[#allocation6 + $0x1c] sm:$0xf]
        %v1516 = vld [vmem:[#allocation6 + $0x20] sm:$0xf]
        %v1517 = vld [vmem:[#allocation6 + $0x24] sm:$0xf]
        %v1518 = vld [vmem:[#allocation6 + $0x28] sm:$0xf]
        %v1519 = vld [vmem:[#allocation6 + $0x2c] sm:$0xf]
        %v1520 = vld [vmem:[#allocation6 + $0x30] sm:$0xf]
        %v1521 = vld [vmem:[#allocation6 + $0x34] sm:$0xf]
        %v1522 = vld [vmem:[#allocation6 + $0x38] sm:$0xf]
        %v1523 = vld [vmem:[#allocation6 + $0x3c] sm:$0xf]
        %v1540 = vunpack.c.l.b16 %v1508
        %v1541 = vunpack.c.l.b16 %v1509
        %v1542 = vunpack.c.l.b16 %v1510
        %v1543 = vunpack.c.l.b16 %v1511
        %v1544 = vunpack.c.l.b16 %v1512
        %v1545 = vunpack.c.l.b16 %v1513
        %v1546 = vunpack.c.l.b16 %v1514
        %v1547 = vunpack.c.l.b16 %v1515
        %v1548 = vunpack.c.l.b16 %v1516
        %v1549 = vunpack.c.l.b16 %v1517
        %v1550 = vunpack.c.l.b16 %v1518
        %v1551 = vunpack.c.l.b16 %v1519
        %v1552 = vunpack.c.l.b16 %v1520
        %v1553 = vunpack.c.l.b16 %v1521
        %v1554 = vunpack.c.l.b16 %v1522
        %v1555 = vunpack.c.l.b16 %v1523
        %v1556 = vpack.c.b16 %v1541, %v1540
        %v1557 = vpack.c.b16 %v1543, %v1542
        %v1558 = vpack.c.b16 %v1545, %v1544
        %v1559 = vpack.c.b16 %v1547, %v1546
        %v1560 = vpack.c.b16 %v1549, %v1548
        %v1561 = vpack.c.b16 %v1551, %v1550
        %v1562 = vpack.c.b16 %v1553, %v1552
        %v1563 = vpack.c.b16 %v1555, %v1554
        %1572 = vmatprep.subr.bf16.mxu0 0
        %1573 = vmatpush1.bf16.msra.mxu0 %v1556
        %1574 = vmatprep.subr.bf16.mxu0 0
        %1575 = vmatpush1.bf16.msra.mxu0 %v1557
        %1576 = vmatprep.subr.bf16.mxu0 0
        %1577 = vmatpush1.bf16.msra.mxu0 %v1558
        %1578 = vmatprep.subr.bf16.mxu0 0
        %1579 = vmatpush1.bf16.msra.mxu0 %v1559
        %1580 = vmatprep.subr.bf16.mxu0 0
        %1581 = vmatpush1.bf16.msra.mxu0 %v1560
        %1582 = vmatprep.subr.bf16.mxu0 0
        %1583 = vmatpush1.bf16.msra.mxu0 %v1561
        %1584 = vmatprep.subr.bf16.mxu0 0
        %1585 = vmatpush1.bf16.msra.mxu0 %v1562
        %1586 = vmatprep.subr.bf16.mxu0 0
        %1587 = vmatpush1.bf16.msra.mxu0 %v1563
        %1588 = vmatprep.subr.bf16.mxu0 0
        %1589 = vmatpush1.bf16.msra.mxu0 0
        %1590 = vmatprep.subr.bf16.mxu0 0
        %1591 = vmatpush1.bf16.msra.mxu0 0
        %1592 = vmatprep.subr.bf16.mxu0 0
        %1593 = vmatpush1.bf16.msra.mxu0 0
        %1594 = vmatprep.subr.bf16.mxu0 0
        %1595 = vmatpush1.bf16.msra.mxu0 0
        %1596 = vmatprep.subr.bf16.mxu0 0
        %1597 = vmatpush1.bf16.msra.mxu0 0
        %1598 = vmatprep.subr.bf16.mxu0 0
        %1599 = vmatpush1.bf16.msra.mxu0 0
        %1600 = vmatprep.subr.bf16.mxu0 0
        %1601 = vmatpush1.bf16.msra.mxu0 0
        %1602 = vmatprep.subr.bf16.mxu0 0
        %1603 = vmatpush1.bf16.msra.mxu0 0
        %1604 = vmatprep.mubr.bf16.mxu0 0
        %1605 = vmatmul.mubr.bf16.gmra.mrb[0].mxu0 %v1507
        %v1606 = vpop.f32.mrb[0].mxu0
        %v1607 = vadd.f32 0.0, %v1606
        %v1608 = vpop.f32.mrb[0].mxu0
        %v1609 = vpop.f32.mrb[0].mxu0
        %v1610 = vpop.f32.mrb[0].mxu0
        %1611 = vdwg.mxu0
        %v1612 = vmax.f32 %v1607, 0.0
        %1613 = vst [vmem:[%s115] sm:$0xff] %v1612
        %s1614 = sand.u32 %s51, 1
        %s1615 = scalar_lea.sflag [#allocation8], %s1614
        %s1616 = sand.u32 %s51, 1
        %s1617 = smul.addr %s1616, 8
        %s1618 = scalar_lea.vmem [#allocation9], %s1617
        // Predicated region
        $region357: #{tpu_custom_call.1} parent=23 // pred_check
          %p1619 = pneg %p61
        $region358: #{tpu_custom_call.1} parent=23 // pred_check_branch
          %1621 = sbr.rel (%p1619) target = $region360
        $region359: #{tpu_custom_call.1} parent=23 // pred_region
          %s1623 = ssub.s32 128, 128
          %1624 = vsyncadd %s1615, %s1623
          %s1625 = smul.addr %s22, 128
          %s1626 = scalar_lea.hbm %s3, %s1625
          %s1628 = sshll.u32 %s1618, 4
          %s1629 = int_to_ptr.vmem [resolvable:$true] %s1628
          %1631 = dma.vmem_to_hbm [thread:$0]  %s1629, 128, %s1626, %s1615
        $region360: #{tpu_custom_call.1} parent=23 // pred_fallthru
          _
      $region24: #{tpu_custom_call.1} parent=5 // pred_fallthru
        _
      %p1632 = scmp.le.s32.totalorder 2, %s17
      // Predicated region
      $region361: #{tpu_custom_call.1} parent=5 // pred_check
        %p1633 = pneg %p1632
      $region362: #{tpu_custom_call.1} parent=5 // pred_check_branch
        %1635 = sbr.rel (%p1633) target = $region364
      $region363: #{tpu_custom_call.1} parent=5 // pred_region
        %s1636 = ssub.s32 %s17, 2
        // Predicated region
        $region365: #{tpu_custom_call.1} parent=363 // pred_check
          %p1637 = pneg %p67
        $region366: #{tpu_custom_call.1} parent=363 // pred_check_branch
          %1639 = sbr.rel (%p1637) target = $region368
        $region367: #{tpu_custom_call.1} parent=363 // pred_region
          %s1640 = sand.u32 %s52, 1
          %s1641 = scalar_lea.sflag [#allocation8], %s1640
          %s1642 = sand.u32 %s52, 1
          %s1643 = smul.addr %s1642, 8
          %s1644 = scalar_lea.vmem [#allocation9], %s1643
          %1645 = dma.done %s1641, 128
        $region368: #{tpu_custom_call.1} parent=363 // pred_fallthru
          _
      $region364: #{tpu_custom_call.1} parent=5 // pred_fallthru
        _
    $region6: #{tpu_custom_call.1} parent=1 // loop_footer
      %s21 = sadd.s32 1, %s17
    $region7: #{tpu_custom_call.1} parent=1 // loop_footer_branch
      %16 = sbr.rel target = $region3
    $region8: #{tpu_custom_call.1} parent=1 // loop_exit
      _
    %1646 = vsyncpa [#allocation7], 1
    %s1647 = scalar_lea.sflag [#allocation7], 1
    %1648 = vsyncpa %s1647, 1
    %1649 = vsyncpa [#allocation8], 1
    %s1650 = scalar_lea.sflag [#allocation8], 1
    %1651 = vsyncpa %s1650, 1
  %1652 = vsyncmov [#allocation3]
  %s1653 = vpop.sfrf %1652
  %p1654 = scmp.eq.s32.totalorder %s1653, 0
  %p1655 = pneg %p1654
  %1657 = shalt.err (%p1655)
  %s1658 = scalar_lea.sflag [#allocation3], 1
  %1659 = vsyncmov %s1658
  %s1660 = vpop.sfrf %1659
  %p1661 = scmp.eq.s32.totalorder %s1660, 0
  %p1662 = pneg %p1661
  %1664 = shalt.err (%p1662)

</llo_original>
